<compile_context>
chip_gen: v6e
topology: v6e:2x2x1
jax: 0.10.0
libtpu: 0.0.40
codegen_flags: <defaults>
</compile_context>

<pallas_src>
import math

import jax
import jax.numpy as jnp
from jax.experimental import pallas as pl
from jax.experimental.pallas import tpu as pltpu

# ---------------- config (small synthetic stand-in for koelectra-small) -----
VOCAB = 100
HIDDEN = 32
NUM_HEADS = 2
HEAD_DIM = HIDDEN // NUM_HEADS
FFN = 64
NUM_LAYERS = 2
MAX_POS = 16
BATCH = 2
SEQ = 8
INTENT_CLASSES = 5
ENTITY_CLASSES = 7
CLASS_PAD = 128            # lane-dense padding for the tiny head outputs
LN_EPS = 1e-12
PAD_TOKEN_ID = 0           # only used by the training (labels) path, not implemented


# ---------------- kernel helpers ---------------------------------------------
def _layer_norm(x, g, b):
    # x: [N, H] f32 ; g / b broadcastable to [N, H]; stats kept in f32
    mu = jnp.mean(x, axis=-1, keepdims=True)
    var = jnp.mean((x - mu) ** 2, axis=-1, keepdims=True)
    return (x - mu) * jax.lax.rsqrt(var + LN_EPS) * g + b


# ---------------- fused encoder + heads kernel --------------------------------
def fused_encoder_kernel(
        x_emb_ref, emb_g_ref, emb_b_ref,
        wq_ref, bq_ref, wk_ref, bk_ref, wv_ref, bv_ref, wo_ref, bo_ref,
        ln1_g_ref, ln1_b_ref, w1_ref, b1_ref, w2_ref, b2_ref,
        ln2_g_ref, ln2_b_ref,
        wi_ref, bi_ref, we_ref, be_ref,
        intent_ref, entity_ref,
        x_vmem):
    """One grid step == one ELECTRA encoder layer.

    Activations stay resident in VMEM scratch ([B*S, H], f32) across the layer
    grid; per-layer weights are streamed via their BlockSpec index_map.
    Embedding LayerNorm runs at step 0; lane-padded intent/entity heads run at
    the last step, so the [B, S, H] features never round-trip through HBM.
    """
    l = pl.program_id(0)
    n_tok = BATCH * SEQ

    @pl.when(l == 0)
    def _():
        xe = x_emb_ref[...].astype(jnp.float32).reshape(n_tok, HIDDEN)
        x_vmem[...] = _layer_norm(xe, emb_g_ref[...], emb_b_ref[...])

    x = x_vmem[...]                                          # [B*S, H] f32

    def dense(inp, w_ref, b_ref):
        # single 2-D MXU matmul over all tokens
        return jnp.dot(inp, w_ref[0],
                       preferred_element_type=jnp.float32) + b_ref[0]

    q = dense(x, wq_ref, bq_ref)                             # [B*S, H]
    k = dense(x, wk_ref, bk_ref)
    v = dense(x, wv_ref, bv_ref)

    scale = 1.0 / math.sqrt(HEAD_DIM)
    ctx_heads = []
    for h in range(NUM_HEADS):                               # unrolled, NUM_HEADS small
        lo = h * HEAD_DIM
        qh = q[:, lo:lo + HEAD_DIM].reshape(BATCH, SEQ, HEAD_DIM)
        kh = k[:, lo:lo + HEAD_DIM].reshape(BATCH, SEQ, HEAD_DIM)
        vh = v[:, lo:lo + HEAD_DIM].reshape(BATCH, SEQ, HEAD_DIM)
        s = jnp.einsum('bqd,bkd->bqk', qh, kh,
                       preferred_element_type=jnp.float32) * scale
        s = s - jnp.max(s, axis=-1, keepdims=True)
        p = jnp.exp(s)
        # reciprocal on the EUP slot instead of a VPU divide
        p = p * pl.reciprocal(jnp.sum(p, axis=-1, keepdims=True), approx=True)
        ch = jnp.einsum('bqk,bkd->bqd', p, vh,
                        preferred_element_type=jnp.float32)
        ctx_heads.append(ch.reshape(n_tok, HEAD_DIM))
    ctx = jnp.concatenate(ctx_heads, axis=-1)                # [B*S, H]
    attn_out = jnp.dot(ctx, wo_ref[0],
                       preferred_element_type=jnp.float32) + bo_ref[0]

    x1 = _layer_norm(x + attn_out, ln1_g_ref[0], ln1_b_ref[0])

    # TODO(synk): HF ELECTRA uses exact (erf) GELU; tanh approximation used here.
    h1 = jax.nn.gelu(jnp.dot(x1, w1_ref[0],
                             preferred_element_type=jnp.float32) + b1_ref[0],
                     approximate=True)
    ffn_out = jnp.dot(h1, w2_ref[0],
                      preferred_element_type=jnp.float32) + b2_ref[0]
    x_new = _layer_norm(x1 + ffn_out, ln2_g_ref[0], ln2_b_ref[0])

    x_vmem[...] = x_new

    @pl.when(l == pl.num_programs(0) - 1)
    def _():
        feat = x_new.reshape(BATCH, SEQ, HIDDEN)
        cls = feat[:, 0:1, :].reshape(BATCH, HIDDEN)          # [CLS] token, [B, H]
        intent_ref[...] = (jnp.dot(cls, wi_ref[...],
                                   preferred_element_type=jnp.float32)
                           + bi_ref[...]).astype(intent_ref.dtype)
        # entity head over ALL tokens (lane-dense); wrapper drops token 0 + pad lanes
        ent = jnp.dot(x_new, we_ref[...],
                      preferred_element_type=jnp.float32) + be_ref[...]
        entity_ref[...] = ent.reshape(BATCH, SEQ, CLASS_PAD).astype(entity_ref.dtype)


# ---------------- pallas_call wrapper -----------------------------------------
def _layer_block_spec(*trailing):
    # arrays stacked with a leading layer axis; stream one layer per grid step
    nd = len(trailing)
    return pl.BlockSpec((1,) + tuple(trailing),
                        lambda l, _nd=nd: (l,) + (0,) * _nd)


def _shared_block_spec(*dims):
    nd = len(dims)
    return pl.BlockSpec(tuple(dims), lambda l, _nd=nd: (0,) * _nd)


def koelectra_encoder_and_heads(x_emb, params):
    B, S, H = x_emb.shape
    args = (
        x_emb, params['emb_ln_g'], params['emb_ln_b'],
        params['wq'], params['bq'], params['wk'], params['bk'],
        params['wv'], params['bv'], params['wo'], params['bo'],
        params['ln1_g'], params['ln1_b'],
        params['w1'], params['b1'], params['w2'], params['b2'],
        params['ln2_g'], params['ln2_b'],
        params['intent_w'], params['intent_b'],
        params['entity_w'], params['entity_b'],
    )
    in_specs = [
        _shared_block_spec(B, S, H),                             # x_emb
        _shared_block_spec(1, H), _shared_block_spec(1, H),      # emb LN g/b
        _layer_block_spec(H, H), _layer_block_spec(1, H),        # wq, bq
        _layer_block_spec(H, H), _layer_block_spec(1, H),        # wk, bk
        _layer_block_spec(H, H), _layer_block_spec(1, H),        # wv, bv
        _layer_block_spec(H, H), _layer_block_spec(1, H),        # wo, bo
        _layer_block_spec(1, H), _layer_block_spec(1, H),        # ln1 g/b
        _layer_block_spec(H, FFN), _layer_block_spec(1, FFN),    # w1, b1
        _layer_block_spec(FFN, H), _layer_block_spec(1, H),      # w2, b2
        _layer_block_spec(1, H), _layer_block_spec(1, H),        # ln2 g/b
        _shared_block_spec(H, CLASS_PAD), _shared_block_spec(1, CLASS_PAD),  # intent head
        _shared_block_spec(H, CLASS_PAD), _shared_block_spec(1, CLASS_PAD),  # entity head
    ]
    out_specs = (
        _shared_block_spec(B, CLASS_PAD),
        _shared_block_spec(B, S, CLASS_PAD),
    )
    return pl.pallas_call(
        fused_encoder_kernel,
        grid=(NUM_LAYERS,),
        in_specs=in_specs,
        out_specs=out_specs,
        out_shape=(jax.ShapeDtypeStruct((B, CLASS_PAD), jnp.float32),
                   jax.ShapeDtypeStruct((B, S, CLASS_PAD), jnp.float32)),
        scratch_shapes=[pltpu.VMEM((B * S, H), jnp.float32)],
        compiler_params=pltpu.CompilerParams(
            dimension_semantics=("arbitrary",)),
    )(*args)


# ---------------- CRF Viterbi decode (plain JAX glue) -------------------------
def crf_decode(emissions, start_trans, end_trans, trans):
    # emissions: [B, T, E]; mask implicitly all-ones (torchcrf default).
    B, T, E = emissions.shape
    score0 = start_trans[None, :] + emissions[:, 0]              # [B, E]

    def step(score, emit_t):
        nxt = score[:, :, None] + trans[None, :, :] + emit_t[:, None, :]  # [B,E,E]
        return jnp.max(nxt, axis=1), jnp.argmax(nxt, axis=1)

    emits = jnp.transpose(emissions[:, 1:], (1, 0, 2))           # [T-1, B, E]
    final_score, history = jax.lax.scan(step, score0, emits)
    final_score = final_score + end_trans[None, :]
    last_tag = jnp.argmax(final_score, axis=-1)                  # [B]

    def back_step(carry_tag, hist_t):
        prev = jnp.take_along_axis(hist_t, carry_tag[:, None], axis=1)[:, 0]
        return prev, prev

    _, tags_prefix = jax.lax.scan(back_step, last_tag, history, reverse=True)
    tags = jnp.concatenate([tags_prefix, last_tag[None, :]], axis=0)  # [T, B]
    return tags.T.astype(jnp.int32)                              # [B, T]


# ---------------- parameter init ----------------------------------------------
def init_params(key):
    def nrm(k, shape, scale=0.02):
        return jax.random.normal(k, shape, jnp.float32) * scale

    keys = iter(jax.random.split(key, 32))
    L, H = NUM_LAYERS, HIDDEN
    intent_w = nrm(next(keys), (H, INTENT_CLASSES))
    entity_w = nrm(next(keys), (H, ENTITY_CLASSES))
    p = {
        'word_emb': nrm(next(keys), (VOCAB, H)),
        'pos_emb': nrm(next(keys), (MAX_POS, H)),
        'type_emb': nrm(next(keys), (2, H)),
        'emb_ln_g': jnp.ones((1, H), jnp.float32),
        'emb_ln_b': jnp.zeros((1, H), jnp.float32),
        # head weights zero-padded to 128 lanes so kernel output stores are dense
        'intent_w': jnp.zeros((H, CLASS_PAD), jnp.float32).at[:, :INTENT_CLASSES].set(intent_w),
        'intent_b': jnp.zeros((1, CLASS_PAD), jnp.float32),
        'entity_w': jnp.zeros((H, CLASS_PAD), jnp.float32).at[:, :ENTITY_CLASSES].set(entity_w),
        'entity_b': jnp.zeros((1, CLASS_PAD), jnp.float32),
        'crf_start': nrm(next(keys), (ENTITY_CLASSES,), 0.1),
        'crf_end': nrm(next(keys), (ENTITY_CLASSES,), 0.1),
        'crf_trans': nrm(next(keys), (ENTITY_CLASSES, ENTITY_CLASSES), 0.1),
        # per-layer weights stacked on a leading layer axis (streamed by BlockSpec)
        'wq': nrm(next(keys), (L, H, H)), 'bq': jnp.zeros((L, 1, H), jnp.float32),
        'wk': nrm(next(keys), (L, H, H)), 'bk': jnp.zeros((L, 1, H), jnp.float32),
        'wv': nrm(next(keys), (L, H, H)), 'bv': jnp.zeros((L, 1, H), jnp.float32),
        'wo': nrm(next(keys), (L, H, H)), 'bo': jnp.zeros((L, 1, H), jnp.float32),
        'ln1_g': jnp.ones((L, 1, H), jnp.float32), 'ln1_b': jnp.zeros((L, 1, H), jnp.float32),
        'w1': nrm(next(keys), (L, H, FFN)), 'b1': jnp.zeros((L, 1, FFN), jnp.float32),
        'w2': nrm(next(keys), (L, FFN, H)), 'b2': jnp.zeros((L, 1, H), jnp.float32),
        'ln2_g': jnp.ones((L, 1, H), jnp.float32), 'ln2_b': jnp.zeros((L, 1, H), jnp.float32),
    }
    return p


# ---------------- full forward --------------------------------------------------
def koelectra_forward(tokens, params):
    B, S = tokens.shape
    # embedding gather + sum — plain JAX glue (the embedding LayerNorm is folded
    # into grid step 0 of the fused encoder kernel).
    x_emb = (params['word_emb'][tokens]
             + params['pos_emb'][jnp.arange(S)][None, :, :]
             + params['type_emb'][0][None, None, :])

    intent_pad, entity_pad = koelectra_encoder_and_heads(x_emb, params)

    intent_pred = intent_pad[:, :INTENT_CLASSES]                 # un-pad lanes
    entity_feature = entity_pad[:, 1:, :ENTITY_CLASSES]          # drop [CLS], un-pad
    entity_pred = crf_decode(entity_feature, params['crf_start'],
                             params['crf_end'], params['crf_trans'])
    # TODO(synk): training path (entity_labels given -> CRF log-likelihood loss)
    # is not implemented; only the inference return (intent_pred, entity_pred).
    return intent_pred, entity_pred


# ---------------- main -----------------------------------------------------------
if __name__ == "__main__":
    key = jax.random.PRNGKey(0)
    k_tok, k_par = jax.random.split(key)
    tokens = jax.random.randint(k_tok, (BATCH, SEQ), 1, VOCAB, dtype=jnp.int32)
    params = init_params(k_par)

    intent_pred, entity_pred = jax.jit(koelectra_forward)(tokens, params)
    jax.block_until_ready((intent_pred, entity_pred))

    assert intent_pred.shape == (BATCH, INTENT_CLASSES)
    assert entity_pred.shape == (BATCH, SEQ - 1)
    print("KERNEL_OK")
</pallas_src>

<mosaic_0001>
module attributes {stable_mosaic.version = 11 : i64} {
  func.func @fused_encoder_kernel(%arg0: i32, %arg1: memref<2x8x32xf32, #tpu.memory_space<vmem>>, %arg2: memref<1x32xf32, #tpu.memory_space<vmem>>, %arg3: memref<1x32xf32, #tpu.memory_space<vmem>>, %arg4: memref<1x32x32xf32, #tpu.memory_space<vmem>>, %arg5: memref<1x1x32xf32, #tpu.memory_space<vmem>>, %arg6: memref<1x32x32xf32, #tpu.memory_space<vmem>>, %arg7: memref<1x1x32xf32, #tpu.memory_space<vmem>>, %arg8: memref<1x32x32xf32, #tpu.memory_space<vmem>>, %arg9: memref<1x1x32xf32, #tpu.memory_space<vmem>>, %arg10: memref<1x32x32xf32, #tpu.memory_space<vmem>>, %arg11: memref<1x1x32xf32, #tpu.memory_space<vmem>>, %arg12: memref<1x1x32xf32, #tpu.memory_space<vmem>>, %arg13: memref<1x1x32xf32, #tpu.memory_space<vmem>>, %arg14: memref<1x32x64xf32, #tpu.memory_space<vmem>>, %arg15: memref<1x1x64xf32, #tpu.memory_space<vmem>>, %arg16: memref<1x64x32xf32, #tpu.memory_space<vmem>>, %arg17: memref<1x1x32xf32, #tpu.memory_space<vmem>>, %arg18: memref<1x1x32xf32, #tpu.memory_space<vmem>>, %arg19: memref<1x1x32xf32, #tpu.memory_space<vmem>>, %arg20: memref<32x128xf32, #tpu.memory_space<vmem>>, %arg21: memref<1x128xf32, #tpu.memory_space<vmem>>, %arg22: memref<32x128xf32, #tpu.memory_space<vmem>>, %arg23: memref<1x128xf32, #tpu.memory_space<vmem>>, %arg24: memref<2x128xf32, #tpu.memory_space<vmem>>, %arg25: memref<2x8x128xf32, #tpu.memory_space<vmem>>, %arg26: memref<16x32xf32, #tpu.memory_space<vmem>>) attributes {dimension_semantics = [#tpu.dimension_semantics<arbitrary>], iteration_bounds = array<i64: 2>, scalar_prefetch = 0 : i64, scratch_operands = 1 : i64, tpu.core_type = #tpu.core_type<tc>, window_params = [{pipeline_mode = #tpu.pipeline_mode<synchronous>, transform_indices = @transform_0, window_bounds = array<i64: 2, 8, 32>}, {pipeline_mode = #tpu.pipeline_mode<synchronous>, transform_indices = @transform_1, window_bounds = array<i64: 1, 32>}, {pipeline_mode = #tpu.pipeline_mode<synchronous>, transform_indices = @transform_2, window_bounds = array<i64: 1, 32>}, {transform_indices = @transform_3, window_bounds = array<i64: 1, 32, 32>}, {transform_indices = @transform_4, window_bounds = array<i64: 1, 1, 32>}, {transform_indices = @transform_5, window_bounds = array<i64: 1, 32, 32>}, {transform_indices = @transform_6, window_bounds = array<i64: 1, 1, 32>}, {transform_indices = @transform_7, window_bounds = array<i64: 1, 32, 32>}, {transform_indices = @transform_8, window_bounds = array<i64: 1, 1, 32>}, {transform_indices = @transform_9, window_bounds = array<i64: 1, 32, 32>}, {transform_indices = @transform_10, window_bounds = array<i64: 1, 1, 32>}, {transform_indices = @transform_11, window_bounds = array<i64: 1, 1, 32>}, {transform_indices = @transform_12, window_bounds = array<i64: 1, 1, 32>}, {transform_indices = @transform_13, window_bounds = array<i64: 1, 32, 64>}, {transform_indices = @transform_14, window_bounds = array<i64: 1, 1, 64>}, {transform_indices = @transform_15, window_bounds = array<i64: 1, 64, 32>}, {transform_indices = @transform_16, window_bounds = array<i64: 1, 1, 32>}, {transform_indices = @transform_17, window_bounds = array<i64: 1, 1, 32>}, {transform_indices = @transform_18, window_bounds = array<i64: 1, 1, 32>}, {pipeline_mode = #tpu.pipeline_mode<synchronous>, transform_indices = @transform_19, window_bounds = array<i64: 32, 128>}, {pipeline_mode = #tpu.pipeline_mode<synchronous>, transform_indices = @transform_20, window_bounds = array<i64: 1, 128>}, {pipeline_mode = #tpu.pipeline_mode<synchronous>, transform_indices = @transform_21, window_bounds = array<i64: 32, 128>}, {pipeline_mode = #tpu.pipeline_mode<synchronous>, transform_indices = @transform_22, window_bounds = array<i64: 1, 128>}, {pipeline_mode = #tpu.pipeline_mode<synchronous>, transform_indices = @transform_23, window_bounds = array<i64: 2, 128>}, {pipeline_mode = #tpu.pipeline_mode<synchronous>, transform_indices = @transform_24, window_bounds = array<i64: 2, 8, 128>}]} {
    %c0_i32 = arith.constant 0 : i32
    %0 = arith.cmpi eq, %arg0, %c0_i32 : i32
    %1 = arith.extui %0 : i1 to i32
    %c0_i32_0 = arith.constant 0 : i32
    %2 = arith.cmpi ne, %1, %c0_i32_0 : i32
    scf.if %2 {
      %c0_82 = arith.constant 0 : index
      %c0_83 = arith.constant 0 : index
      %c0_84 = arith.constant 0 : index
      %160 = vector.load %arg1[%c0_82, %c0_83, %c0_84] : memref<2x8x32xf32, #tpu.memory_space<vmem>>, vector<2x8x32xf32>
      %161 = vector.shape_cast %160 : vector<2x8x32xf32> to vector<16x32xf32>
      %c0_85 = arith.constant 0 : index
      %c0_86 = arith.constant 0 : index
      %162 = vector.load %arg2[%c0_85, %c0_86] : memref<1x32xf32, #tpu.memory_space<vmem>>, vector<1x32xf32>
      %c0_87 = arith.constant 0 : index
      %c0_88 = arith.constant 0 : index
      %163 = vector.load %arg3[%c0_87, %c0_88] : memref<1x32xf32, #tpu.memory_space<vmem>>, vector<1x32xf32>
      %cst_89 = arith.constant dense<0.000000e+00> : vector<16xf32>
      %164 = vector.multi_reduction <add>, %161, %cst_89 [1] : vector<16x32xf32> to vector<16xf32>
      %165 = vector.shape_cast %164 : vector<16xf32> to vector<16x1xf32>
      %cst_90 = arith.constant 3.200000e+01 : f32
      %166 = vector.broadcast %cst_90 : f32 to vector<16x1xf32>
      %167 = arith.divf %165, %166 : vector<16x1xf32>
      %168 = vector.broadcast %167 : vector<16x1xf32> to vector<16x32xf32>
      %169 = arith.subf %161, %168 : vector<16x32xf32>
      %170 = arith.mulf %169, %169 : vector<16x32xf32>
      %cst_91 = arith.constant dense<0.000000e+00> : vector<16xf32>
      %171 = vector.multi_reduction <add>, %170, %cst_91 [1] : vector<16x32xf32> to vector<16xf32>
      %172 = vector.shape_cast %171 : vector<16xf32> to vector<16x1xf32>
      %cst_92 = arith.constant 3.200000e+01 : f32
      %173 = vector.broadcast %cst_92 : f32 to vector<16x1xf32>
      %174 = arith.divf %172, %173 : vector<16x1xf32>
      %175 = vector.broadcast %167 : vector<16x1xf32> to vector<16x32xf32>
      %176 = arith.subf %161, %175 : vector<16x32xf32>
      %cst_93 = arith.constant 9.99999996E-13 : f32
      %177 = vector.broadcast %cst_93 : f32 to vector<16x1xf32>
      %178 = arith.addf %174, %177 : vector<16x1xf32>
      %179 = math.rsqrt %178 : vector<16x1xf32>
      %180 = vector.broadcast %179 : vector<16x1xf32> to vector<16x32xf32>
      %181 = arith.mulf %176, %180 : vector<16x32xf32>
      %182 = vector.broadcast %162 : vector<1x32xf32> to vector<16x32xf32>
      %183 = arith.mulf %181, %182 : vector<16x32xf32>
      %184 = vector.broadcast %163 : vector<1x32xf32> to vector<16x32xf32>
      %185 = arith.addf %183, %184 : vector<16x32xf32>
      %c0_94 = arith.constant 0 : index
      %c0_95 = arith.constant 0 : index
      %186 = vector.load %arg26[%c0_94, %c0_95] : memref<16x32xf32, #tpu.memory_space<vmem>>, vector<16x32xf32>
      tpu.vector_store %arg26[%c0_94, %c0_95], %185 {strides = array<i32>} : memref<16x32xf32, #tpu.memory_space<vmem>>, vector<16x32xf32>,
    } else {
    }
    %c0 = arith.constant 0 : index
    %c0_1 = arith.constant 0 : index
    %3 = vector.load %arg26[%c0, %c0_1] : memref<16x32xf32, #tpu.memory_space<vmem>>, vector<16x32xf32>
    %c0_2 = arith.constant 0 : index
    %c0_3 = arith.constant 0 : index
    %c0_4 = arith.constant 0 : index
    %4 = vector.load %arg4[%c0_2, %c0_3, %c0_4] : memref<1x32x32xf32, #tpu.memory_space<vmem>>, vector<1x32x32xf32>
    %5 = vector.shape_cast %4 : vector<1x32x32xf32> to vector<32x32xf32>
    %cst = arith.constant dense<0.000000e+00> : vector<16x32xf32>
    %6 = tpu.matmul %3, %5, %cst {dimension_numbers = #tpu.dot_dimension_numbers<[1], [0], [0], [1], [0, 0, 1, 1], [], []>} : vector<16x32xf32>, vector<32x32xf32>, vector<16x32xf32> -> vector<16x32xf32>
    %c0_5 = arith.constant 0 : index
    %c0_6 = arith.constant 0 : index
    %c0_7 = arith.constant 0 : index
    %7 = vector.load %arg5[%c0_5, %c0_6, %c0_7] : memref<1x1x32xf32, #tpu.memory_space<vmem>>, vector<1x1x32xf32>
    %8 = vector.shape_cast %7 : vector<1x1x32xf32> to vector<1x32xf32>
    %9 = vector.broadcast %8 : vector<1x32xf32> to vector<16x32xf32>
    %10 = arith.addf %6, %9 : vector<16x32xf32>
    %c0_8 = arith.constant 0 : index
    %c0_9 = arith.constant 0 : index
    %c0_10 = arith.constant 0 : index
    %11 = vector.load %arg6[%c0_8, %c0_9, %c0_10] : memref<1x32x32xf32, #tpu.memory_space<vmem>>, vector<1x32x32xf32>
    %12 = vector.shape_cast %11 : vector<1x32x32xf32> to vector<32x32xf32>
    %cst_11 = arith.constant dense<0.000000e+00> : vector<16x32xf32>
    %13 = tpu.matmul %3, %12, %cst_11 {dimension_numbers = #tpu.dot_dimension_numbers<[1], [0], [0], [1], [0, 0, 1, 1], [], []>} : vector<16x32xf32>, vector<32x32xf32>, vector<16x32xf32> -> vector<16x32xf32>
    %c0_12 = arith.constant 0 : index
    %c0_13 = arith.constant 0 : index
    %c0_14 = arith.constant 0 : index
    %14 = vector.load %arg7[%c0_12, %c0_13, %c0_14] : memref<1x1x32xf32, #tpu.memory_space<vmem>>, vector<1x1x32xf32>
    %15 = vector.shape_cast %14 : vector<1x1x32xf32> to vector<1x32xf32>
    %16 = vector.broadcast %15 : vector<1x32xf32> to vector<16x32xf32>
    %17 = arith.addf %13, %16 : vector<16x32xf32>
    %c0_15 = arith.constant 0 : index
    %c0_16 = arith.constant 0 : index
    %c0_17 = arith.constant 0 : index
    %18 = vector.load %arg8[%c0_15, %c0_16, %c0_17] : memref<1x32x32xf32, #tpu.memory_space<vmem>>, vector<1x32x32xf32>
    %19 = vector.shape_cast %18 : vector<1x32x32xf32> to vector<32x32xf32>
    %cst_18 = arith.constant dense<0.000000e+00> : vector<16x32xf32>
    %20 = tpu.matmul %3, %19, %cst_18 {dimension_numbers = #tpu.dot_dimension_numbers<[1], [0], [0], [1], [0, 0, 1, 1], [], []>} : vector<16x32xf32>, vector<32x32xf32>, vector<16x32xf32> -> vector<16x32xf32>
    %c0_19 = arith.constant 0 : index
    %c0_20 = arith.constant 0 : index
    %c0_21 = arith.constant 0 : index
    %21 = vector.load %arg9[%c0_19, %c0_20, %c0_21] : memref<1x1x32xf32, #tpu.memory_space<vmem>>, vector<1x1x32xf32>
    %22 = vector.shape_cast %21 : vector<1x1x32xf32> to vector<1x32xf32>
    %23 = vector.broadcast %22 : vector<1x32xf32> to vector<16x32xf32>
    %24 = arith.addf %20, %23 : vector<16x32xf32>
    %25 = vector.extract_strided_slice %10 {offsets = [0, 0], sizes = [16, 16], strides = [1, 1]} : vector<16x32xf32> to vector<16x16xf32>
    %26 = vector.shape_cast %25 : vector<16x16xf32> to vector<2x8x16xf32>
    %27 = vector.extract_strided_slice %17 {offsets = [0, 0], sizes = [16, 16], strides = [1, 1]} : vector<16x32xf32> to vector<16x16xf32>
    %28 = vector.shape_cast %27 : vector<16x16xf32> to vector<2x8x16xf32>
    %29 = vector.extract_strided_slice %24 {offsets = [0, 0], sizes = [16, 16], strides = [1, 1]} : vector<16x32xf32> to vector<16x16xf32>
    %30 = vector.shape_cast %29 : vector<16x16xf32> to vector<2x8x16xf32>
    "tpu.trace_start"() <{level = 10 : i32, message = "bqd,bkd->bqk"}> : () -> ()
    %cst_22 = arith.constant dense<0.000000e+00> : vector<2x8x8xf32>
    %31 = tpu.matmul %26, %28, %cst_22 {dimension_numbers = #tpu.dot_dimension_numbers<[2], [2], [1], [1], [0, 0, 0, 1, 1, 1], [0], [0]>} : vector<2x8x16xf32>, vector<2x8x16xf32>, vector<2x8x8xf32> -> vector<2x8x8xf32>
    "tpu.trace_stop"() : () -> ()
    %cst_23 = arith.constant 2.500000e-01 : f32
    %32 = vector.broadcast %cst_23 : f32 to vector<2x8x8xf32>
    %33 = arith.mulf %31, %32 : vector<2x8x8xf32>
    %cst_24 = arith.constant dense<0xFF800000> : vector<2x8xf32>
    %34 = vector.multi_reduction <maximumf>, %33, %cst_24 [2] : vector<2x8x8xf32> to vector<2x8xf32>
    %35 = vector.shape_cast %34 : vector<2x8xf32> to vector<2x8x1xf32>
    %36 = vector.broadcast %35 : vector<2x8x1xf32> to vector<2x8x8xf32>
    %37 = arith.subf %33, %36 : vector<2x8x8xf32>
    %38 = math.exp %37 : vector<2x8x8xf32>
    %cst_25 = arith.constant dense<0.000000e+00> : vector<2x8xf32>
    %39 = vector.multi_reduction <add>, %38, %cst_25 [2] : vector<2x8x8xf32> to vector<2x8xf32>
    %40 = vector.shape_cast %39 : vector<2x8xf32> to vector<2x8x1xf32>
    %41 = tpu.reciprocal %40 {approx = true} : vector<2x8x1xf32> -> vector<2x8x1xf32>
    %42 = vector.broadcast %41 : vector<2x8x1xf32> to vector<2x8x8xf32>
    %43 = arith.mulf %38, %42 : vector<2x8x8xf32>
    "tpu.trace_start"() <{level = 10 : i32, message = "bqk,bkd->bqd"}> : () -> ()
    %cst_26 = arith.constant dense<0.000000e+00> : vector<2x8x16xf32>
    %44 = tpu.matmul %43, %30, %cst_26 {dimension_numbers = #tpu.dot_dimension_numbers<[2], [1], [1], [2], [0, 0, 0, 1, 1, 2], [0], [0]>} : vector<2x8x8xf32>, vector<2x8x16xf32>, vector<2x8x16xf32> -> vector<2x8x16xf32>
    "tpu.trace_stop"() : () -> ()
    %45 = vector.shape_cast %44 : vector<2x8x16xf32> to vector<16x16xf32>
    %46 = vector.extract_strided_slice %10 {offsets = [0, 16], sizes = [16, 16], strides = [1, 1]} : vector<16x32xf32> to vector<16x16xf32>
    %47 = vector.shape_cast %46 : vector<16x16xf32> to vector<2x8x16xf32>
    %48 = vector.extract_strided_slice %17 {offsets = [0, 16], sizes = [16, 16], strides = [1, 1]} : vector<16x32xf32> to vector<16x16xf32>
    %49 = vector.shape_cast %48 : vector<16x16xf32> to vector<2x8x16xf32>
    %50 = vector.extract_strided_slice %24 {offsets = [0, 16], sizes = [16, 16], strides = [1, 1]} : vector<16x32xf32> to vector<16x16xf32>
    %51 = vector.shape_cast %50 : vector<16x16xf32> to vector<2x8x16xf32>
    "tpu.trace_start"() <{level = 10 : i32, message = "bqd,bkd->bqk"}> : () -> ()
    %cst_27 = arith.constant dense<0.000000e+00> : vector<2x8x8xf32>
    %52 = tpu.matmul %47, %49, %cst_27 {dimension_numbers = #tpu.dot_dimension_numbers<[2], [2], [1], [1], [0, 0, 0, 1, 1, 1], [0], [0]>} : vector<2x8x16xf32>, vector<2x8x16xf32>, vector<2x8x8xf32> -> vector<2x8x8xf32>
    "tpu.trace_stop"() : () -> ()
    %cst_28 = arith.constant 2.500000e-01 : f32
    %53 = vector.broadcast %cst_28 : f32 to vector<2x8x8xf32>
    %54 = arith.mulf %52, %53 : vector<2x8x8xf32>
    %cst_29 = arith.constant dense<0xFF800000> : vector<2x8xf32>
    %55 = vector.multi_reduction <maximumf>, %54, %cst_29 [2] : vector<2x8x8xf32> to vector<2x8xf32>
    %56 = vector.shape_cast %55 : vector<2x8xf32> to vector<2x8x1xf32>
    %57 = vector.broadcast %56 : vector<2x8x1xf32> to vector<2x8x8xf32>
    %58 = arith.subf %54, %57 : vector<2x8x8xf32>
    %59 = math.exp %58 : vector<2x8x8xf32>
    %cst_30 = arith.constant dense<0.000000e+00> : vector<2x8xf32>
    %60 = vector.multi_reduction <add>, %59, %cst_30 [2] : vector<2x8x8xf32> to vector<2x8xf32>
    %61 = vector.shape_cast %60 : vector<2x8xf32> to vector<2x8x1xf32>
    %62 = tpu.reciprocal %61 {approx = true} : vector<2x8x1xf32> -> vector<2x8x1xf32>
    %63 = vector.broadcast %62 : vector<2x8x1xf32> to vector<2x8x8xf32>
    %64 = arith.mulf %59, %63 : vector<2x8x8xf32>
    "tpu.trace_start"() <{level = 10 : i32, message = "bqk,bkd->bqd"}> : () -> ()
    %cst_31 = arith.constant dense<0.000000e+00> : vector<2x8x16xf32>
    %65 = tpu.matmul %64, %51, %cst_31 {dimension_numbers = #tpu.dot_dimension_numbers<[2], [1], [1], [2], [0, 0, 0, 1, 1, 2], [0], [0]>} : vector<2x8x8xf32>, vector<2x8x16xf32>, vector<2x8x16xf32> -> vector<2x8x16xf32>
    "tpu.trace_stop"() : () -> ()
    %66 = vector.shape_cast %65 : vector<2x8x16xf32> to vector<16x16xf32>
    %67 = tpu.concatenate %45, %66 in 1 : vector<16x16xf32>, vector<16x16xf32> -> vector<16x32xf32>
    %c0_32 = arith.constant 0 : index
    %c0_33 = arith.constant 0 : index
    %c0_34 = arith.constant 0 : index
    %68 = vector.load %arg10[%c0_32, %c0_33, %c0_34] : memref<1x32x32xf32, #tpu.memory_space<vmem>>, vector<1x32x32xf32>
    %69 = vector.shape_cast %68 : vector<1x32x32xf32> to vector<32x32xf32>
    %cst_35 = arith.constant dense<0.000000e+00> : vector<16x32xf32>
    %70 = tpu.matmul %67, %69, %cst_35 {dimension_numbers = #tpu.dot_dimension_numbers<[1], [0], [0], [1], [0, 0, 1, 1], [], []>} : vector<16x32xf32>, vector<32x32xf32>, vector<16x32xf32> -> vector<16x32xf32>
    %c0_36 = arith.constant 0 : index
    %c0_37 = arith.constant 0 : index
    %c0_38 = arith.constant 0 : index
    %71 = vector.load %arg11[%c0_36, %c0_37, %c0_38] : memref<1x1x32xf32, #tpu.memory_space<vmem>>, vector<1x1x32xf32>
    %72 = vector.shape_cast %71 : vector<1x1x32xf32> to vector<1x32xf32>
    %73 = vector.broadcast %72 : vector<1x32xf32> to vector<16x32xf32>
    %74 = arith.addf %70, %73 : vector<16x32xf32>
    %75 = arith.addf %3, %74 : vector<16x32xf32>
    %c0_39 = arith.constant 0 : index
    %c0_40 = arith.constant 0 : index
    %c0_41 = arith.constant 0 : index
    %76 = vector.load %arg12[%c0_39, %c0_40, %c0_41] : memref<1x1x32xf32, #tpu.memory_space<vmem>>, vector<1x1x32xf32>
    %77 = vector.shape_cast %76 : vector<1x1x32xf32> to vector<1x32xf32>
    %c0_42 = arith.constant 0 : index
    %c0_43 = arith.constant 0 : index
    %c0_44 = arith.constant 0 : index
    %78 = vector.load %arg13[%c0_42, %c0_43, %c0_44] : memref<1x1x32xf32, #tpu.memory_space<vmem>>, vector<1x1x32xf32>
    %79 = vector.shape_cast %78 : vector<1x1x32xf32> to vector<1x32xf32>
    %cst_45 = arith.constant dense<0.000000e+00> : vector<16xf32>
    %80 = vector.multi_reduction <add>, %75, %cst_45 [1] : vector<16x32xf32> to vector<16xf32>
    %81 = vector.shape_cast %80 : vector<16xf32> to vector<16x1xf32>
    %cst_46 = arith.constant 3.200000e+01 : f32
    %82 = vector.broadcast %cst_46 : f32 to vector<16x1xf32>
    %83 = arith.divf %81, %82 : vector<16x1xf32>
    %84 = vector.broadcast %83 : vector<16x1xf32> to vector<16x32xf32>
    %85 = arith.subf %75, %84 : vector<16x32xf32>
    %86 = arith.mulf %85, %85 : vector<16x32xf32>
    %cst_47 = arith.constant dense<0.000000e+00> : vector<16xf32>
    %87 = vector.multi_reduction <add>, %86, %cst_47 [1] : vector<16x32xf32> to vector<16xf32>
    %88 = vector.shape_cast %87 : vector<16xf32> to vector<16x1xf32>
    %cst_48 = arith.constant 3.200000e+01 : f32
    %89 = vector.broadcast %cst_48 : f32 to vector<16x1xf32>
    %90 = arith.divf %88, %89 : vector<16x1xf32>
    %91 = vector.broadcast %83 : vector<16x1xf32> to vector<16x32xf32>
    %92 = arith.subf %75, %91 : vector<16x32xf32>
    %cst_49 = arith.constant 9.99999996E-13 : f32
    %93 = vector.broadcast %cst_49 : f32 to vector<16x1xf32>
    %94 = arith.addf %90, %93 : vector<16x1xf32>
    %95 = math.rsqrt %94 : vector<16x1xf32>
    %96 = vector.broadcast %95 : vector<16x1xf32> to vector<16x32xf32>
    %97 = arith.mulf %92, %96 : vector<16x32xf32>
    %98 = vector.broadcast %77 : vector<1x32xf32> to vector<16x32xf32>
    %99 = arith.mulf %97, %98 : vector<16x32xf32>
    %100 = vector.broadcast %79 : vector<1x32xf32> to vector<16x32xf32>
    %101 = arith.addf %99, %100 : vector<16x32xf32>
    %c0_50 = arith.constant 0 : index
    %c0_51 = arith.constant 0 : index
    %c0_52 = arith.constant 0 : index
    %102 = vector.load %arg14[%c0_50, %c0_51, %c0_52] : memref<1x32x64xf32, #tpu.memory_space<vmem>>, vector<1x32x64xf32>
    %103 = vector.shape_cast %102 : vector<1x32x64xf32> to vector<32x64xf32>
    %cst_53 = arith.constant dense<0.000000e+00> : vector<16x64xf32>
    %104 = tpu.matmul %101, %103, %cst_53 {dimension_numbers = #tpu.dot_dimension_numbers<[1], [0], [0], [1], [0, 0, 1, 1], [], []>} : vector<16x32xf32>, vector<32x64xf32>, vector<16x64xf32> -> vector<16x64xf32>
    %c0_54 = arith.constant 0 : index
    %c0_55 = arith.constant 0 : index
    %c0_56 = arith.constant 0 : index
    %105 = vector.load %arg15[%c0_54, %c0_55, %c0_56] : memref<1x1x64xf32, #tpu.memory_space<vmem>>, vector<1x1x64xf32>
    %106 = vector.shape_cast %105 : vector<1x1x64xf32> to vector<1x64xf32>
    %107 = vector.broadcast %106 : vector<1x64xf32> to vector<16x64xf32>
    %108 = arith.addf %104, %107 : vector<16x64xf32>
    %109 = arith.mulf %108, %108 : vector<16x64xf32>
    %110 = arith.mulf %108, %109 : vector<16x64xf32>
    %cst_57 = arith.constant 4.471500e-02 : f32
    %111 = vector.broadcast %cst_57 : f32 to vector<16x64xf32>
    %112 = arith.mulf %111, %110 : vector<16x64xf32>
    %113 = arith.addf %108, %112 : vector<16x64xf32>
    %cst_58 = arith.constant 0.797884583 : f32
    %114 = vector.broadcast %cst_58 : f32 to vector<16x64xf32>
    %115 = arith.mulf %114, %113 : vector<16x64xf32>
    %116 = math.tanh %115 : vector<16x64xf32>
    %cst_59 = arith.constant 1.000000e+00 : f32
    %117 = vector.broadcast %cst_59 : f32 to vector<16x64xf32>
    %118 = arith.addf %117, %116 : vector<16x64xf32>
    %cst_60 = arith.constant 5.000000e-01 : f32
    %119 = vector.broadcast %cst_60 : f32 to vector<16x64xf32>
    %120 = arith.mulf %119, %118 : vector<16x64xf32>
    %121 = arith.mulf %108, %120 : vector<16x64xf32>
    %c0_61 = arith.constant 0 : index
    %c0_62 = arith.constant 0 : index
    %c0_63 = arith.constant 0 : index
    %122 = vector.load %arg16[%c0_61, %c0_62, %c0_63] : memref<1x64x32xf32, #tpu.memory_space<vmem>>, vector<1x64x32xf32>
    %123 = vector.shape_cast %122 : vector<1x64x32xf32> to vector<64x32xf32>
    %cst_64 = arith.constant dense<0.000000e+00> : vector<16x32xf32>
    %124 = tpu.matmul %121, %123, %cst_64 {dimension_numbers = #tpu.dot_dimension_numbers<[1], [0], [0], [1], [0, 0, 1, 1], [], []>} : vector<16x64xf32>, vector<64x32xf32>, vector<16x32xf32> -> vector<16x32xf32>
    %c0_65 = arith.constant 0 : index
    %c0_66 = arith.constant 0 : index
    %c0_67 = arith.constant 0 : index
    %125 = vector.load %arg17[%c0_65, %c0_66, %c0_67] : memref<1x1x32xf32, #tpu.memory_space<vmem>>, vector<1x1x32xf32>
    %126 = vector.shape_cast %125 : vector<1x1x32xf32> to vector<1x32xf32>
    %127 = vector.broadcast %126 : vector<1x32xf32> to vector<16x32xf32>
    %128 = arith.addf %124, %127 : vector<16x32xf32>
    %129 = arith.addf %101, %128 : vector<16x32xf32>
    %c0_68 = arith.constant 0 : index
    %c0_69 = arith.constant 0 : index
    %c0_70 = arith.constant 0 : index
    %130 = vector.load %arg18[%c0_68, %c0_69, %c0_70] : memref<1x1x32xf32, #tpu.memory_space<vmem>>, vector<1x1x32xf32>
    %131 = vector.shape_cast %130 : vector<1x1x32xf32> to vector<1x32xf32>
    %c0_71 = arith.constant 0 : index
    %c0_72 = arith.constant 0 : index
    %c0_73 = arith.constant 0 : index
    %132 = vector.load %arg19[%c0_71, %c0_72, %c0_73] : memref<1x1x32xf32, #tpu.memory_space<vmem>>, vector<1x1x32xf32>
    %133 = vector.shape_cast %132 : vector<1x1x32xf32> to vector<1x32xf32>
    %cst_74 = arith.constant dense<0.000000e+00> : vector<16xf32>
    %134 = vector.multi_reduction <add>, %129, %cst_74 [1] : vector<16x32xf32> to vector<16xf32>
    %135 = vector.shape_cast %134 : vector<16xf32> to vector<16x1xf32>
    %cst_75 = arith.constant 3.200000e+01 : f32
    %136 = vector.broadcast %cst_75 : f32 to vector<16x1xf32>
    %137 = arith.divf %135, %136 : vector<16x1xf32>
    %138 = vector.broadcast %137 : vector<16x1xf32> to vector<16x32xf32>
    %139 = arith.subf %129, %138 : vector<16x32xf32>
    %140 = arith.mulf %139, %139 : vector<16x32xf32>
    %cst_76 = arith.constant dense<0.000000e+00> : vector<16xf32>
    %141 = vector.multi_reduction <add>, %140, %cst_76 [1] : vector<16x32xf32> to vector<16xf32>
    %142 = vector.shape_cast %141 : vector<16xf32> to vector<16x1xf32>
    %cst_77 = arith.constant 3.200000e+01 : f32
    %143 = vector.broadcast %cst_77 : f32 to vector<16x1xf32>
    %144 = arith.divf %142, %143 : vector<16x1xf32>
    %145 = vector.broadcast %137 : vector<16x1xf32> to vector<16x32xf32>
    %146 = arith.subf %129, %145 : vector<16x32xf32>
    %cst_78 = arith.constant 9.99999996E-13 : f32
    %147 = vector.broadcast %cst_78 : f32 to vector<16x1xf32>
    %148 = arith.addf %144, %147 : vector<16x1xf32>
    %149 = math.rsqrt %148 : vector<16x1xf32>
    %150 = vector.broadcast %149 : vector<16x1xf32> to vector<16x32xf32>
    %151 = arith.mulf %146, %150 : vector<16x32xf32>
    %152 = vector.broadcast %131 : vector<1x32xf32> to vector<16x32xf32>
    %153 = arith.mulf %151, %152 : vector<16x32xf32>
    %154 = vector.broadcast %133 : vector<1x32xf32> to vector<16x32xf32>
    %155 = arith.addf %153, %154 : vector<16x32xf32>
    %c0_79 = arith.constant 0 : index
    %c0_80 = arith.constant 0 : index
    %156 = vector.load %arg26[%c0_79, %c0_80] : memref<16x32xf32, #tpu.memory_space<vmem>>, vector<16x32xf32>
    tpu.vector_store %arg26[%c0_79, %c0_80], %155 {strides = array<i32>} : memref<16x32xf32, #tpu.memory_space<vmem>>, vector<16x32xf32>,
    %c1_i32 = arith.constant 1 : i32
    %157 = arith.cmpi eq, %arg0, %c1_i32 : i32
    %158 = arith.extui %157 : i1 to i32
    %c0_i32_81 = arith.constant 0 : i32
    %159 = arith.cmpi ne, %158, %c0_i32_81 : i32
    scf.if %159 {
      %160 = vector.shape_cast %155 : vector<16x32xf32> to vector<2x8x32xf32>
      %161 = vector.extract_strided_slice %160 {offsets = [0, 0, 0], sizes = [2, 1, 32], strides = [1, 1, 1]} : vector<2x8x32xf32> to vector<2x1x32xf32>
      %162 = vector.shape_cast %161 : vector<2x1x32xf32> to vector<2x32xf32>
      %c0_82 = arith.constant 0 : index
      %c0_83 = arith.constant 0 : index
      %163 = vector.load %arg20[%c0_82, %c0_83] : memref<32x128xf32, #tpu.memory_space<vmem>>, vector<32x128xf32>
      %cst_84 = arith.constant dense<0.000000e+00> : vector<2x128xf32>
      %164 = tpu.matmul %162, %163, %cst_84 {dimension_numbers = #tpu.dot_dimension_numbers<[1], [0], [0], [1], [0, 0, 1, 1], [], []>} : vector<2x32xf32>, vector<32x128xf32>, vector<2x128xf32> -> vector<2x128xf32>
      %c0_85 = arith.constant 0 : index
      %c0_86 = arith.constant 0 : index
      %165 = vector.load %arg21[%c0_85, %c0_86] : memref<1x128xf32, #tpu.memory_space<vmem>>, vector<1x128xf32>
      %166 = vector.broadcast %165 : vector<1x128xf32> to vector<2x128xf32>
      %167 = arith.addf %164, %166 : vector<2x128xf32>
      %c0_87 = arith.constant 0 : index
      %c0_88 = arith.constant 0 : index
      %168 = vector.load %arg24[%c0_87, %c0_88] : memref<2x128xf32, #tpu.memory_space<vmem>>, vector<2x128xf32>
      tpu.vector_store %arg24[%c0_87, %c0_88], %167 {strides = array<i32>} : memref<2x128xf32, #tpu.memory_space<vmem>>, vector<2x128xf32>,
      %c0_89 = arith.constant 0 : index
      %c0_90 = arith.constant 0 : index
      %169 = vector.load %arg22[%c0_89, %c0_90] : memref<32x128xf32, #tpu.memory_space<vmem>>, vector<32x128xf32>
      %cst_91 = arith.constant dense<0.000000e+00> : vector<16x128xf32>
      %170 = tpu.matmul %155, %169, %cst_91 {dimension_numbers = #tpu.dot_dimension_numbers<[1], [0], [0], [1], [0, 0, 1, 1], [], []>} : vector<16x32xf32>, vector<32x128xf32>, vector<16x128xf32> -> vector<16x128xf32>
      %c0_92 = arith.constant 0 : index
      %c0_93 = arith.constant 0 : index
      %171 = vector.load %arg23[%c0_92, %c0_93] : memref<1x128xf32, #tpu.memory_space<vmem>>, vector<1x128xf32>
      %172 = vector.broadcast %171 : vector<1x128xf32> to vector<16x128xf32>
      %173 = arith.addf %170, %172 : vector<16x128xf32>
      %174 = vector.shape_cast %173 : vector<16x128xf32> to vector<2x8x128xf32>
      %c0_94 = arith.constant 0 : index
      %c0_95 = arith.constant 0 : index
      %c0_96 = arith.constant 0 : index
      %175 = vector.load %arg25[%c0_94, %c0_95, %c0_96] : memref<2x8x128xf32, #tpu.memory_space<vmem>>, vector<2x8x128xf32>
      tpu.vector_store %arg25[%c0_94, %c0_95, %c0_96], %174 {strides = array<i32>} : memref<2x8x128xf32, #tpu.memory_space<vmem>>, vector<2x8x128xf32>,
    } else {
    }
    return
  }
  func.func @transform_0(%arg0: i32) -> (i32, i32, i32) {
    %c0_i32 = arith.constant 0 : i32
    %c0_i32_0 = arith.constant 0 : i32
    %c0_i32_1 = arith.constant 0 : i32
    %c0_i32_2 = arith.constant 0 : i32
    return %c0_i32, %c0_i32_0, %c0_i32_1 : i32, i32, i32
  }
  func.func @transform_1(%arg0: i32) -> (i32, i32) {
    %c0_i32 = arith.constant 0 : i32
    %c0_i32_0 = arith.constant 0 : i32
    %c0_i32_1 = arith.constant 0 : i32
    return %c0_i32, %c0_i32_0 : i32, i32
  }
  func.func @transform_2(%arg0: i32) -> (i32, i32) {
    %c0_i32 = arith.constant 0 : i32
    %c0_i32_0 = arith.constant 0 : i32
    %c0_i32_1 = arith.constant 0 : i32
    return %c0_i32, %c0_i32_0 : i32, i32
  }
  func.func @transform_3(%arg0: i32) -> (i32, i32, i32) {
    %c0_i32 = arith.constant 0 : i32
    %c0_i32_0 = arith.constant 0 : i32
    %c0_i32_1 = arith.constant 0 : i32
    return %arg0, %c0_i32, %c0_i32_0 : i32, i32, i32
  }
  func.func @transform_4(%arg0: i32) -> (i32, i32, i32) {
    %c0_i32 = arith.constant 0 : i32
    %c0_i32_0 = arith.constant 0 : i32
    %c0_i32_1 = arith.constant 0 : i32
    return %arg0, %c0_i32, %c0_i32_0 : i32, i32, i32
  }
  func.func @transform_5(%arg0: i32) -> (i32, i32, i32) {
    %c0_i32 = arith.constant 0 : i32
    %c0_i32_0 = arith.constant 0 : i32
    %c0_i32_1 = arith.constant 0 : i32
    return %arg0, %c0_i32, %c0_i32_0 : i32, i32, i32
  }
  func.func @transform_6(%arg0: i32) -> (i32, i32, i32) {
    %c0_i32 = arith.constant 0 : i32
    %c0_i32_0 = arith.constant 0 : i32
    %c0_i32_1 = arith.constant 0 : i32
    return %arg0, %c0_i32, %c0_i32_0 : i32, i32, i32
  }
  func.func @transform_7(%arg0: i32) -> (i32, i32, i32) {
    %c0_i32 = arith.constant 0 : i32
    %c0_i32_0 = arith.constant 0 : i32
    %c0_i32_1 = arith.constant 0 : i32
    return %arg0, %c0_i32, %c0_i32_0 : i32, i32, i32
  }
  func.func @transform_8(%arg0: i32) -> (i32, i32, i32) {
    %c0_i32 = arith.constant 0 : i32
    %c0_i32_0 = arith.constant 0 : i32
    %c0_i32_1 = arith.constant 0 : i32
    return %arg0, %c0_i32, %c0_i32_0 : i32, i32, i32
  }
  func.func @transform_9(%arg0: i32) -> (i32, i32, i32) {
    %c0_i32 = arith.constant 0 : i32
    %c0_i32_0 = arith.constant 0 : i32
    %c0_i32_1 = arith.constant 0 : i32
    return %arg0, %c0_i32, %c0_i32_0 : i32, i32, i32
  }
  func.func @transform_10(%arg0: i32) -> (i32, i32, i32) {
    %c0_i32 = arith.constant 0 : i32
    %c0_i32_0 = arith.constant 0 : i32
    %c0_i32_1 = arith.constant 0 : i32
    return %arg0, %c0_i32, %c0_i32_0 : i32, i32, i32
  }
  func.func @transform_11(%arg0: i32) -> (i32, i32, i32) {
    %c0_i32 = arith.constant 0 : i32
    %c0_i32_0 = arith.constant 0 : i32
    %c0_i32_1 = arith.constant 0 : i32
    return %arg0, %c0_i32, %c0_i32_0 : i32, i32, i32
  }
  func.func @transform_12(%arg0: i32) -> (i32, i32, i32) {
    %c0_i32 = arith.constant 0 : i32
    %c0_i32_0 = arith.constant 0 : i32
    %c0_i32_1 = arith.constant 0 : i32
    return %arg0, %c0_i32, %c0_i32_0 : i32, i32, i32
  }
  func.func @transform_13(%arg0: i32) -> (i32, i32, i32) {
    %c0_i32 = arith.constant 0 : i32
    %c0_i32_0 = arith.constant 0 : i32
    %c0_i32_1 = arith.constant 0 : i32
    return %arg0, %c0_i32, %c0_i32_0 : i32, i32, i32
  }
  func.func @transform_14(%arg0: i32) -> (i32, i32, i32) {
    %c0_i32 = arith.constant 0 : i32
    %c0_i32_0 = arith.constant 0 : i32
    %c0_i32_1 = arith.constant 0 : i32
    return %arg0, %c0_i32, %c0_i32_0 : i32, i32, i32
  }
  func.func @transform_15(%arg0: i32) -> (i32, i32, i32) {
    %c0_i32 = arith.constant 0 : i32
    %c0_i32_0 = arith.constant 0 : i32
    %c0_i32_1 = arith.constant 0 : i32
    return %arg0, %c0_i32, %c0_i32_0 : i32, i32, i32
  }
  func.func @transform_16(%arg0: i32) -> (i32, i32, i32) {
    %c0_i32 = arith.constant 0 : i32
    %c0_i32_0 = arith.constant 0 : i32
    %c0_i32_1 = arith.constant 0 : i32
    return %arg0, %c0_i32, %c0_i32_0 : i32, i32, i32
  }
  func.func @transform_17(%arg0: i32) -> (i32, i32, i32) {
    %c0_i32 = arith.constant 0 : i32
    %c0_i32_0 = arith.constant 0 : i32
    %c0_i32_1 = arith.constant 0 : i32
    return %arg0, %c0_i32, %c0_i32_0 : i32, i32, i32
  }
  func.func @transform_18(%arg0: i32) -> (i32, i32, i32) {
    %c0_i32 = arith.constant 0 : i32
    %c0_i32_0 = arith.constant 0 : i32
    %c0_i32_1 = arith.constant 0 : i32
    return %arg0, %c0_i32, %c0_i32_0 : i32, i32, i32
  }
  func.func @transform_19(%arg0: i32) -> (i32, i32) {
    %c0_i32 = arith.constant 0 : i32
    %c0_i32_0 = arith.constant 0 : i32
    %c0_i32_1 = arith.constant 0 : i32
    return %c0_i32, %c0_i32_0 : i32, i32
  }
  func.func @transform_20(%arg0: i32) -> (i32, i32) {
    %c0_i32 = arith.constant 0 : i32
    %c0_i32_0 = arith.constant 0 : i32
    %c0_i32_1 = arith.constant 0 : i32
    return %c0_i32, %c0_i32_0 : i32, i32
  }
  func.func @transform_21(%arg0: i32) -> (i32, i32) {
    %c0_i32 = arith.constant 0 : i32
    %c0_i32_0 = arith.constant 0 : i32
    %c0_i32_1 = arith.constant 0 : i32
    return %c0_i32, %c0_i32_0 : i32, i32
  }
  func.func @transform_22(%arg0: i32) -> (i32, i32) {
    %c0_i32 = arith.constant 0 : i32
    %c0_i32_0 = arith.constant 0 : i32
    %c0_i32_1 = arith.constant 0 : i32
    return %c0_i32, %c0_i32_0 : i32, i32
  }
  func.func @transform_23(%arg0: i32) -> (i32, i32) {
    %c0_i32 = arith.constant 0 : i32
    %c0_i32_0 = arith.constant 0 : i32
    %c0_i32_1 = arith.constant 0 : i32
    return %c0_i32, %c0_i32_0 : i32, i32
  }
  func.func @transform_24(%arg0: i32) -> (i32, i32, i32) {
    %c0_i32 = arith.constant 0 : i32
    %c0_i32_0 = arith.constant 0 : i32
    %c0_i32_1 = arith.constant 0 : i32
    %c0_i32_2 = arith.constant 0 : i32
    return %c0_i32, %c0_i32_0, %c0_i32_1 : i32, i32, i32
  }
}

</mosaic_0001>

<llo_original>
// kernel: custom-call.6
$region0: #{custom-call.6}
  %s0 = inlined_call_operand.vmem [shape: s32[6,2,7], index: 0, kind: output, shape index: {}]

// kernel: koelectra_forward.1
$region0: #{koelectra_forward.1}
  #allocation0 [shape = 'u32[]', space=smem, size = 0x4, offset = 0x4, fixed_abs, tag = 'smem constant byte address 0x4 - core index']
  #allocation1 [shape = 'u32[144,128]{1,0:T(1,128)}', space=vmem, size = 0x12000, scoped, tag = 'internal scratch']
  #allocation2 [shape = 'f32[16,32]{1,0:T(8,128)}', space=vmem, size = 0x2000, scoped, tag = 'scratch operand']
  %s0 = inlined_call_operand.vmem [shape: f32[2,8,32], index: 0, kind: input, shape index: {}]
  %s1 = inlined_call_operand.vmem [shape: f32[1,32], index: 1, kind: input, shape index: {}]
  %s2 = inlined_call_operand.vmem [shape: f32[1,32], index: 2, kind: input, shape index: {}]
  %s3 = inlined_call_operand.vmem [shape: f32[2,32,32], index: 3, kind: input, shape index: {}]
  %s4 = inlined_call_operand.vmem [shape: f32[2,1,32], index: 4, kind: input, shape index: {}]
  %s5 = inlined_call_operand.vmem [shape: f32[2,32,32], index: 5, kind: input, shape index: {}]
  %s6 = inlined_call_operand.vmem [shape: f32[2,1,32], index: 6, kind: input, shape index: {}]
  %s7 = inlined_call_operand.vmem [shape: f32[2,32,32], index: 7, kind: input, shape index: {}]
  %s8 = inlined_call_operand.vmem [shape: f32[2,1,32], index: 8, kind: input, shape index: {}]
  %s9 = inlined_call_operand.vmem [shape: f32[2,32,32], index: 9, kind: input, shape index: {}]
  %s10 = inlined_call_operand.vmem [shape: f32[2,1,32], index: 10, kind: input, shape index: {}]
  %s11 = inlined_call_operand.vmem [shape: f32[2,1,32], index: 11, kind: input, shape index: {}]
  %s12 = inlined_call_operand.vmem [shape: f32[2,1,32], index: 12, kind: input, shape index: {}]
  %s13 = inlined_call_operand.vmem [shape: f32[2,32,64], index: 13, kind: input, shape index: {}]
  %s14 = inlined_call_operand.vmem [shape: f32[2,1,64], index: 14, kind: input, shape index: {}]
  %s15 = inlined_call_operand.vmem [shape: f32[2,64,32], index: 15, kind: input, shape index: {}]
  %s16 = inlined_call_operand.vmem [shape: f32[2,1,32], index: 16, kind: input, shape index: {}]
  %s17 = inlined_call_operand.vmem [shape: f32[2,1,32], index: 17, kind: input, shape index: {}]
  %s18 = inlined_call_operand.vmem [shape: f32[2,1,32], index: 18, kind: input, shape index: {}]
  %s19 = inlined_call_operand.vmem [shape: f32[32,128], index: 19, kind: input, shape index: {}]
  %s20 = inlined_call_operand.vmem [shape: f32[1,128], index: 20, kind: input, shape index: {}]
  %s21 = inlined_call_operand.vmem [shape: f32[32,128], index: 21, kind: input, shape index: {}]
  %s22 = inlined_call_operand.vmem [shape: f32[1,128], index: 22, kind: input, shape index: {}]
  %s23 = inlined_call_operand.hbm [shape: f32[2,128], index: 23, kind: output, shape index: {0}]
  %s24 = inlined_call_operand.vmem [shape: f32[2,8,128], index: 24, kind: output, shape index: {1}]
  %25 = xla_tuple %s23, %s24
  %s26 = sld [smem:[#allocation0]]
  $region141: #{koelectra_forward.1} parent=0
    _
  %s28 = ssub.s32 1, %s26
  %s29 = scalar_select 0, %s28, %s26
  $region1: #{koelectra_forward.1} parent=0
    #allocation3 [shape = 'u8[1024]{0}', space=vmem, size = 0x400, scoped, tag = 'output window, operand 0, single buffered']
    #allocation4 [shape = 's32[2]{0}', space=sflag, size = 0x8, scoped, tag = 'scoped memory for koelectra_forward.1']
    %30 = vsyncpa [#allocation4], 0
    loop: start=0, step=1, limit=4
    $region2: #{koelectra_forward.1} parent=1 // loop_pre_header
      _
    $region3: #{koelectra_forward.1} parent=1 // loop_header
      %s32 = sphi 0, %s36
      %p33 = scmp.ge.s32.totalorder %s32, 4
      %s40 = sphi 0, %s40
      %s42 = sphi 0, %s40
      %s43 = sphi 0, %s42
      %s57 = sphi 0, %s43
      %s61 = sphi 0, %s61
      %s63 = sphi 0, %s61
      %s64 = sphi 0, %s63
      %s78 = sphi 0, %s64
      %s82 = sphi 0, %s82
      %s84 = sphi 0, %s82
      %s85 = sphi 0, %s84
      %s99 = sphi 0, %s85
      %s105 = sphi 0, %s107
      %s108 = sphi 0, %s105
      %s109 = sphi 0, %s108
      %s125 = sphi 0, %s109
      %s131 = sphi 0, %s133
      %s134 = sphi 0, %s131
      %s135 = sphi 0, %s134
      %s151 = sphi 0, %s135
      %s157 = sphi 0, %s159
      %s160 = sphi 0, %s157
      %s161 = sphi 0, %s160
      %s177 = sphi 0, %s161
      %s183 = sphi 0, %s185
      %s186 = sphi 0, %s183
      %s187 = sphi 0, %s186
      %s203 = sphi 0, %s187
      %s209 = sphi 0, %s211
      %s212 = sphi 0, %s209
      %s213 = sphi 0, %s212
      %s229 = sphi 0, %s213
      %s235 = sphi 0, %s237
      %s238 = sphi 0, %s235
      %s239 = sphi 0, %s238
      %s255 = sphi 0, %s239
      %s261 = sphi 0, %s263
      %s264 = sphi 0, %s261
      %s265 = sphi 0, %s264
      %s281 = sphi 0, %s265
      %s287 = sphi 0, %s289
      %s290 = sphi 0, %s287
      %s291 = sphi 0, %s290
      %s307 = sphi 0, %s291
      %s313 = sphi 0, %s315
      %s316 = sphi 0, %s313
      %s317 = sphi 0, %s316
      %s333 = sphi 0, %s317
      %s339 = sphi 0, %s341
      %s342 = sphi 0, %s339
      %s343 = sphi 0, %s342
      %s359 = sphi 0, %s343
      %s365 = sphi 0, %s367
      %s368 = sphi 0, %s365
      %s369 = sphi 0, %s368
      %s385 = sphi 0, %s369
      %s391 = sphi 0, %s393
      %s394 = sphi 0, %s391
      %s395 = sphi 0, %s394
      %s411 = sphi 0, %s395
      %s417 = sphi 0, %s419
      %s420 = sphi 0, %s417
      %s421 = sphi 0, %s420
      %s437 = sphi 0, %s421
      %s443 = sphi 0, %s445
      %s446 = sphi 0, %s443
      %s447 = sphi 0, %s446
      %s463 = sphi 0, %s447
      %s469 = sphi 0, %s471
      %s472 = sphi 0, %s469
      %s473 = sphi 0, %s472
      %s489 = sphi 0, %s473
      %s495 = sphi 0, %s497
      %s498 = sphi 0, %s495
      %s499 = sphi 0, %s498
      %s515 = sphi 0, %s499
      %s519 = sphi 0, %s519
      %s521 = sphi 0, %s519
      %s522 = sphi 0, %s521
      %s536 = sphi 0, %s522
      %s540 = sphi 0, %s540
      %s542 = sphi 0, %s540
      %s543 = sphi 0, %s542
      %s557 = sphi 0, %s543
      %s561 = sphi 0, %s561
      %s563 = sphi 0, %s561
      %s564 = sphi 0, %s563
      %s578 = sphi 0, %s564
      %s582 = sphi 0, %s582
      %s584 = sphi 0, %s582
      %s585 = sphi 0, %s584
      %s599 = sphi 0, %s585
      %s603 = sphi 0, %s603
      %s605 = sphi 0, %s603
      %s606 = sphi 0, %s605
      %s620 = sphi 0, %s606
      %s624 = sphi 0, %s624
      %s626 = sphi 0, %s624
      %s627 = sphi 0, %s626
      %s641 = sphi 0, %s627
    $region4: #{koelectra_forward.1} parent=1 // loop_header_branch
      %35 = sbr.rel (%p33) target = $region8
    $region5: #{koelectra_forward.1} parent=1 // loop_body
      %s37 = ssub.s32 %s32, 1
      %s38 = ssub.s32 %s32, 2
      %s39 = sadd.s32 %s32, 1
      %s41 = sadd.s32 %s40, 1
      %p44 = scmp.eq.s32.totalorder %s32, 1
      %p45 = scmp.ne.s32.totalorder %s40, %s42
      %p46 = scmp.eq.s32.totalorder %s32, 0
      %p47 = por %p45, %p46
      %p48 = scmp.ne.s32.totalorder %s40, %s42
      %p49 = scmp.eq.s32.totalorder %s37, 1
      %p50 = por %p48, %p49
      %p51 = scmp.ne.s32.totalorder %s42, %s43
      %p52 = scmp.eq.s32.totalorder %s37, 0
      %p53 = por %p51, %p52
      %p54 = scmp.ne.s32.totalorder %s42, %s43
      %p55 = scmp.eq.s32.totalorder %s38, 1
      %p56 = por %p54, %p55
      %p58 = scmp.ne.s32.totalorder %s43, %s57
      %p59 = scmp.eq.s32.totalorder %s38, 0
      %p60 = por %p58, %p59
      %s62 = sadd.s32 %s61, 1
      %p65 = scmp.eq.s32.totalorder %s32, 1
      %p66 = scmp.ne.s32.totalorder %s61, %s63
      %p67 = scmp.eq.s32.totalorder %s32, 0
      %p68 = por %p66, %p67
      %p69 = scmp.ne.s32.totalorder %s61, %s63
      %p70 = scmp.eq.s32.totalorder %s37, 1
      %p71 = por %p69, %p70
      %p72 = scmp.ne.s32.totalorder %s63, %s64
      %p73 = scmp.eq.s32.totalorder %s37, 0
      %p74 = por %p72, %p73
      %p75 = scmp.ne.s32.totalorder %s63, %s64
      %p76 = scmp.eq.s32.totalorder %s38, 1
      %p77 = por %p75, %p76
      %p79 = scmp.ne.s32.totalorder %s64, %s78
      %p80 = scmp.eq.s32.totalorder %s38, 0
      %p81 = por %p79, %p80
      %s83 = sadd.s32 %s82, 1
      %p86 = scmp.eq.s32.totalorder %s32, 1
      %p87 = scmp.ne.s32.totalorder %s82, %s84
      %p88 = scmp.eq.s32.totalorder %s32, 0
      %p89 = por %p87, %p88
      %p90 = scmp.ne.s32.totalorder %s82, %s84
      %p91 = scmp.eq.s32.totalorder %s37, 1
      %p92 = por %p90, %p91
      %p93 = scmp.ne.s32.totalorder %s84, %s85
      %p94 = scmp.eq.s32.totalorder %s37, 0
      %p95 = por %p93, %p94
      %p96 = scmp.ne.s32.totalorder %s84, %s85
      %p97 = scmp.eq.s32.totalorder %s38, 1
      %p98 = por %p96, %p97
      %p100 = scmp.ne.s32.totalorder %s85, %s99
      %p101 = scmp.eq.s32.totalorder %s38, 0
      %p102 = por %p100, %p101
      %s103 = ssub.s32 %s32, %s39
      %p104 = scmp.eq.s32.totalorder %s103, 0
      %s106 = sadd.s32 %s105, 1
      %s107 = scalar_select %p104, %s105, %s106
      %p110 = pneg %p104
      %p111 = scmp.eq.s32.totalorder %s32, 1
      %p112 = por %p110, %p111
      %p113 = scmp.ne.s32.totalorder %s105, %s108
      %p114 = scmp.eq.s32.totalorder %s32, 0
      %p115 = por %p113, %p114
      %p116 = scmp.ne.s32.totalorder %s105, %s108
      %p117 = scmp.eq.s32.totalorder %s37, 1
      %p118 = por %p116, %p117
      %p119 = scmp.ne.s32.totalorder %s108, %s109
      %p120 = scmp.eq.s32.totalorder %s37, 0
      %p121 = por %p119, %p120
      %p122 = scmp.ne.s32.totalorder %s108, %s109
      %p123 = scmp.eq.s32.totalorder %s38, 1
      %p124 = por %p122, %p123
      %p126 = scmp.ne.s32.totalorder %s109, %s125
      %p127 = scmp.eq.s32.totalorder %s38, 0
      %p128 = por %p126, %p127
      %s129 = ssub.s32 %s32, %s39
      %p130 = scmp.eq.s32.totalorder %s129, 0
      %s132 = sadd.s32 %s131, 1
      %s133 = scalar_select %p130, %s131, %s132
      %p136 = pneg %p130
      %p137 = scmp.eq.s32.totalorder %s32, 1
      %p138 = por %p136, %p137
      %p139 = scmp.ne.s32.totalorder %s131, %s134
      %p140 = scmp.eq.s32.totalorder %s32, 0
      %p141 = por %p139, %p140
      %p142 = scmp.ne.s32.totalorder %s131, %s134
      %p143 = scmp.eq.s32.totalorder %s37, 1
      %p144 = por %p142, %p143
      %p145 = scmp.ne.s32.totalorder %s134, %s135
      %p146 = scmp.eq.s32.totalorder %s37, 0
      %p147 = por %p145, %p146
      %p148 = scmp.ne.s32.totalorder %s134, %s135
      %p149 = scmp.eq.s32.totalorder %s38, 1
      %p150 = por %p148, %p149
      %p152 = scmp.ne.s32.totalorder %s135, %s151
      %p153 = scmp.eq.s32.totalorder %s38, 0
      %p154 = por %p152, %p153
      %s155 = ssub.s32 %s32, %s39
      %p156 = scmp.eq.s32.totalorder %s155, 0
      %s158 = sadd.s32 %s157, 1
      %s159 = scalar_select %p156, %s157, %s158
      %p162 = pneg %p156
      %p163 = scmp.eq.s32.totalorder %s32, 1
      %p164 = por %p162, %p163
      %p165 = scmp.ne.s32.totalorder %s157, %s160
      %p166 = scmp.eq.s32.totalorder %s32, 0
      %p167 = por %p165, %p166
      %p168 = scmp.ne.s32.totalorder %s157, %s160
      %p169 = scmp.eq.s32.totalorder %s37, 1
      %p170 = por %p168, %p169
      %p171 = scmp.ne.s32.totalorder %s160, %s161
      %p172 = scmp.eq.s32.totalorder %s37, 0
      %p173 = por %p171, %p172
      %p174 = scmp.ne.s32.totalorder %s160, %s161
      %p175 = scmp.eq.s32.totalorder %s38, 1
      %p176 = por %p174, %p175
      %p178 = scmp.ne.s32.totalorder %s161, %s177
      %p179 = scmp.eq.s32.totalorder %s38, 0
      %p180 = por %p178, %p179
      %s181 = ssub.s32 %s32, %s39
      %p182 = scmp.eq.s32.totalorder %s181, 0
      %s184 = sadd.s32 %s183, 1
      %s185 = scalar_select %p182, %s183, %s184
      %p188 = pneg %p182
      %p189 = scmp.eq.s32.totalorder %s32, 1
      %p190 = por %p188, %p189
      %p191 = scmp.ne.s32.totalorder %s183, %s186
      %p192 = scmp.eq.s32.totalorder %s32, 0
      %p193 = por %p191, %p192
      %p194 = scmp.ne.s32.totalorder %s183, %s186
      %p195 = scmp.eq.s32.totalorder %s37, 1
      %p196 = por %p194, %p195
      %p197 = scmp.ne.s32.totalorder %s186, %s187
      %p198 = scmp.eq.s32.totalorder %s37, 0
      %p199 = por %p197, %p198
      %p200 = scmp.ne.s32.totalorder %s186, %s187
      %p201 = scmp.eq.s32.totalorder %s38, 1
      %p202 = por %p200, %p201
      %p204 = scmp.ne.s32.totalorder %s187, %s203
      %p205 = scmp.eq.s32.totalorder %s38, 0
      %p206 = por %p204, %p205
      %s207 = ssub.s32 %s32, %s39
      %p208 = scmp.eq.s32.totalorder %s207, 0
      %s210 = sadd.s32 %s209, 1
      %s211 = scalar_select %p208, %s209, %s210
      %p214 = pneg %p208
      %p215 = scmp.eq.s32.totalorder %s32, 1
      %p216 = por %p214, %p215
      %p217 = scmp.ne.s32.totalorder %s209, %s212
      %p218 = scmp.eq.s32.totalorder %s32, 0
      %p219 = por %p217, %p218
      %p220 = scmp.ne.s32.totalorder %s209, %s212
      %p221 = scmp.eq.s32.totalorder %s37, 1
      %p222 = por %p220, %p221
      %p223 = scmp.ne.s32.totalorder %s212, %s213
      %p224 = scmp.eq.s32.totalorder %s37, 0
      %p225 = por %p223, %p224
      %p226 = scmp.ne.s32.totalorder %s212, %s213
      %p227 = scmp.eq.s32.totalorder %s38, 1
      %p228 = por %p226, %p227
      %p230 = scmp.ne.s32.totalorder %s213, %s229
      %p231 = scmp.eq.s32.totalorder %s38, 0
      %p232 = por %p230, %p231
      %s233 = ssub.s32 %s32, %s39
      %p234 = scmp.eq.s32.totalorder %s233, 0
      %s236 = sadd.s32 %s235, 1
      %s237 = scalar_select %p234, %s235, %s236
      %p240 = pneg %p234
      %p241 = scmp.eq.s32.totalorder %s32, 1
      %p242 = por %p240, %p241
      %p243 = scmp.ne.s32.totalorder %s235, %s238
      %p244 = scmp.eq.s32.totalorder %s32, 0
      %p245 = por %p243, %p244
      %p246 = scmp.ne.s32.totalorder %s235, %s238
      %p247 = scmp.eq.s32.totalorder %s37, 1
      %p248 = por %p246, %p247
      %p249 = scmp.ne.s32.totalorder %s238, %s239
      %p250 = scmp.eq.s32.totalorder %s37, 0
      %p251 = por %p249, %p250
      %p252 = scmp.ne.s32.totalorder %s238, %s239
      %p253 = scmp.eq.s32.totalorder %s38, 1
      %p254 = por %p252, %p253
      %p256 = scmp.ne.s32.totalorder %s239, %s255
      %p257 = scmp.eq.s32.totalorder %s38, 0
      %p258 = por %p256, %p257
      %s259 = ssub.s32 %s32, %s39
      %p260 = scmp.eq.s32.totalorder %s259, 0
      %s262 = sadd.s32 %s261, 1
      %s263 = scalar_select %p260, %s261, %s262
      %p266 = pneg %p260
      %p267 = scmp.eq.s32.totalorder %s32, 1
      %p268 = por %p266, %p267
      %p269 = scmp.ne.s32.totalorder %s261, %s264
      %p270 = scmp.eq.s32.totalorder %s32, 0
      %p271 = por %p269, %p270
      %p272 = scmp.ne.s32.totalorder %s261, %s264
      %p273 = scmp.eq.s32.totalorder %s37, 1
      %p274 = por %p272, %p273
      %p275 = scmp.ne.s32.totalorder %s264, %s265
      %p276 = scmp.eq.s32.totalorder %s37, 0
      %p277 = por %p275, %p276
      %p278 = scmp.ne.s32.totalorder %s264, %s265
      %p279 = scmp.eq.s32.totalorder %s38, 1
      %p280 = por %p278, %p279
      %p282 = scmp.ne.s32.totalorder %s265, %s281
      %p283 = scmp.eq.s32.totalorder %s38, 0
      %p284 = por %p282, %p283
      %s285 = ssub.s32 %s32, %s39
      %p286 = scmp.eq.s32.totalorder %s285, 0
      %s288 = sadd.s32 %s287, 1
      %s289 = scalar_select %p286, %s287, %s288
      %p292 = pneg %p286
      %p293 = scmp.eq.s32.totalorder %s32, 1
      %p294 = por %p292, %p293
      %p295 = scmp.ne.s32.totalorder %s287, %s290
      %p296 = scmp.eq.s32.totalorder %s32, 0
      %p297 = por %p295, %p296
      %p298 = scmp.ne.s32.totalorder %s287, %s290
      %p299 = scmp.eq.s32.totalorder %s37, 1
      %p300 = por %p298, %p299
      %p301 = scmp.ne.s32.totalorder %s290, %s291
      %p302 = scmp.eq.s32.totalorder %s37, 0
      %p303 = por %p301, %p302
      %p304 = scmp.ne.s32.totalorder %s290, %s291
      %p305 = scmp.eq.s32.totalorder %s38, 1
      %p306 = por %p304, %p305
      %p308 = scmp.ne.s32.totalorder %s291, %s307
      %p309 = scmp.eq.s32.totalorder %s38, 0
      %p310 = por %p308, %p309
      %s311 = ssub.s32 %s32, %s39
      %p312 = scmp.eq.s32.totalorder %s311, 0
      %s314 = sadd.s32 %s313, 1
      %s315 = scalar_select %p312, %s313, %s314
      %p318 = pneg %p312
      %p319 = scmp.eq.s32.totalorder %s32, 1
      %p320 = por %p318, %p319
      %p321 = scmp.ne.s32.totalorder %s313, %s316
      %p322 = scmp.eq.s32.totalorder %s32, 0
      %p323 = por %p321, %p322
      %p324 = scmp.ne.s32.totalorder %s313, %s316
      %p325 = scmp.eq.s32.totalorder %s37, 1
      %p326 = por %p324, %p325
      %p327 = scmp.ne.s32.totalorder %s316, %s317
      %p328 = scmp.eq.s32.totalorder %s37, 0
      %p329 = por %p327, %p328
      %p330 = scmp.ne.s32.totalorder %s316, %s317
      %p331 = scmp.eq.s32.totalorder %s38, 1
      %p332 = por %p330, %p331
      %p334 = scmp.ne.s32.totalorder %s317, %s333
      %p335 = scmp.eq.s32.totalorder %s38, 0
      %p336 = por %p334, %p335
      %s337 = ssub.s32 %s32, %s39
      %p338 = scmp.eq.s32.totalorder %s337, 0
      %s340 = sadd.s32 %s339, 1
      %s341 = scalar_select %p338, %s339, %s340
      %p344 = pneg %p338
      %p345 = scmp.eq.s32.totalorder %s32, 1
      %p346 = por %p344, %p345
      %p347 = scmp.ne.s32.totalorder %s339, %s342
      %p348 = scmp.eq.s32.totalorder %s32, 0
      %p349 = por %p347, %p348
      %p350 = scmp.ne.s32.totalorder %s339, %s342
      %p351 = scmp.eq.s32.totalorder %s37, 1
      %p352 = por %p350, %p351
      %p353 = scmp.ne.s32.totalorder %s342, %s343
      %p354 = scmp.eq.s32.totalorder %s37, 0
      %p355 = por %p353, %p354
      %p356 = scmp.ne.s32.totalorder %s342, %s343
      %p357 = scmp.eq.s32.totalorder %s38, 1
      %p358 = por %p356, %p357
      %p360 = scmp.ne.s32.totalorder %s343, %s359
      %p361 = scmp.eq.s32.totalorder %s38, 0
      %p362 = por %p360, %p361
      %s363 = ssub.s32 %s32, %s39
      %p364 = scmp.eq.s32.totalorder %s363, 0
      %s366 = sadd.s32 %s365, 1
      %s367 = scalar_select %p364, %s365, %s366
      %p370 = pneg %p364
      %p371 = scmp.eq.s32.totalorder %s32, 1
      %p372 = por %p370, %p371
      %p373 = scmp.ne.s32.totalorder %s365, %s368
      %p374 = scmp.eq.s32.totalorder %s32, 0
      %p375 = por %p373, %p374
      %p376 = scmp.ne.s32.totalorder %s365, %s368
      %p377 = scmp.eq.s32.totalorder %s37, 1
      %p378 = por %p376, %p377
      %p379 = scmp.ne.s32.totalorder %s368, %s369
      %p380 = scmp.eq.s32.totalorder %s37, 0
      %p381 = por %p379, %p380
      %p382 = scmp.ne.s32.totalorder %s368, %s369
      %p383 = scmp.eq.s32.totalorder %s38, 1
      %p384 = por %p382, %p383
      %p386 = scmp.ne.s32.totalorder %s369, %s385
      %p387 = scmp.eq.s32.totalorder %s38, 0
      %p388 = por %p386, %p387
      %s389 = ssub.s32 %s32, %s39
      %p390 = scmp.eq.s32.totalorder %s389, 0
      %s392 = sadd.s32 %s391, 1
      %s393 = scalar_select %p390, %s391, %s392
      %p396 = pneg %p390
      %p397 = scmp.eq.s32.totalorder %s32, 1
      %p398 = por %p396, %p397
      %p399 = scmp.ne.s32.totalorder %s391, %s394
      %p400 = scmp.eq.s32.totalorder %s32, 0
      %p401 = por %p399, %p400
      %p402 = scmp.ne.s32.totalorder %s391, %s394
      %p403 = scmp.eq.s32.totalorder %s37, 1
      %p404 = por %p402, %p403
      %p405 = scmp.ne.s32.totalorder %s394, %s395
      %p406 = scmp.eq.s32.totalorder %s37, 0
      %p407 = por %p405, %p406
      %p408 = scmp.ne.s32.totalorder %s394, %s395
      %p409 = scmp.eq.s32.totalorder %s38, 1
      %p410 = por %p408, %p409
      %p412 = scmp.ne.s32.totalorder %s395, %s411
      %p413 = scmp.eq.s32.totalorder %s38, 0
      %p414 = por %p412, %p413
      %s415 = ssub.s32 %s32, %s39
      %p416 = scmp.eq.s32.totalorder %s415, 0
      %s418 = sadd.s32 %s417, 1
      %s419 = scalar_select %p416, %s417, %s418
      %p422 = pneg %p416
      %p423 = scmp.eq.s32.totalorder %s32, 1
      %p424 = por %p422, %p423
      %p425 = scmp.ne.s32.totalorder %s417, %s420
      %p426 = scmp.eq.s32.totalorder %s32, 0
      %p427 = por %p425, %p426
      %p428 = scmp.ne.s32.totalorder %s417, %s420
      %p429 = scmp.eq.s32.totalorder %s37, 1
      %p430 = por %p428, %p429
      %p431 = scmp.ne.s32.totalorder %s420, %s421
      %p432 = scmp.eq.s32.totalorder %s37, 0
      %p433 = por %p431, %p432
      %p434 = scmp.ne.s32.totalorder %s420, %s421
      %p435 = scmp.eq.s32.totalorder %s38, 1
      %p436 = por %p434, %p435
      %p438 = scmp.ne.s32.totalorder %s421, %s437
      %p439 = scmp.eq.s32.totalorder %s38, 0
      %p440 = por %p438, %p439
      %s441 = ssub.s32 %s32, %s39
      %p442 = scmp.eq.s32.totalorder %s441, 0
      %s444 = sadd.s32 %s443, 1
      %s445 = scalar_select %p442, %s443, %s444
      %p448 = pneg %p442
      %p449 = scmp.eq.s32.totalorder %s32, 1
      %p450 = por %p448, %p449
      %p451 = scmp.ne.s32.totalorder %s443, %s446
      %p452 = scmp.eq.s32.totalorder %s32, 0
      %p453 = por %p451, %p452
      %p454 = scmp.ne.s32.totalorder %s443, %s446
      %p455 = scmp.eq.s32.totalorder %s37, 1
      %p456 = por %p454, %p455
      %p457 = scmp.ne.s32.totalorder %s446, %s447
      %p458 = scmp.eq.s32.totalorder %s37, 0
      %p459 = por %p457, %p458
      %p460 = scmp.ne.s32.totalorder %s446, %s447
      %p461 = scmp.eq.s32.totalorder %s38, 1
      %p462 = por %p460, %p461
      %p464 = scmp.ne.s32.totalorder %s447, %s463
      %p465 = scmp.eq.s32.totalorder %s38, 0
      %p466 = por %p464, %p465
      %s467 = ssub.s32 %s32, %s39
      %p468 = scmp.eq.s32.totalorder %s467, 0
      %s470 = sadd.s32 %s469, 1
      %s471 = scalar_select %p468, %s469, %s470
      %p474 = pneg %p468
      %p475 = scmp.eq.s32.totalorder %s32, 1
      %p476 = por %p474, %p475
      %p477 = scmp.ne.s32.totalorder %s469, %s472
      %p478 = scmp.eq.s32.totalorder %s32, 0
      %p479 = por %p477, %p478
      %p480 = scmp.ne.s32.totalorder %s469, %s472
      %p481 = scmp.eq.s32.totalorder %s37, 1
      %p482 = por %p480, %p481
      %p483 = scmp.ne.s32.totalorder %s472, %s473
      %p484 = scmp.eq.s32.totalorder %s37, 0
      %p485 = por %p483, %p484
      %p486 = scmp.ne.s32.totalorder %s472, %s473
      %p487 = scmp.eq.s32.totalorder %s38, 1
      %p488 = por %p486, %p487
      %p490 = scmp.ne.s32.totalorder %s473, %s489
      %p491 = scmp.eq.s32.totalorder %s38, 0
      %p492 = por %p490, %p491
      %s493 = ssub.s32 %s32, %s39
      %p494 = scmp.eq.s32.totalorder %s493, 0
      %s496 = sadd.s32 %s495, 1
      %s497 = scalar_select %p494, %s495, %s496
      %p500 = pneg %p494
      %p501 = scmp.eq.s32.totalorder %s32, 1
      %p502 = por %p500, %p501
      %p503 = scmp.ne.s32.totalorder %s495, %s498
      %p504 = scmp.eq.s32.totalorder %s32, 0
      %p505 = por %p503, %p504
      %p506 = scmp.ne.s32.totalorder %s495, %s498
      %p507 = scmp.eq.s32.totalorder %s37, 1
      %p508 = por %p506, %p507
      %p509 = scmp.ne.s32.totalorder %s498, %s499
      %p510 = scmp.eq.s32.totalorder %s37, 0
      %p511 = por %p509, %p510
      %p512 = scmp.ne.s32.totalorder %s498, %s499
      %p513 = scmp.eq.s32.totalorder %s38, 1
      %p514 = por %p512, %p513
      %p516 = scmp.ne.s32.totalorder %s499, %s515
      %p517 = scmp.eq.s32.totalorder %s38, 0
      %p518 = por %p516, %p517
      %s520 = sadd.s32 %s519, 1
      %p523 = scmp.eq.s32.totalorder %s32, 1
      %p524 = scmp.ne.s32.totalorder %s519, %s521
      %p525 = scmp.eq.s32.totalorder %s32, 0
      %p526 = por %p524, %p525
      %p527 = scmp.ne.s32.totalorder %s519, %s521
      %p528 = scmp.eq.s32.totalorder %s37, 1
      %p529 = por %p527, %p528
      %p530 = scmp.ne.s32.totalorder %s521, %s522
      %p531 = scmp.eq.s32.totalorder %s37, 0
      %p532 = por %p530, %p531
      %p533 = scmp.ne.s32.totalorder %s521, %s522
      %p534 = scmp.eq.s32.totalorder %s38, 1
      %p535 = por %p533, %p534
      %p537 = scmp.ne.s32.totalorder %s522, %s536
      %p538 = scmp.eq.s32.totalorder %s38, 0
      %p539 = por %p537, %p538
      %s541 = sadd.s32 %s540, 1
      %p544 = scmp.eq.s32.totalorder %s32, 1
      %p545 = scmp.ne.s32.totalorder %s540, %s542
      %p546 = scmp.eq.s32.totalorder %s32, 0
      %p547 = por %p545, %p546
      %p548 = scmp.ne.s32.totalorder %s540, %s542
      %p549 = scmp.eq.s32.totalorder %s37, 1
      %p550 = por %p548, %p549
      %p551 = scmp.ne.s32.totalorder %s542, %s543
      %p552 = scmp.eq.s32.totalorder %s37, 0
      %p553 = por %p551, %p552
      %p554 = scmp.ne.s32.totalorder %s542, %s543
      %p555 = scmp.eq.s32.totalorder %s38, 1
      %p556 = por %p554, %p555
      %p558 = scmp.ne.s32.totalorder %s543, %s557
      %p559 = scmp.eq.s32.totalorder %s38, 0
      %p560 = por %p558, %p559
      %s562 = sadd.s32 %s561, 1
      %p565 = scmp.eq.s32.totalorder %s32, 1
      %p566 = scmp.ne.s32.totalorder %s561, %s563
      %p567 = scmp.eq.s32.totalorder %s32, 0
      %p568 = por %p566, %p567
      %p569 = scmp.ne.s32.totalorder %s561, %s563
      %p570 = scmp.eq.s32.totalorder %s37, 1
      %p571 = por %p569, %p570
      %p572 = scmp.ne.s32.totalorder %s563, %s564
      %p573 = scmp.eq.s32.totalorder %s37, 0
      %p574 = por %p572, %p573
      %p575 = scmp.ne.s32.totalorder %s563, %s564
      %p576 = scmp.eq.s32.totalorder %s38, 1
      %p577 = por %p575, %p576
      %p579 = scmp.ne.s32.totalorder %s564, %s578
      %p580 = scmp.eq.s32.totalorder %s38, 0
      %p581 = por %p579, %p580
      %s583 = sadd.s32 %s582, 1
      %p586 = scmp.eq.s32.totalorder %s32, 1
      %p587 = scmp.ne.s32.totalorder %s582, %s584
      %p588 = scmp.eq.s32.totalorder %s32, 0
      %p589 = por %p587, %p588
      %p590 = scmp.ne.s32.totalorder %s582, %s584
      %p591 = scmp.eq.s32.totalorder %s37, 1
      %p592 = por %p590, %p591
      %p593 = scmp.ne.s32.totalorder %s584, %s585
      %p594 = scmp.eq.s32.totalorder %s37, 0
      %p595 = por %p593, %p594
      %p596 = scmp.ne.s32.totalorder %s584, %s585
      %p597 = scmp.eq.s32.totalorder %s38, 1
      %p598 = por %p596, %p597
      %p600 = scmp.ne.s32.totalorder %s585, %s599
      %p601 = scmp.eq.s32.totalorder %s38, 0
      %p602 = por %p600, %p601
      %s604 = sadd.s32 %s603, 1
      %p607 = scmp.eq.s32.totalorder %s32, 1
      %p608 = scmp.ne.s32.totalorder %s603, %s605
      %p609 = scmp.eq.s32.totalorder %s32, 0
      %p610 = por %p608, %p609
      %p611 = scmp.ne.s32.totalorder %s603, %s605
      %p612 = scmp.eq.s32.totalorder %s37, 1
      %p613 = por %p611, %p612
      %p614 = scmp.ne.s32.totalorder %s605, %s606
      %p615 = scmp.eq.s32.totalorder %s37, 0
      %p616 = por %p614, %p615
      %p617 = scmp.ne.s32.totalorder %s605, %s606
      %p618 = scmp.eq.s32.totalorder %s38, 1
      %p619 = por %p617, %p618
      %p621 = scmp.ne.s32.totalorder %s606, %s620
      %p622 = scmp.eq.s32.totalorder %s38, 0
      %p623 = por %p621, %p622
      %s625 = sadd.s32 %s624, 1
      %p628 = scmp.eq.s32.totalorder %s32, 1
      %p629 = scmp.ne.s32.totalorder %s624, %s626
      %p630 = scmp.eq.s32.totalorder %s32, 0
      %p631 = por %p629, %p630
      %p632 = scmp.ne.s32.totalorder %s624, %s626
      %p633 = scmp.eq.s32.totalorder %s37, 1
      %p634 = por %p632, %p633
      %p635 = scmp.ne.s32.totalorder %s626, %s627
      %p636 = scmp.eq.s32.totalorder %s37, 0
      %p637 = por %p635, %p636
      %p638 = scmp.ne.s32.totalorder %s626, %s627
      %p639 = scmp.eq.s32.totalorder %s38, 1
      %p640 = por %p638, %p639
      %p642 = scmp.ne.s32.totalorder %s627, %s641
      %p643 = scmp.eq.s32.totalorder %s38, 0
      %p644 = por %p642, %p643
      %p645 = scmp.le.s32.totalorder 1, %s32
      %p646 = scmp.lt.s32.totalorder %s32, 3
      %p647 = pnand %p645, %p646
      %p648 = pneg %p647
      // Predicated region
      $region9: #{koelectra_forward.1} parent=5 // pred_check
        _
      $region10: #{koelectra_forward.1} parent=5 // pred_check_branch
        %650 = sbr.rel (%p647) target = $region12
      $region11: #{koelectra_forward.1} parent=5 // pred_region
        %s651 = ssub.s32 %s32, 1
        // Predicated region
        $region13: #{koelectra_forward.1} parent=11 // pred_check
          %p652 = pneg %p53
        $region14: #{koelectra_forward.1} parent=11 // pred_check_branch
          %654 = sbr.rel (%p652) target = $region16
        $region15: #{koelectra_forward.1} parent=11 // pred_region
          _
        $region16: #{koelectra_forward.1} parent=11 // pred_fallthru
          _
        // Predicated region
        $region17: #{koelectra_forward.1} parent=11 // pred_check
          %p655 = pneg %p74
        $region18: #{koelectra_forward.1} parent=11 // pred_check_branch
          %657 = sbr.rel (%p655) target = $region20
        $region19: #{koelectra_forward.1} parent=11 // pred_region
          _
        $region20: #{koelectra_forward.1} parent=11 // pred_fallthru
          _
        // Predicated region
        $region21: #{koelectra_forward.1} parent=11 // pred_check
          %p658 = pneg %p95
        $region22: #{koelectra_forward.1} parent=11 // pred_check_branch
          %660 = sbr.rel (%p658) target = $region24
        $region23: #{koelectra_forward.1} parent=11 // pred_region
          _
        $region24: #{koelectra_forward.1} parent=11 // pred_fallthru
          _
        // Predicated region
        $region25: #{koelectra_forward.1} parent=11 // pred_check
          %p661 = pneg %p532
        $region26: #{koelectra_forward.1} parent=11 // pred_check_branch
          %663 = sbr.rel (%p661) target = $region28
        $region27: #{koelectra_forward.1} parent=11 // pred_region
          _
        $region28: #{koelectra_forward.1} parent=11 // pred_fallthru
          _
        // Predicated region
        $region29: #{koelectra_forward.1} parent=11 // pred_check
          %p664 = pneg %p553
        $region30: #{koelectra_forward.1} parent=11 // pred_check_branch
          %666 = sbr.rel (%p664) target = $region32
        $region31: #{koelectra_forward.1} parent=11 // pred_region
          _
        $region32: #{koelectra_forward.1} parent=11 // pred_fallthru
          _
        // Predicated region
        $region33: #{koelectra_forward.1} parent=11 // pred_check
          %p667 = pneg %p574
        $region34: #{koelectra_forward.1} parent=11 // pred_check_branch
          %669 = sbr.rel (%p667) target = $region36
        $region35: #{koelectra_forward.1} parent=11 // pred_region
          _
        $region36: #{koelectra_forward.1} parent=11 // pred_fallthru
          _
        // Predicated region
        $region37: #{koelectra_forward.1} parent=11 // pred_check
          %p670 = pneg %p595
        $region38: #{koelectra_forward.1} parent=11 // pred_check_branch
          %672 = sbr.rel (%p670) target = $region40
        $region39: #{koelectra_forward.1} parent=11 // pred_region
          _
        $region40: #{koelectra_forward.1} parent=11 // pred_fallthru
          _
      $region12: #{koelectra_forward.1} parent=5 // pred_fallthru
        _
      %p673 = scmp.lt.s32.totalorder %s32, 2
      // Predicated region
      $region41: #{koelectra_forward.1} parent=5 // pred_check
        %p674 = pneg %p673
      $region42: #{koelectra_forward.1} parent=5 // pred_check_branch
        %676 = sbr.rel (%p674) target = $region44
      $region43: #{koelectra_forward.1} parent=5 // pred_region
        // Predicated region
        $region45: #{koelectra_forward.1} parent=43 // pred_check
          %p677 = pneg %p115
        $region46: #{koelectra_forward.1} parent=43 // pred_check_branch
          %679 = sbr.rel (%p677) target = $region48
        $region47: #{koelectra_forward.1} parent=43 // pred_region
          %p680 = scmp.lt.s32.totalorder %s32, 1
          %s681 = scalar_select %p680, %s32, 1
          %s682 = smul.addr %s681, 4
          %s683 = smul.addr %s682, 8
          %s684 = scalar_lea.vmem %s3, %s683
        $region48: #{koelectra_forward.1} parent=43 // pred_fallthru
          _
        // Predicated region
        $region49: #{koelectra_forward.1} parent=43 // pred_check
          %p685 = pneg %p141
        $region50: #{koelectra_forward.1} parent=43 // pred_check_branch
          %687 = sbr.rel (%p685) target = $region52
        $region51: #{koelectra_forward.1} parent=43 // pred_region
          %p688 = scmp.lt.s32.totalorder %s32, 1
          %s689 = scalar_select %p688, %s32, 1
          %s690 = scalar_lea.vmem %s4, %s689
        $region52: #{koelectra_forward.1} parent=43 // pred_fallthru
          _
        // Predicated region
        $region53: #{koelectra_forward.1} parent=43 // pred_check
          %p691 = pneg %p167
        $region54: #{koelectra_forward.1} parent=43 // pred_check_branch
          %693 = sbr.rel (%p691) target = $region56
        $region55: #{koelectra_forward.1} parent=43 // pred_region
          %p694 = scmp.lt.s32.totalorder %s32, 1
          %s695 = scalar_select %p694, %s32, 1
          %s696 = smul.addr %s695, 4
          %s697 = smul.addr %s696, 8
          %s698 = scalar_lea.vmem %s5, %s697
        $region56: #{koelectra_forward.1} parent=43 // pred_fallthru
          _
        // Predicated region
        $region57: #{koelectra_forward.1} parent=43 // pred_check
          %p699 = pneg %p193
        $region58: #{koelectra_forward.1} parent=43 // pred_check_branch
          %701 = sbr.rel (%p699) target = $region60
        $region59: #{koelectra_forward.1} parent=43 // pred_region
          %p702 = scmp.lt.s32.totalorder %s32, 1
          %s703 = scalar_select %p702, %s32, 1
          %s704 = scalar_lea.vmem %s6, %s703
        $region60: #{koelectra_forward.1} parent=43 // pred_fallthru
          _
        // Predicated region
        $region61: #{koelectra_forward.1} parent=43 // pred_check
          %p705 = pneg %p219
        $region62: #{koelectra_forward.1} parent=43 // pred_check_branch
          %707 = sbr.rel (%p705) target = $region64
        $region63: #{koelectra_forward.1} parent=43 // pred_region
          %p708 = scmp.lt.s32.totalorder %s32, 1
          %s709 = scalar_select %p708, %s32, 1
          %s710 = smul.addr %s709, 4
          %s711 = smul.addr %s710, 8
          %s712 = scalar_lea.vmem %s7, %s711
        $region64: #{koelectra_forward.1} parent=43 // pred_fallthru
          _
        // Predicated region
        $region65: #{koelectra_forward.1} parent=43 // pred_check
          %p713 = pneg %p245
        $region66: #{koelectra_forward.1} parent=43 // pred_check_branch
          %715 = sbr.rel (%p713) target = $region68
        $region67: #{koelectra_forward.1} parent=43 // pred_region
          %p716 = scmp.lt.s32.totalorder %s32, 1
          %s717 = scalar_select %p716, %s32, 1
          %s718 = scalar_lea.vmem %s8, %s717
        $region68: #{koelectra_forward.1} parent=43 // pred_fallthru
          _
        // Predicated region
        $region69: #{koelectra_forward.1} parent=43 // pred_check
          %p719 = pneg %p271
        $region70: #{koelectra_forward.1} parent=43 // pred_check_branch
          %721 = sbr.rel (%p719) target = $region72
        $region71: #{koelectra_forward.1} parent=43 // pred_region
          %p722 = scmp.lt.s32.totalorder %s32, 1
          %s723 = scalar_select %p722, %s32, 1
          %s724 = smul.addr %s723, 4
          %s725 = smul.addr %s724, 8
          %s726 = scalar_lea.vmem %s9, %s725
        $region72: #{koelectra_forward.1} parent=43 // pred_fallthru
          _
        // Predicated region
        $region73: #{koelectra_forward.1} parent=43 // pred_check
          %p727 = pneg %p297
        $region74: #{koelectra_forward.1} parent=43 // pred_check_branch
          %729 = sbr.rel (%p727) target = $region76
        $region75: #{koelectra_forward.1} parent=43 // pred_region
          %p730 = scmp.lt.s32.totalorder %s32, 1
          %s731 = scalar_select %p730, %s32, 1
          %s732 = scalar_lea.vmem %s10, %s731
        $region76: #{koelectra_forward.1} parent=43 // pred_fallthru
          _
        // Predicated region
        $region77: #{koelectra_forward.1} parent=43 // pred_check
          %p733 = pneg %p323
        $region78: #{koelectra_forward.1} parent=43 // pred_check_branch
          %735 = sbr.rel (%p733) target = $region80
        $region79: #{koelectra_forward.1} parent=43 // pred_region
          %p736 = scmp.lt.s32.totalorder %s32, 1
          %s737 = scalar_select %p736, %s32, 1
          %s738 = scalar_lea.vmem %s11, %s737
        $region80: #{koelectra_forward.1} parent=43 // pred_fallthru
          _
        // Predicated region
        $region81: #{koelectra_forward.1} parent=43 // pred_check
          %p739 = pneg %p349
        $region82: #{koelectra_forward.1} parent=43 // pred_check_branch
          %741 = sbr.rel (%p739) target = $region84
        $region83: #{koelectra_forward.1} parent=43 // pred_region
          %p742 = scmp.lt.s32.totalorder %s32, 1
          %s743 = scalar_select %p742, %s32, 1
          %s744 = scalar_lea.vmem %s12, %s743
        $region84: #{koelectra_forward.1} parent=43 // pred_fallthru
          _
        // Predicated region
        $region85: #{koelectra_forward.1} parent=43 // pred_check
          %p745 = pneg %p375
        $region86: #{koelectra_forward.1} parent=43 // pred_check_branch
          %747 = sbr.rel (%p745) target = $region88
        $region87: #{koelectra_forward.1} parent=43 // pred_region
          %p748 = scmp.lt.s32.totalorder %s32, 1
          %s749 = scalar_select %p748, %s32, 1
          %s750 = smul.addr %s749, 4
          %s751 = smul.addr %s750, 8
          %s752 = scalar_lea.vmem %s13, %s751
        $region88: #{koelectra_forward.1} parent=43 // pred_fallthru
          _
        // Predicated region
        $region89: #{koelectra_forward.1} parent=43 // pred_check
          %p753 = pneg %p401
        $region90: #{koelectra_forward.1} parent=43 // pred_check_branch
          %755 = sbr.rel (%p753) target = $region92
        $region91: #{koelectra_forward.1} parent=43 // pred_region
          %p756 = scmp.lt.s32.totalorder %s32, 1
          %s757 = scalar_select %p756, %s32, 1
          %s758 = scalar_lea.vmem %s14, %s757
        $region92: #{koelectra_forward.1} parent=43 // pred_fallthru
          _
        // Predicated region
        $region93: #{koelectra_forward.1} parent=43 // pred_check
          %p759 = pneg %p427
        $region94: #{koelectra_forward.1} parent=43 // pred_check_branch
          %761 = sbr.rel (%p759) target = $region96
        $region95: #{koelectra_forward.1} parent=43 // pred_region
          %p762 = scmp.lt.s32.totalorder %s32, 1
          %s763 = scalar_select %p762, %s32, 1
          %s764 = smul.addr %s763, 8
          %s765 = smul.addr %s764, 8
          %s766 = scalar_lea.vmem %s15, %s765
        $region96: #{koelectra_forward.1} parent=43 // pred_fallthru
          _
        // Predicated region
        $region97: #{koelectra_forward.1} parent=43 // pred_check
          %p767 = pneg %p453
        $region98: #{koelectra_forward.1} parent=43 // pred_check_branch
          %769 = sbr.rel (%p767) target = $region100
        $region99: #{koelectra_forward.1} parent=43 // pred_region
          %p770 = scmp.lt.s32.totalorder %s32, 1
          %s771 = scalar_select %p770, %s32, 1
          %s772 = scalar_lea.vmem %s16, %s771
        $region100: #{koelectra_forward.1} parent=43 // pred_fallthru
          _
        // Predicated region
        $region101: #{koelectra_forward.1} parent=43 // pred_check
          %p773 = pneg %p479
        $region102: #{koelectra_forward.1} parent=43 // pred_check_branch
          %775 = sbr.rel (%p773) target = $region104
        $region103: #{koelectra_forward.1} parent=43 // pred_region
          %p776 = scmp.lt.s32.totalorder %s32, 1
          %s777 = scalar_select %p776, %s32, 1
          %s778 = scalar_lea.vmem %s17, %s777
        $region104: #{koelectra_forward.1} parent=43 // pred_fallthru
          _
        // Predicated region
        $region105: #{koelectra_forward.1} parent=43 // pred_check
          %p779 = pneg %p505
        $region106: #{koelectra_forward.1} parent=43 // pred_check_branch
          %781 = sbr.rel (%p779) target = $region108
        $region107: #{koelectra_forward.1} parent=43 // pred_region
          %p782 = scmp.lt.s32.totalorder %s32, 1
          %s783 = scalar_select %p782, %s32, 1
          %s784 = scalar_lea.vmem %s18, %s783
        $region108: #{koelectra_forward.1} parent=43 // pred_fallthru
          _
      $region44: #{koelectra_forward.1} parent=5 // pred_fallthru
        _
      %p785 = scmp.le.s32.totalorder 1, %s32
      %p786 = scmp.lt.s32.totalorder %s32, 3
      %p787 = pnand %p785, %p786
      %p788 = pneg %p787
      // Predicated region
      $region109: #{koelectra_forward.1} parent=5 // pred_check
        _
      $region110: #{koelectra_forward.1} parent=5 // pred_check_branch
        %790 = sbr.rel (%p787) target = $region112
      $region111: #{koelectra_forward.1} parent=5 // pred_region
        %s791 = ssub.s32 %s32, 1
        %p792 = pneg %p53
        %p793 = pneg %p50
        %p794 = pneg %p74
        %p795 = pneg %p71
        %p796 = pneg %p95
        %p797 = pneg %p92
        %p798 = scmp.lt.s32.totalorder %s37, 1
        %s799 = scalar_select %p798, %s37, 1
        %s800 = smul.addr %s799, 4
        %s801 = smul.addr %s800, 8
        %s802 = scalar_lea.vmem %s3, %s801
        %p803 = pneg %p121
        %p804 = pneg %p118
        %p805 = scmp.lt.s32.totalorder %s37, 1
        %s806 = scalar_select %p805, %s37, 1
        %s807 = scalar_lea.vmem %s4, %s806
        %p808 = pneg %p147
        %p809 = pneg %p144
        %p810 = scmp.lt.s32.totalorder %s37, 1
        %s811 = scalar_select %p810, %s37, 1
        %s812 = smul.addr %s811, 4
        %s813 = smul.addr %s812, 8
        %s814 = scalar_lea.vmem %s5, %s813
        %p815 = pneg %p173
        %p816 = pneg %p170
        %p817 = scmp.lt.s32.totalorder %s37, 1
        %s818 = scalar_select %p817, %s37, 1
        %s819 = scalar_lea.vmem %s6, %s818
        %p820 = pneg %p199
        %p821 = pneg %p196
        %p822 = scmp.lt.s32.totalorder %s37, 1
        %s823 = scalar_select %p822, %s37, 1
        %s824 = smul.addr %s823, 4
        %s825 = smul.addr %s824, 8
        %s826 = scalar_lea.vmem %s7, %s825
        %p827 = pneg %p225
        %p828 = pneg %p222
        %p829 = scmp.lt.s32.totalorder %s37, 1
        %s830 = scalar_select %p829, %s37, 1
        %s831 = scalar_lea.vmem %s8, %s830
        %p832 = pneg %p251
        %p833 = pneg %p248
        %p834 = scmp.lt.s32.totalorder %s37, 1
        %s835 = scalar_select %p834, %s37, 1
        %s836 = smul.addr %s835, 4
        %s837 = smul.addr %s836, 8
        %s838 = scalar_lea.vmem %s9, %s837
        %p839 = pneg %p277
        %p840 = pneg %p274
        %p841 = scmp.lt.s32.totalorder %s37, 1
        %s842 = scalar_select %p841, %s37, 1
        %s843 = scalar_lea.vmem %s10, %s842
        %p844 = pneg %p303
        %p845 = pneg %p300
        %p846 = scmp.lt.s32.totalorder %s37, 1
        %s847 = scalar_select %p846, %s37, 1
        %s848 = scalar_lea.vmem %s11, %s847
        %p849 = pneg %p329
        %p850 = pneg %p326
        %p851 = scmp.lt.s32.totalorder %s37, 1
        %s852 = scalar_select %p851, %s37, 1
        %s853 = scalar_lea.vmem %s12, %s852
        %p854 = pneg %p355
        %p855 = pneg %p352
        %p856 = scmp.lt.s32.totalorder %s37, 1
        %s857 = scalar_select %p856, %s37, 1
        %s858 = smul.addr %s857, 4
        %s859 = smul.addr %s858, 8
        %s860 = scalar_lea.vmem %s13, %s859
        %p861 = pneg %p381
        %p862 = pneg %p378
        %p863 = scmp.lt.s32.totalorder %s37, 1
        %s864 = scalar_select %p863, %s37, 1
        %s865 = scalar_lea.vmem %s14, %s864
        %p866 = pneg %p407
        %p867 = pneg %p404
        %p868 = scmp.lt.s32.totalorder %s37, 1
        %s869 = scalar_select %p868, %s37, 1
        %s870 = smul.addr %s869, 8
        %s871 = smul.addr %s870, 8
        %s872 = scalar_lea.vmem %s15, %s871
        %p873 = pneg %p433
        %p874 = pneg %p430
        %p875 = scmp.lt.s32.totalorder %s37, 1
        %s876 = scalar_select %p875, %s37, 1
        %s877 = scalar_lea.vmem %s16, %s876
        %p878 = pneg %p459
        %p879 = pneg %p456
        %p880 = scmp.lt.s32.totalorder %s37, 1
        %s881 = scalar_select %p880, %s37, 1
        %s882 = scalar_lea.vmem %s17, %s881
        %p883 = pneg %p485
        %p884 = pneg %p482
        %p885 = scmp.lt.s32.totalorder %s37, 1
        %s886 = scalar_select %p885, %s37, 1
        %s887 = scalar_lea.vmem %s18, %s886
        %p888 = pneg %p511
        %p889 = pneg %p508
        %p890 = pneg %p532
        %p891 = pneg %p529
        %p892 = pneg %p553
        %p893 = pneg %p550
        %p894 = pneg %p574
        %p895 = pneg %p571
        %p896 = pneg %p595
        %p897 = pneg %p592
        %p898 = pneg %p616
        %p899 = pneg %p613
        %p900 = pneg %p637
        %p901 = pneg %p634
        %p902 = scmp.lt.s32.totalorder %s37, 1
        %s903 = scalar_select %p902, %s37, 1
        %s904 = smul.addr %s903, 4
        %s905 = smul.addr %s904, 8
        %s906 = scalar_lea.vmem %s3, %s905
        %p907 = scmp.lt.s32.totalorder %s37, 1
        %s908 = scalar_select %p907, %s37, 1
        %s909 = scalar_lea.vmem %s4, %s908
        %p910 = scmp.lt.s32.totalorder %s37, 1
        %s911 = scalar_select %p910, %s37, 1
        %s912 = smul.addr %s911, 4
        %s913 = smul.addr %s912, 8
        %s914 = scalar_lea.vmem %s5, %s913
        %p915 = scmp.lt.s32.totalorder %s37, 1
        %s916 = scalar_select %p915, %s37, 1
        %s917 = scalar_lea.vmem %s6, %s916
        %p918 = scmp.lt.s32.totalorder %s37, 1
        %s919 = scalar_select %p918, %s37, 1
        %s920 = smul.addr %s919, 4
        %s921 = smul.addr %s920, 8
        %s922 = scalar_lea.vmem %s7, %s921
        %p923 = scmp.lt.s32.totalorder %s37, 1
        %s924 = scalar_select %p923, %s37, 1
        %s925 = scalar_lea.vmem %s8, %s924
        %p926 = scmp.lt.s32.totalorder %s37, 1
        %s927 = scalar_select %p926, %s37, 1
        %s928 = smul.addr %s927, 4
        %s929 = smul.addr %s928, 8
        %s930 = scalar_lea.vmem %s9, %s929
        %p931 = scmp.lt.s32.totalorder %s37, 1
        %s932 = scalar_select %p931, %s37, 1
        %s933 = scalar_lea.vmem %s10, %s932
        %p934 = scmp.lt.s32.totalorder %s37, 1
        %s935 = scalar_select %p934, %s37, 1
        %s936 = scalar_lea.vmem %s11, %s935
        %p937 = scmp.lt.s32.totalorder %s37, 1
        %s938 = scalar_select %p937, %s37, 1
        %s939 = scalar_lea.vmem %s12, %s938
        %p940 = scmp.lt.s32.totalorder %s37, 1
        %s941 = scalar_select %p940, %s37, 1
        %s942 = smul.addr %s941, 4
        %s943 = smul.addr %s942, 8
        %s944 = scalar_lea.vmem %s13, %s943
        %p945 = scmp.lt.s32.totalorder %s37, 1
        %s946 = scalar_select %p945, %s37, 1
        %s947 = scalar_lea.vmem %s14, %s946
        %p948 = scmp.lt.s32.totalorder %s37, 1
        %s949 = scalar_select %p948, %s37, 1
        %s950 = smul.addr %s949, 8
        %s951 = smul.addr %s950, 8
        %s952 = scalar_lea.vmem %s15, %s951
        %p953 = scmp.lt.s32.totalorder %s37, 1
        %s954 = scalar_select %p953, %s37, 1
        %s955 = scalar_lea.vmem %s16, %s954
        %p956 = scmp.lt.s32.totalorder %s37, 1
        %s957 = scalar_select %p956, %s37, 1
        %s958 = scalar_lea.vmem %s17, %s957
        %p959 = scmp.lt.s32.totalorder %s37, 1
        %s960 = scalar_select %p959, %s37, 1
        %s961 = scalar_lea.vmem %s18, %s960
        %p962 = scmp.eq.s32.totalorder %s37, 0
        // Predicated region
        $region113: #{koelectra_forward.1} parent=111 // pred_check
          %p963 = pneg %p962
        $region114: #{koelectra_forward.1} parent=111 // pred_check_branch
          %965 = sbr.rel (%p963) target = $region116
        $region115: #{koelectra_forward.1} parent=111 // pred_region
          %v966 = vld [vmem:[%s0] sm:$0xff]
          %v967 = vld [vmem:[%s0 + $0x8] sm:$0xff]
          %v968 = vld [vmem:[%s1] sm:$0x1]
          %v969 = vld [vmem:[%s2] sm:$0x1]
          %vm970 = vcmask 261120
          %v971 = vsel %vm970, %v966, 0.0
          %972 = vadd.xlane.f32.xlu0 %v971
          %v973 = vpop.xlane.xlu0 %972
          %v974 = vsel %vm970, %v967, 0.0
          %975 = vadd.xlane.f32.xlu0 %v974
          %v976 = vpop.xlane.xlu0 %975
          %v977 = vrcp.pop 32.0
          %v978 = vmul.f32 %v973, %v977
          %v979 = vmul.f32 %v976, %v977
          %v980 = vsub.f32 %v966, %v978
          %v981 = vsub.f32 %v967, %v979
          %v982 = vmul.f32 %v980, %v980
          %v983 = vmul.f32 %v981, %v981
          %v984 = vsel %vm970, %v982, 0.0
          %985 = vadd.xlane.f32.xlu0 %v984
          %v986 = vpop.xlane.xlu0 %985
          %v987 = vsel %vm970, %v983, 0.0
          %988 = vadd.xlane.f32.xlu0 %v987
          %v989 = vpop.xlane.xlu0 %988
          %v990 = vmul.f32 %v986, %v977
          %v991 = vmul.f32 %v989, %v977
          %v992 = vadd.f32 %v990, 1e-12
          %v993 = vadd.f32 %v991, 1e-12
          %v994 = vrsqrt.pop %v992
          %v995 = vrsqrt.pop %v993
          %v996 = vmul.f32 %v980, %v994
          %v997 = vmul.f32 %v981, %v995
          %v999 = vlaneseq
          %v1000 = vshrl.u32 %v999, 7
          %v1001 = vsub.s32 0, %v1000
          %v1002 = vrot.slane %v968, %v1001
          %v1004 = vmul.f32 %v996, %v1002
          %v1005 = vmul.f32 %v997, %v1002
          %v1007 = vlaneseq
          %v1008 = vshrl.u32 %v1007, 7
          %v1009 = vsub.s32 0, %v1008
          %v1010 = vrot.slane %v969, %v1009
          %v1012 = vadd.f32 %v1004, %v1010
          %v1013 = vadd.f32 %v1005, %v1010
          %1014 = vst.msk [vmem:[#allocation2] sm:$0xff] %vm970, %v1012
          %1015 = vst.msk [vmem:[#allocation2 + $0x8] sm:$0xff] %vm970, %v1013
        $region116: #{koelectra_forward.1} parent=111 // pred_fallthru
          _
        %v1016 = vld [vmem:[#allocation2] sm:$0xff]
        %v1017 = vld [vmem:[#allocation2 + $0x8] sm:$0xff]
        %v1018 = vld [vmem:[%s906] sm:$0xff]
        %v1019 = vld [vmem:[%s906 + $0x8] sm:$0xff]
        %v1020 = vld [vmem:[%s906 + $0x10] sm:$0xff]
        %v1021 = vld [vmem:[%s906 + $0x18] sm:$0xff]
        %v1022 = vld [vmem:[%s909] sm:$0x1]
        %v1024 = vlaneseq
        %v1025 = vshrl.u32 %v1024, 7
        %v1026 = vsub.s32 0, %v1025
        %v1027 = vrot.slane %v1022, %v1026
        %vm1029 = vcmask 261120
        %v1031 = vsel %vm1029, %v1016, 0
        %v1034 = vsel %vm1029, %v1017, 0
        %1036 = vmatprep.subr.mxu0 0.0
        %1037 = vmatpush1.msra.mxu0 0.0
        %1038 = vmatprep.subr.mxu0 0.0
        %1039 = vmatpush1.msra.mxu0 0.0
        %1040 = vmatprep.subr.mxu0 0.0
        %1041 = vmatpush1.msra.mxu0 0.0
        %1042 = vmatprep.subr.mxu0 0.0
        %1043 = vmatpush1.msra.mxu0 0.0
        %1044 = vmatprep.subr.mxu0 0.0
        %1045 = vmatpush1.msra.mxu0 0.0
        %1046 = vmatprep.subr.mxu0 0.0
        %1047 = vmatpush1.msra.mxu0 0.0
        %1048 = vmatprep.subr.mxu0 0.0
        %1049 = vmatpush1.msra.mxu0 0.0
        %1050 = vmatprep.subr.mxu0 0.0
        %1051 = vmatpush1.msra.mxu0 0.0
        %1052 = vmatprep.subr.mxu0 0.0
        %1053 = vmatpush1.msra.mxu0 0.0
        %1054 = vmatprep.subr.mxu0 0.0
        %1055 = vmatpush1.msra.mxu0 0.0
        %1056 = vmatprep.subr.mxu0 0.0
        %1057 = vmatpush1.msra.mxu0 0.0
        %1058 = vmatprep.subr.mxu0 0.0
        %1059 = vmatpush1.msra.mxu0 0.0
        %1060 = vmatprep.subr.mxu0 0.0
        %1061 = vmatpush1.msra.mxu0 %v1021
        %1062 = vmatprep.subr.mxu0 0.0
        %1063 = vmatpush1.msra.mxu0 %v1020
        %1064 = vmatprep.subr.mxu0 0.0
        %1065 = vmatpush1.msra.mxu0 %v1019
        %1066 = vmatprep.subr.mxu0 0.0
        %1067 = vmatpush1.msra.mxu0 %v1018
        %1068 = vmatprep.subr.mxu0 0.0
        %1069 = vmatpush2.msra.mxu0 0.0
        %1070 = vmatprep.subr.mxu0 0.0
        %1071 = vmatpush2.msra.mxu0 0.0
        %1072 = vmatprep.subr.mxu0 0.0
        %1073 = vmatpush2.msra.mxu0 0.0
        %1074 = vmatprep.subr.mxu0 0.0
        %1075 = vmatpush2.msra.mxu0 0.0
        %1076 = vmatprep.subr.mxu0 0.0
        %1077 = vmatpush2.msra.mxu0 0.0
        %1078 = vmatprep.subr.mxu0 0.0
        %1079 = vmatpush2.msra.mxu0 0.0
        %1080 = vmatprep.subr.mxu0 0.0
        %1081 = vmatpush2.msra.mxu0 0.0
        %1082 = vmatprep.subr.mxu0 0.0
        %1083 = vmatpush2.msra.mxu0 0.0
        %1084 = vmatprep.subr.mxu0 0.0
        %1085 = vmatpush2.msra.mxu0 0.0
        %1086 = vmatprep.subr.mxu0 0.0
        %1087 = vmatpush2.msra.mxu0 0.0
        %1088 = vmatprep.subr.mxu0 0.0
        %1089 = vmatpush2.msra.mxu0 0.0
        %1090 = vmatprep.subr.mxu0 0.0
        %1091 = vmatpush2.msra.mxu0 0.0
        %1092 = vmatprep.subr.mxu0 0.0
        %1093 = vmatpush2.msra.mxu0 0.0
        %1094 = vmatprep.subr.mxu0 0.0
        %1095 = vmatpush2.msra.mxu0 0.0
        %1096 = vmatprep.subr.mxu0 0.0
        %1097 = vmatpush2.msra.mxu0 0.0
        %1098 = vmatprep.subr.mxu0 0.0
        %1099 = vmatpush2.msra.mxu0 0.0
        %1100 = vmatprep.mubr.f32.mxu0 0.0
        %1101 = vmatmul.mubr.f32.gmra.mxu0 %v1031
        %v1102 = vpop.f32.mrf.mxu0
        %v1103 = vadd.f32 %v1027, %v1102
        %v1104 = vpop.f32.mrf.mxu0
        %1105 = vmatprep.mubr.f32.mxu0 0.0
        %1106 = vmatmul.mubr.f32.gmra.mxu0 %v1034
        %v1107 = vpop.f32.mrf.mxu0
        %v1108 = vadd.f32 %v1027, %v1107
        %v1109 = vpop.f32.mrf.mxu0
        %1110 = vdwg.mxu0
        %v1111 = vld [vmem:[%s914] sm:$0xff]
        %v1112 = vld [vmem:[%s914 + $0x8] sm:$0xff]
        %v1113 = vld [vmem:[%s914 + $0x10] sm:$0xff]
        %v1114 = vld [vmem:[%s914 + $0x18] sm:$0xff]
        %v1115 = vld [vmem:[%s917] sm:$0x1]
        %v1117 = vlaneseq
        %v1118 = vshrl.u32 %v1117, 7
        %v1119 = vsub.s32 0, %v1118
        %v1120 = vrot.slane %v1115, %v1119
        %1122 = vmatprep.subr.mxu0 0.0
        %1123 = vmatpush1.msra.mxu0 0.0
        %1124 = vmatprep.subr.mxu0 0.0
        %1125 = vmatpush1.msra.mxu0 0.0
        %1126 = vmatprep.subr.mxu0 0.0
        %1127 = vmatpush1.msra.mxu0 0.0
        %1128 = vmatprep.subr.mxu0 0.0
        %1129 = vmatpush1.msra.mxu0 0.0
        %1130 = vmatprep.subr.mxu0 0.0
        %1131 = vmatpush1.msra.mxu0 0.0
        %1132 = vmatprep.subr.mxu0 0.0
        %1133 = vmatpush1.msra.mxu0 0.0
        %1134 = vmatprep.subr.mxu0 0.0
        %1135 = vmatpush1.msra.mxu0 0.0
        %1136 = vmatprep.subr.mxu0 0.0
        %1137 = vmatpush1.msra.mxu0 0.0
        %1138 = vmatprep.subr.mxu0 0.0
        %1139 = vmatpush1.msra.mxu0 0.0
        %1140 = vmatprep.subr.mxu0 0.0
        %1141 = vmatpush1.msra.mxu0 0.0
        %1142 = vmatprep.subr.mxu0 0.0
        %1143 = vmatpush1.msra.mxu0 0.0
        %1144 = vmatprep.subr.mxu0 0.0
        %1145 = vmatpush1.msra.mxu0 0.0
        %1146 = vmatprep.subr.mxu0 0.0
        %1147 = vmatpush1.msra.mxu0 %v1114
        %1148 = vmatprep.subr.mxu0 0.0
        %1149 = vmatpush1.msra.mxu0 %v1113
        %1150 = vmatprep.subr.mxu0 0.0
        %1151 = vmatpush1.msra.mxu0 %v1112
        %1152 = vmatprep.subr.mxu0 0.0
        %1153 = vmatpush1.msra.mxu0 %v1111
        %1154 = vmatprep.subr.mxu0 0.0
        %1155 = vmatpush2.msra.mxu0 0.0
        %1156 = vmatprep.subr.mxu0 0.0
        %1157 = vmatpush2.msra.mxu0 0.0
        %1158 = vmatprep.subr.mxu0 0.0
        %1159 = vmatpush2.msra.mxu0 0.0
        %1160 = vmatprep.subr.mxu0 0.0
        %1161 = vmatpush2.msra.mxu0 0.0
        %1162 = vmatprep.subr.mxu0 0.0
        %1163 = vmatpush2.msra.mxu0 0.0
        %1164 = vmatprep.subr.mxu0 0.0
        %1165 = vmatpush2.msra.mxu0 0.0
        %1166 = vmatprep.subr.mxu0 0.0
        %1167 = vmatpush2.msra.mxu0 0.0
        %1168 = vmatprep.subr.mxu0 0.0
        %1169 = vmatpush2.msra.mxu0 0.0
        %1170 = vmatprep.subr.mxu0 0.0
        %1171 = vmatpush2.msra.mxu0 0.0
        %1172 = vmatprep.subr.mxu0 0.0
        %1173 = vmatpush2.msra.mxu0 0.0
        %1174 = vmatprep.subr.mxu0 0.0
        %1175 = vmatpush2.msra.mxu0 0.0
        %1176 = vmatprep.subr.mxu0 0.0
        %1177 = vmatpush2.msra.mxu0 0.0
        %1178 = vmatprep.subr.mxu0 0.0
        %1179 = vmatpush2.msra.mxu0 0.0
        %1180 = vmatprep.subr.mxu0 0.0
        %1181 = vmatpush2.msra.mxu0 0.0
        %1182 = vmatprep.subr.mxu0 0.0
        %1183 = vmatpush2.msra.mxu0 0.0
        %1184 = vmatprep.subr.mxu0 0.0
        %1185 = vmatpush2.msra.mxu0 0.0
        %1186 = vmatprep.mubr.f32.mxu0 0.0
        %1187 = vmatmul.mubr.f32.gmra.mxu0 %v1031
        %v1188 = vpop.f32.mrf.mxu0
        %v1189 = vadd.f32 %v1120, %v1188
        %v1190 = vpop.f32.mrf.mxu0
        %1191 = vmatprep.mubr.f32.mxu0 0.0
        %1192 = vmatmul.mubr.f32.gmra.mxu0 %v1034
        %v1193 = vpop.f32.mrf.mxu0
        %v1194 = vadd.f32 %v1120, %v1193
        %v1195 = vpop.f32.mrf.mxu0
        %1196 = vdwg.mxu0
        %v1197 = vld [vmem:[%s922] sm:$0xff]
        %v1198 = vld [vmem:[%s922 + $0x8] sm:$0xff]
        %v1199 = vld [vmem:[%s922 + $0x10] sm:$0xff]
        %v1200 = vld [vmem:[%s922 + $0x18] sm:$0xff]
        %v1201 = vld [vmem:[%s925] sm:$0x1]
        %v1203 = vlaneseq
        %v1204 = vshrl.u32 %v1203, 7
        %v1205 = vsub.s32 0, %v1204
        %v1206 = vrot.slane %v1201, %v1205
        %1208 = vmatprep.subr.mxu0 0.0
        %1209 = vmatpush1.msra.mxu0 0.0
        %1210 = vmatprep.subr.mxu0 0.0
        %1211 = vmatpush1.msra.mxu0 0.0
        %1212 = vmatprep.subr.mxu0 0.0
        %1213 = vmatpush1.msra.mxu0 0.0
        %1214 = vmatprep.subr.mxu0 0.0
        %1215 = vmatpush1.msra.mxu0 0.0
        %1216 = vmatprep.subr.mxu0 0.0
        %1217 = vmatpush1.msra.mxu0 0.0
        %1218 = vmatprep.subr.mxu0 0.0
        %1219 = vmatpush1.msra.mxu0 0.0
        %1220 = vmatprep.subr.mxu0 0.0
        %1221 = vmatpush1.msra.mxu0 0.0
        %1222 = vmatprep.subr.mxu0 0.0
        %1223 = vmatpush1.msra.mxu0 0.0
        %1224 = vmatprep.subr.mxu0 0.0
        %1225 = vmatpush1.msra.mxu0 0.0
        %1226 = vmatprep.subr.mxu0 0.0
        %1227 = vmatpush1.msra.mxu0 0.0
        %1228 = vmatprep.subr.mxu0 0.0
        %1229 = vmatpush1.msra.mxu0 0.0
        %1230 = vmatprep.subr.mxu0 0.0
        %1231 = vmatpush1.msra.mxu0 0.0
        %1232 = vmatprep.subr.mxu0 0.0
        %1233 = vmatpush1.msra.mxu0 %v1200
        %1234 = vmatprep.subr.mxu0 0.0
        %1235 = vmatpush1.msra.mxu0 %v1199
        %1236 = vmatprep.subr.mxu0 0.0
        %1237 = vmatpush1.msra.mxu0 %v1198
        %1238 = vmatprep.subr.mxu0 0.0
        %1239 = vmatpush1.msra.mxu0 %v1197
        %1240 = vmatprep.subr.mxu0 0.0
        %1241 = vmatpush2.msra.mxu0 0.0
        %1242 = vmatprep.subr.mxu0 0.0
        %1243 = vmatpush2.msra.mxu0 0.0
        %1244 = vmatprep.subr.mxu0 0.0
        %1245 = vmatpush2.msra.mxu0 0.0
        %1246 = vmatprep.subr.mxu0 0.0
        %1247 = vmatpush2.msra.mxu0 0.0
        %1248 = vmatprep.subr.mxu0 0.0
        %1249 = vmatpush2.msra.mxu0 0.0
        %1250 = vmatprep.subr.mxu0 0.0
        %1251 = vmatpush2.msra.mxu0 0.0
        %1252 = vmatprep.subr.mxu0 0.0
        %1253 = vmatpush2.msra.mxu0 0.0
        %1254 = vmatprep.subr.mxu0 0.0
        %1255 = vmatpush2.msra.mxu0 0.0
        %1256 = vmatprep.subr.mxu0 0.0
        %1257 = vmatpush2.msra.mxu0 0.0
        %1258 = vmatprep.subr.mxu0 0.0
        %1259 = vmatpush2.msra.mxu0 0.0
        %1260 = vmatprep.subr.mxu0 0.0
        %1261 = vmatpush2.msra.mxu0 0.0
        %1262 = vmatprep.subr.mxu0 0.0
        %1263 = vmatpush2.msra.mxu0 0.0
        %1264 = vmatprep.subr.mxu0 0.0
        %1265 = vmatpush2.msra.mxu0 0.0
        %1266 = vmatprep.subr.mxu0 0.0
        %1267 = vmatpush2.msra.mxu0 0.0
        %1268 = vmatprep.subr.mxu0 0.0
        %1269 = vmatpush2.msra.mxu0 0.0
        %1270 = vmatprep.subr.mxu0 0.0
        %1271 = vmatpush2.msra.mxu0 0.0
        %1272 = vmatprep.mubr.f32.mxu0 0.0
        %1273 = vmatmul.mubr.f32.gmra.mxu0 %v1031
        %v1274 = vpop.f32.mrf.mxu0
        %v1275 = vadd.f32 %v1206, %v1274
        %v1276 = vpop.f32.mrf.mxu0
        %1277 = vmatprep.mubr.f32.mxu0 0.0
        %1278 = vmatmul.mubr.f32.gmra.mxu0 %v1034
        %v1279 = vpop.f32.mrf.mxu0
        %v1280 = vadd.f32 %v1206, %v1279
        %v1281 = vpop.f32.mrf.mxu0
        %1282 = vdwg.mxu0
        %vm1283 = vcmask 130048
        %v1285 = vsel %vm1283, %v1103, 0
        %v1288 = vsel %vm1283, %v1189, 0
        %1290 = vmatprep.subr.mxu0 0.0
        %1291 = vmatpush1.xpose.msra.mxu0 0.0
        %1292 = vmatprep.subr.mxu0 0.0
        %1293 = vmatpush1.xpose.msra.mxu0 0.0
        %1294 = vmatprep.subr.mxu0 0.0
        %1295 = vmatpush1.xpose.msra.mxu0 0.0
        %1296 = vmatprep.subr.mxu0 0.0
        %1297 = vmatpush1.xpose.msra.mxu0 0.0
        %1298 = vmatprep.subr.mxu0 0.0
        %1299 = vmatpush1.xpose.msra.mxu0 0.0
        %1300 = vmatprep.subr.mxu0 0.0
        %1301 = vmatpush1.xpose.msra.mxu0 0.0
        %1302 = vmatprep.subr.mxu0 0.0
        %1303 = vmatpush1.xpose.msra.mxu0 0.0
        %1304 = vmatprep.subr.mxu0 0.0
        %1305 = vmatpush1.xpose.msra.mxu0 0.0
        %1306 = vmatprep.subr.mxu0 0.0
        %1307 = vmatpush1.xpose.msra.mxu0 0.0
        %1308 = vmatprep.subr.mxu0 0.0
        %1309 = vmatpush1.xpose.msra.mxu0 0.0
        %1310 = vmatprep.subr.mxu0 0.0
        %1311 = vmatpush1.xpose.msra.mxu0 0.0
        %1312 = vmatprep.subr.mxu0 0.0
        %1313 = vmatpush1.xpose.msra.mxu0 0.0
        %1314 = vmatprep.subr.mxu0 0.0
        %1315 = vmatpush1.xpose.msra.mxu0 0.0
        %1316 = vmatprep.subr.mxu0 0.0
        %1317 = vmatpush1.xpose.msra.mxu0 0.0
        %1318 = vmatprep.subr.mxu0 0.0
        %1319 = vmatpush1.xpose.msra.mxu0 0.0
        %1320 = vmatprep.subr.mxu0 0.0
        %1321 = vmatpush1.xpose.msra.mxu0 %v1288
        %1322 = vmatprep.subr.mxu0 0.0
        %1323 = vmatpush2.xpose.msra.mxu0 0.0
        %1324 = vmatprep.subr.mxu0 0.0
        %1325 = vmatpush2.xpose.msra.mxu0 0.0
        %1326 = vmatprep.subr.mxu0 0.0
        %1327 = vmatpush2.xpose.msra.mxu0 0.0
        %1328 = vmatprep.subr.mxu0 0.0
        %1329 = vmatpush2.xpose.msra.mxu0 0.0
        %1330 = vmatprep.subr.mxu0 0.0
        %1331 = vmatpush2.xpose.msra.mxu0 0.0
        %1332 = vmatprep.subr.mxu0 0.0
        %1333 = vmatpush2.xpose.msra.mxu0 0.0
        %1334 = vmatprep.subr.mxu0 0.0
        %1335 = vmatpush2.xpose.msra.mxu0 0.0
        %1336 = vmatprep.subr.mxu0 0.0
        %1337 = vmatpush2.xpose.msra.mxu0 0.0
        %1338 = vmatprep.subr.mxu0 0.0
        %1339 = vmatpush2.xpose.msra.mxu0 0.0
        %1340 = vmatprep.subr.mxu0 0.0
        %1341 = vmatpush2.xpose.msra.mxu0 0.0
        %1342 = vmatprep.subr.mxu0 0.0
        %1343 = vmatpush2.xpose.msra.mxu0 0.0
        %1344 = vmatprep.subr.mxu0 0.0
        %1345 = vmatpush2.xpose.msra.mxu0 0.0
        %1346 = vmatprep.subr.mxu0 0.0
        %1347 = vmatpush2.xpose.msra.mxu0 0.0
        %1348 = vmatprep.subr.mxu0 0.0
        %1349 = vmatpush2.xpose.msra.mxu0 0.0
        %1350 = vmatprep.subr.mxu0 0.0
        %1351 = vmatpush2.xpose.msra.mxu0 0.0
        %1352 = vmatprep.subr.mxu0 0.0
        %1353 = vmatpush2.xpose.msra.mxu0 0.0
        %1354 = vmatprep.mubr.f32.mxu0 0.0
        %1355 = vmatmul.mubr.f32.gmra.mxu0 %v1285
        %v1356 = vpop.f32.mrf.mxu0
        %v1357 = vadd.f32 0.0, %v1356
        %v1358 = vpop.f32.mrf.mxu0
        %1359 = vdwg.mxu0
        %v1361 = vsel %vm1283, %v1108, 0
        %v1364 = vsel %vm1283, %v1194, 0
        %1366 = vmatprep.subr.mxu0 0.0
        %1367 = vmatpush1.xpose.msra.mxu0 0.0
        %1368 = vmatprep.subr.mxu0 0.0
        %1369 = vmatpush1.xpose.msra.mxu0 0.0
        %1370 = vmatprep.subr.mxu0 0.0
        %1371 = vmatpush1.xpose.msra.mxu0 0.0
        %1372 = vmatprep.subr.mxu0 0.0
        %1373 = vmatpush1.xpose.msra.mxu0 0.0
        %1374 = vmatprep.subr.mxu0 0.0
        %1375 = vmatpush1.xpose.msra.mxu0 0.0
        %1376 = vmatprep.subr.mxu0 0.0
        %1377 = vmatpush1.xpose.msra.mxu0 0.0
        %1378 = vmatprep.subr.mxu0 0.0
        %1379 = vmatpush1.xpose.msra.mxu0 0.0
        %1380 = vmatprep.subr.mxu0 0.0
        %1381 = vmatpush1.xpose.msra.mxu0 0.0
        %1382 = vmatprep.subr.mxu0 0.0
        %1383 = vmatpush1.xpose.msra.mxu0 0.0
        %1384 = vmatprep.subr.mxu0 0.0
        %1385 = vmatpush1.xpose.msra.mxu0 0.0
        %1386 = vmatprep.subr.mxu0 0.0
        %1387 = vmatpush1.xpose.msra.mxu0 0.0
        %1388 = vmatprep.subr.mxu0 0.0
        %1389 = vmatpush1.xpose.msra.mxu0 0.0
        %1390 = vmatprep.subr.mxu0 0.0
        %1391 = vmatpush1.xpose.msra.mxu0 0.0
        %1392 = vmatprep.subr.mxu0 0.0
        %1393 = vmatpush1.xpose.msra.mxu0 0.0
        %1394 = vmatprep.subr.mxu0 0.0
        %1395 = vmatpush1.xpose.msra.mxu0 0.0
        %1396 = vmatprep.subr.mxu0 0.0
        %1397 = vmatpush1.xpose.msra.mxu0 %v1364
        %1398 = vmatprep.subr.mxu0 0.0
        %1399 = vmatpush2.xpose.msra.mxu0 0.0
        %1400 = vmatprep.subr.mxu0 0.0
        %1401 = vmatpush2.xpose.msra.mxu0 0.0
        %1402 = vmatprep.subr.mxu0 0.0
        %1403 = vmatpush2.xpose.msra.mxu0 0.0
        %1404 = vmatprep.subr.mxu0 0.0
        %1405 = vmatpush2.xpose.msra.mxu0 0.0
        %1406 = vmatprep.subr.mxu0 0.0
        %1407 = vmatpush2.xpose.msra.mxu0 0.0
        %1408 = vmatprep.subr.mxu0 0.0
        %1409 = vmatpush2.xpose.msra.mxu0 0.0
        %1410 = vmatprep.subr.mxu0 0.0
        %1411 = vmatpush2.xpose.msra.mxu0 0.0
        %1412 = vmatprep.subr.mxu0 0.0
        %1413 = vmatpush2.xpose.msra.mxu0 0.0
        %1414 = vmatprep.subr.mxu0 0.0
        %1415 = vmatpush2.xpose.msra.mxu0 0.0
        %1416 = vmatprep.subr.mxu0 0.0
        %1417 = vmatpush2.xpose.msra.mxu0 0.0
        %1418 = vmatprep.subr.mxu0 0.0
        %1419 = vmatpush2.xpose.msra.mxu0 0.0
        %1420 = vmatprep.subr.mxu0 0.0
        %1421 = vmatpush2.xpose.msra.mxu0 0.0
        %1422 = vmatprep.subr.mxu0 0.0
        %1423 = vmatpush2.xpose.msra.mxu0 0.0
        %1424 = vmatprep.subr.mxu0 0.0
        %1425 = vmatpush2.xpose.msra.mxu0 0.0
        %1426 = vmatprep.subr.mxu0 0.0
        %1427 = vmatpush2.xpose.msra.mxu0 0.0
        %1428 = vmatprep.subr.mxu0 0.0
        %1429 = vmatpush2.xpose.msra.mxu0 0.0
        %1430 = vmatprep.mubr.f32.mxu0 0.0
        %1431 = vmatmul.mubr.f32.gmra.mxu0 %v1361
        %v1432 = vpop.f32.mrf.mxu0
        %v1433 = vadd.f32 0.0, %v1432
        %v1434 = vpop.f32.mrf.mxu0
        %1435 = vdwg.mxu0
        %v1436 = vmul.f32 %v1357, 0.25
        %v1437 = vmul.f32 %v1433, 0.25
        %vm1438 = vcmask 64512
        %v1439 = vsel %vm1438, %v1436, -inf
        %1440 = vmax.xlane.f32.xlu0 %v1439
        %v1441 = vpop.xlane.xlu0 %1440
        %v1442 = vsel %vm1438, %v1437, -inf
        %1443 = vmax.xlane.f32.xlu0 %v1442
        %v1444 = vpop.xlane.xlu0 %1443
        %v1445 = vsub.f32 %v1436, %v1441
        %v1446 = vsub.f32 %v1437, %v1444
        %v1447 = vmul.f32 %v1445, 1.442695
        %v1448 = vpow.pop %v1447
        %v1449 = vmul.f32 %v1446, 1.442695
        %v1450 = vpow.pop %v1449
        %v1451 = vsel %vm1438, %v1448, 0.0
        %1452 = vadd.xlane.f32.xlu0 %v1451
        %v1453 = vpop.xlane.xlu0 %1452
        %v1454 = vsel %vm1438, %v1450, 0.0
        %1455 = vadd.xlane.f32.xlu0 %v1454
        %v1456 = vpop.xlane.xlu0 %1455
        %v1457 = vrcp.pop %v1453
        %v1458 = vrcp.pop %v1456
        %v1459 = vmul.f32 %v1448, %v1457
        %v1460 = vmul.f32 %v1450, %v1458
        %v1462 = vsel %vm1438, %v1459, 0
        %1464 = vmatprep.subr.mxu0 0.0
        %1465 = vmatpush1.msra.mxu0 0.0
        %1466 = vmatprep.subr.mxu0 0.0
        %1467 = vmatpush1.msra.mxu0 0.0
        %1468 = vmatprep.subr.mxu0 0.0
        %1469 = vmatpush1.msra.mxu0 0.0
        %1470 = vmatprep.subr.mxu0 0.0
        %1471 = vmatpush1.msra.mxu0 0.0
        %1472 = vmatprep.subr.mxu0 0.0
        %1473 = vmatpush1.msra.mxu0 0.0
        %1474 = vmatprep.subr.mxu0 0.0
        %1475 = vmatpush1.msra.mxu0 0.0
        %1476 = vmatprep.subr.mxu0 0.0
        %1477 = vmatpush1.msra.mxu0 0.0
        %1478 = vmatprep.subr.mxu0 0.0
        %1479 = vmatpush1.msra.mxu0 0.0
        %1480 = vmatprep.subr.mxu0 0.0
        %1481 = vmatpush1.msra.mxu0 0.0
        %1482 = vmatprep.subr.mxu0 0.0
        %1483 = vmatpush1.msra.mxu0 0.0
        %1484 = vmatprep.subr.mxu0 0.0
        %1485 = vmatpush1.msra.mxu0 0.0
        %1486 = vmatprep.subr.mxu0 0.0
        %1487 = vmatpush1.msra.mxu0 0.0
        %1488 = vmatprep.subr.mxu0 0.0
        %1489 = vmatpush1.msra.mxu0 0.0
        %1490 = vmatprep.subr.mxu0 0.0
        %1491 = vmatpush1.msra.mxu0 0.0
        %1492 = vmatprep.subr.mxu0 0.0
        %1493 = vmatpush1.msra.mxu0 0.0
        %1494 = vmatprep.subr.mxu0 0.0
        %1495 = vmatpush1.msra.mxu0 %v1275
        %1496 = vmatprep.subr.mxu0 0.0
        %1497 = vmatpush2.msra.mxu0 0.0
        %1498 = vmatprep.subr.mxu0 0.0
        %1499 = vmatpush2.msra.mxu0 0.0
        %1500 = vmatprep.subr.mxu0 0.0
        %1501 = vmatpush2.msra.mxu0 0.0
        %1502 = vmatprep.subr.mxu0 0.0
        %1503 = vmatpush2.msra.mxu0 0.0
        %1504 = vmatprep.subr.mxu0 0.0
        %1505 = vmatpush2.msra.mxu0 0.0
        %1506 = vmatprep.subr.mxu0 0.0
        %1507 = vmatpush2.msra.mxu0 0.0
        %1508 = vmatprep.subr.mxu0 0.0
        %1509 = vmatpush2.msra.mxu0 0.0
        %1510 = vmatprep.subr.mxu0 0.0
        %1511 = vmatpush2.msra.mxu0 0.0
        %1512 = vmatprep.subr.mxu0 0.0
        %1513 = vmatpush2.msra.mxu0 0.0
        %1514 = vmatprep.subr.mxu0 0.0
        %1515 = vmatpush2.msra.mxu0 0.0
        %1516 = vmatprep.subr.mxu0 0.0
        %1517 = vmatpush2.msra.mxu0 0.0
        %1518 = vmatprep.subr.mxu0 0.0
        %1519 = vmatpush2.msra.mxu0 0.0
        %1520 = vmatprep.subr.mxu0 0.0
        %1521 = vmatpush2.msra.mxu0 0.0
        %1522 = vmatprep.subr.mxu0 0.0
        %1523 = vmatpush2.msra.mxu0 0.0
        %1524 = vmatprep.subr.mxu0 0.0
        %1525 = vmatpush2.msra.mxu0 0.0
        %1526 = vmatprep.subr.mxu0 0.0
        %1527 = vmatpush2.msra.mxu0 0.0
        %1528 = vmatprep.mubr.f32.mxu0 0.0
        %1529 = vmatmul.mubr.f32.gmra.mxu0 %v1462
        %v1530 = vpop.f32.mrf.mxu0
        %v1531 = vadd.f32 0.0, %v1530
        %v1532 = vpop.f32.mrf.mxu0
        %1533 = vdwg.mxu0
        %v1535 = vsel %vm1438, %v1460, 0
        %1537 = vmatprep.subr.mxu0 0.0
        %1538 = vmatpush1.msra.mxu0 0.0
        %1539 = vmatprep.subr.mxu0 0.0
        %1540 = vmatpush1.msra.mxu0 0.0
        %1541 = vmatprep.subr.mxu0 0.0
        %1542 = vmatpush1.msra.mxu0 0.0
        %1543 = vmatprep.subr.mxu0 0.0
        %1544 = vmatpush1.msra.mxu0 0.0
        %1545 = vmatprep.subr.mxu0 0.0
        %1546 = vmatpush1.msra.mxu0 0.0
        %1547 = vmatprep.subr.mxu0 0.0
        %1548 = vmatpush1.msra.mxu0 0.0
        %1549 = vmatprep.subr.mxu0 0.0
        %1550 = vmatpush1.msra.mxu0 0.0
        %1551 = vmatprep.subr.mxu0 0.0
        %1552 = vmatpush1.msra.mxu0 0.0
        %1553 = vmatprep.subr.mxu0 0.0
        %1554 = vmatpush1.msra.mxu0 0.0
        %1555 = vmatprep.subr.mxu0 0.0
        %1556 = vmatpush1.msra.mxu0 0.0
        %1557 = vmatprep.subr.mxu0 0.0
        %1558 = vmatpush1.msra.mxu0 0.0
        %1559 = vmatprep.subr.mxu0 0.0
        %1560 = vmatpush1.msra.mxu0 0.0
        %1561 = vmatprep.subr.mxu0 0.0
        %1562 = vmatpush1.msra.mxu0 0.0
        %1563 = vmatprep.subr.mxu0 0.0
        %1564 = vmatpush1.msra.mxu0 0.0
        %1565 = vmatprep.subr.mxu0 0.0
        %1566 = vmatpush1.msra.mxu0 0.0
        %1567 = vmatprep.subr.mxu0 0.0
        %1568 = vmatpush1.msra.mxu0 %v1280
        %1569 = vmatprep.subr.mxu0 0.0
        %1570 = vmatpush2.msra.mxu0 0.0
        %1571 = vmatprep.subr.mxu0 0.0
        %1572 = vmatpush2.msra.mxu0 0.0
        %1573 = vmatprep.subr.mxu0 0.0
        %1574 = vmatpush2.msra.mxu0 0.0
        %1575 = vmatprep.subr.mxu0 0.0
        %1576 = vmatpush2.msra.mxu0 0.0
        %1577 = vmatprep.subr.mxu0 0.0
        %1578 = vmatpush2.msra.mxu0 0.0
        %1579 = vmatprep.subr.mxu0 0.0
        %1580 = vmatpush2.msra.mxu0 0.0
        %1581 = vmatprep.subr.mxu0 0.0
        %1582 = vmatpush2.msra.mxu0 0.0
        %1583 = vmatprep.subr.mxu0 0.0
        %1584 = vmatpush2.msra.mxu0 0.0
        %1585 = vmatprep.subr.mxu0 0.0
        %1586 = vmatpush2.msra.mxu0 0.0
        %1587 = vmatprep.subr.mxu0 0.0
        %1588 = vmatpush2.msra.mxu0 0.0
        %1589 = vmatprep.subr.mxu0 0.0
        %1590 = vmatpush2.msra.mxu0 0.0
        %1591 = vmatprep.subr.mxu0 0.0
        %1592 = vmatpush2.msra.mxu0 0.0
        %1593 = vmatprep.subr.mxu0 0.0
        %1594 = vmatpush2.msra.mxu0 0.0
        %1595 = vmatprep.subr.mxu0 0.0
        %1596 = vmatpush2.msra.mxu0 0.0
        %1597 = vmatprep.subr.mxu0 0.0
        %1598 = vmatpush2.msra.mxu0 0.0
        %1599 = vmatprep.subr.mxu0 0.0
        %1600 = vmatpush2.msra.mxu0 0.0
        %1601 = vmatprep.mubr.f32.mxu0 0.0
        %1602 = vmatmul.mubr.f32.gmra.mxu0 %v1535
        %v1603 = vpop.f32.mrf.mxu0
        %v1604 = vadd.f32 0.0, %v1603
        %v1605 = vpop.f32.mrf.mxu0
        %1606 = vdwg.mxu0
        %1607 = vrot.lane.b32.xlu0 %v1103, 112
        %v1608 = vpop.permute.xlu0 %1607
        %1609 = vrot.lane.b32.xlu0 %v1189, 112
        %v1610 = vpop.permute.xlu0 %1609
        %v1611 = vsel %vm1283, %v1608, 0
        %v1613 = vsel %vm1283, %v1610, 0
        %1615 = vmatprep.subr.mxu0 0.0
        %1616 = vmatpush1.xpose.msra.mxu0 0.0
        %1617 = vmatprep.subr.mxu0 0.0
        %1618 = vmatpush1.xpose.msra.mxu0 0.0
        %1619 = vmatprep.subr.mxu0 0.0
        %1620 = vmatpush1.xpose.msra.mxu0 0.0
        %1621 = vmatprep.subr.mxu0 0.0
        %1622 = vmatpush1.xpose.msra.mxu0 0.0
        %1623 = vmatprep.subr.mxu0 0.0
        %1624 = vmatpush1.xpose.msra.mxu0 0.0
        %1625 = vmatprep.subr.mxu0 0.0
        %1626 = vmatpush1.xpose.msra.mxu0 0.0
        %1627 = vmatprep.subr.mxu0 0.0
        %1628 = vmatpush1.xpose.msra.mxu0 0.0
        %1629 = vmatprep.subr.mxu0 0.0
        %1630 = vmatpush1.xpose.msra.mxu0 0.0
        %1631 = vmatprep.subr.mxu0 0.0
        %1632 = vmatpush1.xpose.msra.mxu0 0.0
        %1633 = vmatprep.subr.mxu0 0.0
        %1634 = vmatpush1.xpose.msra.mxu0 0.0
        %1635 = vmatprep.subr.mxu0 0.0
        %1636 = vmatpush1.xpose.msra.mxu0 0.0
        %1637 = vmatprep.subr.mxu0 0.0
        %1638 = vmatpush1.xpose.msra.mxu0 0.0
        %1639 = vmatprep.subr.mxu0 0.0
        %1640 = vmatpush1.xpose.msra.mxu0 0.0
        %1641 = vmatprep.subr.mxu0 0.0
        %1642 = vmatpush1.xpose.msra.mxu0 0.0
        %1643 = vmatprep.subr.mxu0 0.0
        %1644 = vmatpush1.xpose.msra.mxu0 0.0
        %1645 = vmatprep.subr.mxu0 0.0
        %1646 = vmatpush1.xpose.msra.mxu0 %v1613
        %1647 = vmatprep.subr.mxu0 0.0
        %1648 = vmatpush2.xpose.msra.mxu0 0.0
        %1649 = vmatprep.subr.mxu0 0.0
        %1650 = vmatpush2.xpose.msra.mxu0 0.0
        %1651 = vmatprep.subr.mxu0 0.0
        %1652 = vmatpush2.xpose.msra.mxu0 0.0
        %1653 = vmatprep.subr.mxu0 0.0
        %1654 = vmatpush2.xpose.msra.mxu0 0.0
        %1655 = vmatprep.subr.mxu0 0.0
        %1656 = vmatpush2.xpose.msra.mxu0 0.0
        %1657 = vmatprep.subr.mxu0 0.0
        %1658 = vmatpush2.xpose.msra.mxu0 0.0
        %1659 = vmatprep.subr.mxu0 0.0
        %1660 = vmatpush2.xpose.msra.mxu0 0.0
        %1661 = vmatprep.subr.mxu0 0.0
        %1662 = vmatpush2.xpose.msra.mxu0 0.0
        %1663 = vmatprep.subr.mxu0 0.0
        %1664 = vmatpush2.xpose.msra.mxu0 0.0
        %1665 = vmatprep.subr.mxu0 0.0
        %1666 = vmatpush2.xpose.msra.mxu0 0.0
        %1667 = vmatprep.subr.mxu0 0.0
        %1668 = vmatpush2.xpose.msra.mxu0 0.0
        %1669 = vmatprep.subr.mxu0 0.0
        %1670 = vmatpush2.xpose.msra.mxu0 0.0
        %1671 = vmatprep.subr.mxu0 0.0
        %1672 = vmatpush2.xpose.msra.mxu0 0.0
        %1673 = vmatprep.subr.mxu0 0.0
        %1674 = vmatpush2.xpose.msra.mxu0 0.0
        %1675 = vmatprep.subr.mxu0 0.0
        %1676 = vmatpush2.xpose.msra.mxu0 0.0
        %1677 = vmatprep.subr.mxu0 0.0
        %1678 = vmatpush2.xpose.msra.mxu0 0.0
        %1679 = vmatprep.mubr.f32.mxu0 0.0
        %1680 = vmatmul.mubr.f32.gmra.mxu0 %v1611
        %v1681 = vpop.f32.mrf.mxu0
        %v1682 = vadd.f32 0.0, %v1681
        %v1683 = vpop.f32.mrf.mxu0
        %1684 = vdwg.mxu0
        %1685 = vrot.lane.b32.xlu0 %v1108, 112
        %v1686 = vpop.permute.xlu0 %1685
        %1687 = vrot.lane.b32.xlu0 %v1194, 112
        %v1688 = vpop.permute.xlu0 %1687
        %v1689 = vsel %vm1283, %v1686, 0
        %v1691 = vsel %vm1283, %v1688, 0
        %1693 = vmatprep.subr.mxu0 0.0
        %1694 = vmatpush1.xpose.msra.mxu0 0.0
        %1695 = vmatprep.subr.mxu0 0.0
        %1696 = vmatpush1.xpose.msra.mxu0 0.0
        %1697 = vmatprep.subr.mxu0 0.0
        %1698 = vmatpush1.xpose.msra.mxu0 0.0
        %1699 = vmatprep.subr.mxu0 0.0
        %1700 = vmatpush1.xpose.msra.mxu0 0.0
        %1701 = vmatprep.subr.mxu0 0.0
        %1702 = vmatpush1.xpose.msra.mxu0 0.0
        %1703 = vmatprep.subr.mxu0 0.0
        %1704 = vmatpush1.xpose.msra.mxu0 0.0
        %1705 = vmatprep.subr.mxu0 0.0
        %1706 = vmatpush1.xpose.msra.mxu0 0.0
        %1707 = vmatprep.subr.mxu0 0.0
        %1708 = vmatpush1.xpose.msra.mxu0 0.0
        %1709 = vmatprep.subr.mxu0 0.0
        %1710 = vmatpush1.xpose.msra.mxu0 0.0
        %1711 = vmatprep.subr.mxu0 0.0
        %1712 = vmatpush1.xpose.msra.mxu0 0.0
        %1713 = vmatprep.subr.mxu0 0.0
        %1714 = vmatpush1.xpose.msra.mxu0 0.0
        %1715 = vmatprep.subr.mxu0 0.0
        %1716 = vmatpush1.xpose.msra.mxu0 0.0
        %1717 = vmatprep.subr.mxu0 0.0
        %1718 = vmatpush1.xpose.msra.mxu0 0.0
        %1719 = vmatprep.subr.mxu0 0.0
        %1720 = vmatpush1.xpose.msra.mxu0 0.0
        %1721 = vmatprep.subr.mxu0 0.0
        %1722 = vmatpush1.xpose.msra.mxu0 0.0
        %1723 = vmatprep.subr.mxu0 0.0
        %1724 = vmatpush1.xpose.msra.mxu0 %v1691
        %1725 = vmatprep.subr.mxu0 0.0
        %1726 = vmatpush2.xpose.msra.mxu0 0.0
        %1727 = vmatprep.subr.mxu0 0.0
        %1728 = vmatpush2.xpose.msra.mxu0 0.0
        %1729 = vmatprep.subr.mxu0 0.0
        %1730 = vmatpush2.xpose.msra.mxu0 0.0
        %1731 = vmatprep.subr.mxu0 0.0
        %1732 = vmatpush2.xpose.msra.mxu0 0.0
        %1733 = vmatprep.subr.mxu0 0.0
        %1734 = vmatpush2.xpose.msra.mxu0 0.0
        %1735 = vmatprep.subr.mxu0 0.0
        %1736 = vmatpush2.xpose.msra.mxu0 0.0
        %1737 = vmatprep.subr.mxu0 0.0
        %1738 = vmatpush2.xpose.msra.mxu0 0.0
        %1739 = vmatprep.subr.mxu0 0.0
        %1740 = vmatpush2.xpose.msra.mxu0 0.0
        %1741 = vmatprep.subr.mxu0 0.0
        %1742 = vmatpush2.xpose.msra.mxu0 0.0
        %1743 = vmatprep.subr.mxu0 0.0
        %1744 = vmatpush2.xpose.msra.mxu0 0.0
        %1745 = vmatprep.subr.mxu0 0.0
        %1746 = vmatpush2.xpose.msra.mxu0 0.0
        %1747 = vmatprep.subr.mxu0 0.0
        %1748 = vmatpush2.xpose.msra.mxu0 0.0
        %1749 = vmatprep.subr.mxu0 0.0
        %1750 = vmatpush2.xpose.msra.mxu0 0.0
        %1751 = vmatprep.subr.mxu0 0.0
        %1752 = vmatpush2.xpose.msra.mxu0 0.0
        %1753 = vmatprep.subr.mxu0 0.0
        %1754 = vmatpush2.xpose.msra.mxu0 0.0
        %1755 = vmatprep.subr.mxu0 0.0
        %1756 = vmatpush2.xpose.msra.mxu0 0.0
        %1757 = vmatprep.mubr.f32.mxu0 0.0
        %1758 = vmatmul.mubr.f32.gmra.mxu0 %v1689
        %v1759 = vpop.f32.mrf.mxu0
        %v1760 = vadd.f32 0.0, %v1759
        %v1761 = vpop.f32.mrf.mxu0
        %1762 = vdwg.mxu0
        %v1763 = vmul.f32 %v1682, 0.25
        %v1764 = vmul.f32 %v1760, 0.25
        %v1765 = vsel %vm1438, %v1763, -inf
        %1766 = vmax.xlane.f32.xlu0 %v1765
        %v1767 = vpop.xlane.xlu0 %1766
        %v1768 = vsel %vm1438, %v1764, -inf
        %1769 = vmax.xlane.f32.xlu0 %v1768
        %v1770 = vpop.xlane.xlu0 %1769
        %v1771 = vsub.f32 %v1763, %v1767
        %v1772 = vsub.f32 %v1764, %v1770
        %v1773 = vmul.f32 %v1771, 1.442695
        %v1774 = vpow.pop %v1773
        %v1775 = vmul.f32 %v1772, 1.442695
        %v1776 = vpow.pop %v1775
        %v1777 = vsel %vm1438, %v1774, 0.0
        %1778 = vadd.xlane.f32.xlu0 %v1777
        %v1779 = vpop.xlane.xlu0 %1778
        %v1780 = vsel %vm1438, %v1776, 0.0
        %1781 = vadd.xlane.f32.xlu0 %v1780
        %v1782 = vpop.xlane.xlu0 %1781
        %v1783 = vrcp.pop %v1779
        %v1784 = vrcp.pop %v1782
        %v1785 = vmul.f32 %v1774, %v1783
        %v1786 = vmul.f32 %v1776, %v1784
        %1788 = vrot.lane.b32.xlu0 %v1275, 112
        %v1789 = vpop.permute.xlu0 %1788
        %v1792 = vsel %vm1438, %v1785, 0
        %1794 = vmatprep.subr.mxu0 0.0
        %1795 = vmatpush1.msra.mxu0 0.0
        %1796 = vmatprep.subr.mxu0 0.0
        %1797 = vmatpush1.msra.mxu0 0.0
        %1798 = vmatprep.subr.mxu0 0.0
        %1799 = vmatpush1.msra.mxu0 0.0
        %1800 = vmatprep.subr.mxu0 0.0
        %1801 = vmatpush1.msra.mxu0 0.0
        %1802 = vmatprep.subr.mxu0 0.0
        %1803 = vmatpush1.msra.mxu0 0.0
        %1804 = vmatprep.subr.mxu0 0.0
        %1805 = vmatpush1.msra.mxu0 0.0
        %1806 = vmatprep.subr.mxu0 0.0
        %1807 = vmatpush1.msra.mxu0 0.0
        %1808 = vmatprep.subr.mxu0 0.0
        %1809 = vmatpush1.msra.mxu0 0.0
        %1810 = vmatprep.subr.mxu0 0.0
        %1811 = vmatpush1.msra.mxu0 0.0
        %1812 = vmatprep.subr.mxu0 0.0
        %1813 = vmatpush1.msra.mxu0 0.0
        %1814 = vmatprep.subr.mxu0 0.0
        %1815 = vmatpush1.msra.mxu0 0.0
        %1816 = vmatprep.subr.mxu0 0.0
        %1817 = vmatpush1.msra.mxu0 0.0
        %1818 = vmatprep.subr.mxu0 0.0
        %1819 = vmatpush1.msra.mxu0 0.0
        %1820 = vmatprep.subr.mxu0 0.0
        %1821 = vmatpush1.msra.mxu0 0.0
        %1822 = vmatprep.subr.mxu0 0.0
        %1823 = vmatpush1.msra.mxu0 0.0
        %1824 = vmatprep.subr.mxu0 0.0
        %1825 = vmatpush1.msra.mxu0 %v1789
        %1826 = vmatprep.subr.mxu0 0.0
        %1827 = vmatpush2.msra.mxu0 0.0
        %1828 = vmatprep.subr.mxu0 0.0
        %1829 = vmatpush2.msra.mxu0 0.0
        %1830 = vmatprep.subr.mxu0 0.0
        %1831 = vmatpush2.msra.mxu0 0.0
        %1832 = vmatprep.subr.mxu0 0.0
        %1833 = vmatpush2.msra.mxu0 0.0
        %1834 = vmatprep.subr.mxu0 0.0
        %1835 = vmatpush2.msra.mxu0 0.0
        %1836 = vmatprep.subr.mxu0 0.0
        %1837 = vmatpush2.msra.mxu0 0.0
        %1838 = vmatprep.subr.mxu0 0.0
        %1839 = vmatpush2.msra.mxu0 0.0
        %1840 = vmatprep.subr.mxu0 0.0
        %1841 = vmatpush2.msra.mxu0 0.0
        %1842 = vmatprep.subr.mxu0 0.0
        %1843 = vmatpush2.msra.mxu0 0.0
        %1844 = vmatprep.subr.mxu0 0.0
        %1845 = vmatpush2.msra.mxu0 0.0
        %1846 = vmatprep.subr.mxu0 0.0
        %1847 = vmatpush2.msra.mxu0 0.0
        %1848 = vmatprep.subr.mxu0 0.0
        %1849 = vmatpush2.msra.mxu0 0.0
        %1850 = vmatprep.subr.mxu0 0.0
        %1851 = vmatpush2.msra.mxu0 0.0
        %1852 = vmatprep.subr.mxu0 0.0
        %1853 = vmatpush2.msra.mxu0 0.0
        %1854 = vmatprep.subr.mxu0 0.0
        %1855 = vmatpush2.msra.mxu0 0.0
        %1856 = vmatprep.subr.mxu0 0.0
        %1857 = vmatpush2.msra.mxu0 0.0
        %1858 = vmatprep.mubr.f32.mxu0 0.0
        %1859 = vmatmul.mubr.f32.gmra.mxu0 %v1792
        %v1860 = vpop.f32.mrf.mxu0
        %v1861 = vadd.f32 0.0, %v1860
        %v1862 = vpop.f32.mrf.mxu0
        %1863 = vdwg.mxu0
        %1865 = vrot.lane.b32.xlu0 %v1280, 112
        %v1866 = vpop.permute.xlu0 %1865
        %v1869 = vsel %vm1438, %v1786, 0
        %1871 = vmatprep.subr.mxu0 0.0
        %1872 = vmatpush1.msra.mxu0 0.0
        %1873 = vmatprep.subr.mxu0 0.0
        %1874 = vmatpush1.msra.mxu0 0.0
        %1875 = vmatprep.subr.mxu0 0.0
        %1876 = vmatpush1.msra.mxu0 0.0
        %1877 = vmatprep.subr.mxu0 0.0
        %1878 = vmatpush1.msra.mxu0 0.0
        %1879 = vmatprep.subr.mxu0 0.0
        %1880 = vmatpush1.msra.mxu0 0.0
        %1881 = vmatprep.subr.mxu0 0.0
        %1882 = vmatpush1.msra.mxu0 0.0
        %1883 = vmatprep.subr.mxu0 0.0
        %1884 = vmatpush1.msra.mxu0 0.0
        %1885 = vmatprep.subr.mxu0 0.0
        %1886 = vmatpush1.msra.mxu0 0.0
        %1887 = vmatprep.subr.mxu0 0.0
        %1888 = vmatpush1.msra.mxu0 0.0
        %1889 = vmatprep.subr.mxu0 0.0
        %1890 = vmatpush1.msra.mxu0 0.0
        %1891 = vmatprep.subr.mxu0 0.0
        %1892 = vmatpush1.msra.mxu0 0.0
        %1893 = vmatprep.subr.mxu0 0.0
        %1894 = vmatpush1.msra.mxu0 0.0
        %1895 = vmatprep.subr.mxu0 0.0
        %1896 = vmatpush1.msra.mxu0 0.0
        %1897 = vmatprep.subr.mxu0 0.0
        %1898 = vmatpush1.msra.mxu0 0.0
        %1899 = vmatprep.subr.mxu0 0.0
        %1900 = vmatpush1.msra.mxu0 0.0
        %1901 = vmatprep.subr.mxu0 0.0
        %1902 = vmatpush1.msra.mxu0 %v1866
        %1903 = vmatprep.subr.mxu0 0.0
        %1904 = vmatpush2.msra.mxu0 0.0
        %1905 = vmatprep.subr.mxu0 0.0
        %1906 = vmatpush2.msra.mxu0 0.0
        %1907 = vmatprep.subr.mxu0 0.0
        %1908 = vmatpush2.msra.mxu0 0.0
        %1909 = vmatprep.subr.mxu0 0.0
        %1910 = vmatpush2.msra.mxu0 0.0
        %1911 = vmatprep.subr.mxu0 0.0
        %1912 = vmatpush2.msra.mxu0 0.0
        %1913 = vmatprep.subr.mxu0 0.0
        %1914 = vmatpush2.msra.mxu0 0.0
        %1915 = vmatprep.subr.mxu0 0.0
        %1916 = vmatpush2.msra.mxu0 0.0
        %1917 = vmatprep.subr.mxu0 0.0
        %1918 = vmatpush2.msra.mxu0 0.0
        %1919 = vmatprep.subr.mxu0 0.0
        %1920 = vmatpush2.msra.mxu0 0.0
        %1921 = vmatprep.subr.mxu0 0.0
        %1922 = vmatpush2.msra.mxu0 0.0
        %1923 = vmatprep.subr.mxu0 0.0
        %1924 = vmatpush2.msra.mxu0 0.0
        %1925 = vmatprep.subr.mxu0 0.0
        %1926 = vmatpush2.msra.mxu0 0.0
        %1927 = vmatprep.subr.mxu0 0.0
        %1928 = vmatpush2.msra.mxu0 0.0
        %1929 = vmatprep.subr.mxu0 0.0
        %1930 = vmatpush2.msra.mxu0 0.0
        %1931 = vmatprep.subr.mxu0 0.0
        %1932 = vmatpush2.msra.mxu0 0.0
        %1933 = vmatprep.subr.mxu0 0.0
        %1934 = vmatpush2.msra.mxu0 0.0
        %1935 = vmatprep.mubr.f32.mxu0 0.0
        %1936 = vmatmul.mubr.f32.gmra.mxu0 %v1869
        %v1937 = vpop.f32.mrf.mxu0
        %v1938 = vadd.f32 0.0, %v1937
        %v1939 = vpop.f32.mrf.mxu0
        %1940 = vdwg.mxu0
        %1943 = vrot.lane.b32.xlu0 %v1861, 16
        %v1944 = vpop.permute.xlu0 %1943
        %1945 = vrot.lane.b32.xlu0 %v1938, 16
        %v1946 = vpop.permute.xlu0 %1945
        %v1949 = vsel %vm1283, %v1531, %v1944
        %v1950 = vsel %vm1283, %v1604, %v1946
        %v1951 = vld [vmem:[%s930] sm:$0xff]
        %v1952 = vld [vmem:[%s930 + $0x8] sm:$0xff]
        %v1953 = vld [vmem:[%s930 + $0x10] sm:$0xff]
        %v1954 = vld [vmem:[%s930 + $0x18] sm:$0xff]
        %v1955 = vld [vmem:[%s933] sm:$0x1]
        %v1957 = vlaneseq
        %v1958 = vshrl.u32 %v1957, 7
        %v1959 = vsub.s32 0, %v1958
        %v1960 = vrot.slane %v1955, %v1959
        %v1963 = vsel %vm1029, %v1949, 0
        %v1966 = vsel %vm1029, %v1950, 0
        %1968 = vmatprep.subr.mxu0 0.0
        %1969 = vmatpush1.msra.mxu0 0.0
        %1970 = vmatprep.subr.mxu0 0.0
        %1971 = vmatpush1.msra.mxu0 0.0
        %1972 = vmatprep.subr.mxu0 0.0
        %1973 = vmatpush1.msra.mxu0 0.0
        %1974 = vmatprep.subr.mxu0 0.0
        %1975 = vmatpush1.msra.mxu0 0.0
        %1976 = vmatprep.subr.mxu0 0.0
        %1977 = vmatpush1.msra.mxu0 0.0
        %1978 = vmatprep.subr.mxu0 0.0
        %1979 = vmatpush1.msra.mxu0 0.0
        %1980 = vmatprep.subr.mxu0 0.0
        %1981 = vmatpush1.msra.mxu0 0.0
        %1982 = vmatprep.subr.mxu0 0.0
        %1983 = vmatpush1.msra.mxu0 0.0
        %1984 = vmatprep.subr.mxu0 0.0
        %1985 = vmatpush1.msra.mxu0 0.0
        %1986 = vmatprep.subr.mxu0 0.0
        %1987 = vmatpush1.msra.mxu0 0.0
        %1988 = vmatprep.subr.mxu0 0.0
        %1989 = vmatpush1.msra.mxu0 0.0
        %1990 = vmatprep.subr.mxu0 0.0
        %1991 = vmatpush1.msra.mxu0 0.0
        %1992 = vmatprep.subr.mxu0 0.0
        %1993 = vmatpush1.msra.mxu0 %v1954
        %1994 = vmatprep.subr.mxu0 0.0
        %1995 = vmatpush1.msra.mxu0 %v1953
        %1996 = vmatprep.subr.mxu0 0.0
        %1997 = vmatpush1.msra.mxu0 %v1952
        %1998 = vmatprep.subr.mxu0 0.0
        %1999 = vmatpush1.msra.mxu0 %v1951
        %2000 = vmatprep.subr.mxu0 0.0
        %2001 = vmatpush2.msra.mxu0 0.0
        %2002 = vmatprep.subr.mxu0 0.0
        %2003 = vmatpush2.msra.mxu0 0.0
        %2004 = vmatprep.subr.mxu0 0.0
        %2005 = vmatpush2.msra.mxu0 0.0
        %2006 = vmatprep.subr.mxu0 0.0
        %2007 = vmatpush2.msra.mxu0 0.0
        %2008 = vmatprep.subr.mxu0 0.0
        %2009 = vmatpush2.msra.mxu0 0.0
        %2010 = vmatprep.subr.mxu0 0.0
        %2011 = vmatpush2.msra.mxu0 0.0
        %2012 = vmatprep.subr.mxu0 0.0
        %2013 = vmatpush2.msra.mxu0 0.0
        %2014 = vmatprep.subr.mxu0 0.0
        %2015 = vmatpush2.msra.mxu0 0.0
        %2016 = vmatprep.subr.mxu0 0.0
        %2017 = vmatpush2.msra.mxu0 0.0
        %2018 = vmatprep.subr.mxu0 0.0
        %2019 = vmatpush2.msra.mxu0 0.0
        %2020 = vmatprep.subr.mxu0 0.0
        %2021 = vmatpush2.msra.mxu0 0.0
        %2022 = vmatprep.subr.mxu0 0.0
        %2023 = vmatpush2.msra.mxu0 0.0
        %2024 = vmatprep.subr.mxu0 0.0
        %2025 = vmatpush2.msra.mxu0 0.0
        %2026 = vmatprep.subr.mxu0 0.0
        %2027 = vmatpush2.msra.mxu0 0.0
        %2028 = vmatprep.subr.mxu0 0.0
        %2029 = vmatpush2.msra.mxu0 0.0
        %2030 = vmatprep.subr.mxu0 0.0
        %2031 = vmatpush2.msra.mxu0 0.0
        %2032 = vmatprep.mubr.f32.mxu0 0.0
        %2033 = vmatmul.mubr.f32.gmra.mxu0 %v1963
        %v2034 = vpop.f32.mrf.mxu0
        %v2035 = vadd.f32 %v1960, %v2034
        %v2036 = vpop.f32.mrf.mxu0
        %2037 = vmatprep.mubr.f32.mxu0 0.0
        %2038 = vmatmul.mubr.f32.gmra.mxu0 %v1966
        %v2039 = vpop.f32.mrf.mxu0
        %v2040 = vadd.f32 %v1960, %v2039
        %v2041 = vpop.f32.mrf.mxu0
        %2042 = vdwg.mxu0
        %v2043 = vadd.f32 %v1016, %v2035
        %v2044 = vadd.f32 %v1017, %v2040
        %v2045 = vld [vmem:[%s936] sm:$0x1]
        %v2046 = vld [vmem:[%s939] sm:$0x1]
        %v2047 = vsel %vm1029, %v2043, 0.0
        %2048 = vadd.xlane.f32.xlu0 %v2047
        %v2049 = vpop.xlane.xlu0 %2048
        %v2050 = vsel %vm1029, %v2044, 0.0
        %2051 = vadd.xlane.f32.xlu0 %v2050
        %v2052 = vpop.xlane.xlu0 %2051
        %v2053 = vrcp.pop 32.0
        %v2054 = vmul.f32 %v2049, %v2053
        %v2055 = vmul.f32 %v2052, %v2053
        %v2056 = vsub.f32 %v2043, %v2054
        %v2057 = vsub.f32 %v2044, %v2055
        %v2058 = vmul.f32 %v2056, %v2056
        %v2059 = vmul.f32 %v2057, %v2057
        %v2060 = vsel %vm1029, %v2058, 0.0
        %2061 = vadd.xlane.f32.xlu0 %v2060
        %v2062 = vpop.xlane.xlu0 %2061
        %v2063 = vsel %vm1029, %v2059, 0.0
        %2064 = vadd.xlane.f32.xlu0 %v2063
        %v2065 = vpop.xlane.xlu0 %2064
        %v2066 = vmul.f32 %v2062, %v2053
        %v2067 = vmul.f32 %v2065, %v2053
        %v2068 = vadd.f32 %v2066, 1e-12
        %v2069 = vadd.f32 %v2067, 1e-12
        %v2070 = vrsqrt.pop %v2068
        %v2071 = vrsqrt.pop %v2069
        %v2072 = vmul.f32 %v2056, %v2070
        %v2073 = vmul.f32 %v2057, %v2071
        %v2075 = vlaneseq
        %v2076 = vshrl.u32 %v2075, 7
        %v2077 = vsub.s32 0, %v2076
        %v2078 = vrot.slane %v2045, %v2077
        %v2080 = vmul.f32 %v2072, %v2078
        %v2081 = vmul.f32 %v2073, %v2078
        %v2083 = vlaneseq
        %v2084 = vshrl.u32 %v2083, 7
        %v2085 = vsub.s32 0, %v2084
        %v2086 = vrot.slane %v2046, %v2085
        %v2088 = vadd.f32 %v2080, %v2086
        %v2089 = vadd.f32 %v2081, %v2086
        %v2090 = vld [vmem:[%s944] sm:$0xff]
        %v2091 = vld [vmem:[%s944 + $0x8] sm:$0xff]
        %v2092 = vld [vmem:[%s944 + $0x10] sm:$0xff]
        %v2093 = vld [vmem:[%s944 + $0x18] sm:$0xff]
        %v2094 = vld [vmem:[%s947] sm:$0x1]
        %v2096 = vlaneseq
        %v2097 = vshrl.u32 %v2096, 7
        %v2098 = vsub.s32 0, %v2097
        %v2099 = vrot.slane %v2094, %v2098
        %v2102 = vsel %vm1029, %v2088, 0
        %v2105 = vsel %vm1029, %v2089, 0
        %2107 = vmatprep.subr.mxu0 0.0
        %2108 = vmatpush1.msra.mxu0 0.0
        %2109 = vmatprep.subr.mxu0 0.0
        %2110 = vmatpush1.msra.mxu0 0.0
        %2111 = vmatprep.subr.mxu0 0.0
        %2112 = vmatpush1.msra.mxu0 0.0
        %2113 = vmatprep.subr.mxu0 0.0
        %2114 = vmatpush1.msra.mxu0 0.0
        %2115 = vmatprep.subr.mxu0 0.0
        %2116 = vmatpush1.msra.mxu0 0.0
        %2117 = vmatprep.subr.mxu0 0.0
        %2118 = vmatpush1.msra.mxu0 0.0
        %2119 = vmatprep.subr.mxu0 0.0
        %2120 = vmatpush1.msra.mxu0 0.0
        %2121 = vmatprep.subr.mxu0 0.0
        %2122 = vmatpush1.msra.mxu0 0.0
        %2123 = vmatprep.subr.mxu0 0.0
        %2124 = vmatpush1.msra.mxu0 0.0
        %2125 = vmatprep.subr.mxu0 0.0
        %2126 = vmatpush1.msra.mxu0 0.0
        %2127 = vmatprep.subr.mxu0 0.0
        %2128 = vmatpush1.msra.mxu0 0.0
        %2129 = vmatprep.subr.mxu0 0.0
        %2130 = vmatpush1.msra.mxu0 0.0
        %2131 = vmatprep.subr.mxu0 0.0
        %2132 = vmatpush1.msra.mxu0 %v2093
        %2133 = vmatprep.subr.mxu0 0.0
        %2134 = vmatpush1.msra.mxu0 %v2092
        %2135 = vmatprep.subr.mxu0 0.0
        %2136 = vmatpush1.msra.mxu0 %v2091
        %2137 = vmatprep.subr.mxu0 0.0
        %2138 = vmatpush1.msra.mxu0 %v2090
        %2139 = vmatprep.subr.mxu0 0.0
        %2140 = vmatpush2.msra.mxu0 0.0
        %2141 = vmatprep.subr.mxu0 0.0
        %2142 = vmatpush2.msra.mxu0 0.0
        %2143 = vmatprep.subr.mxu0 0.0
        %2144 = vmatpush2.msra.mxu0 0.0
        %2145 = vmatprep.subr.mxu0 0.0
        %2146 = vmatpush2.msra.mxu0 0.0
        %2147 = vmatprep.subr.mxu0 0.0
        %2148 = vmatpush2.msra.mxu0 0.0
        %2149 = vmatprep.subr.mxu0 0.0
        %2150 = vmatpush2.msra.mxu0 0.0
        %2151 = vmatprep.subr.mxu0 0.0
        %2152 = vmatpush2.msra.mxu0 0.0
        %2153 = vmatprep.subr.mxu0 0.0
        %2154 = vmatpush2.msra.mxu0 0.0
        %2155 = vmatprep.subr.mxu0 0.0
        %2156 = vmatpush2.msra.mxu0 0.0
        %2157 = vmatprep.subr.mxu0 0.0
        %2158 = vmatpush2.msra.mxu0 0.0
        %2159 = vmatprep.subr.mxu0 0.0
        %2160 = vmatpush2.msra.mxu0 0.0
        %2161 = vmatprep.subr.mxu0 0.0
        %2162 = vmatpush2.msra.mxu0 0.0
        %2163 = vmatprep.subr.mxu0 0.0
        %2164 = vmatpush2.msra.mxu0 0.0
        %2165 = vmatprep.subr.mxu0 0.0
        %2166 = vmatpush2.msra.mxu0 0.0
        %2167 = vmatprep.subr.mxu0 0.0
        %2168 = vmatpush2.msra.mxu0 0.0
        %2169 = vmatprep.subr.mxu0 0.0
        %2170 = vmatpush2.msra.mxu0 0.0
        %2171 = vmatprep.mubr.f32.mxu0 0.0
        %2172 = vmatmul.mubr.f32.gmra.mxu0 %v2102
        %v2173 = vpop.f32.mrf.mxu0
        %v2174 = vadd.f32 %v2099, %v2173
        %v2175 = vpop.f32.mrf.mxu0
        %2176 = vmatprep.mubr.f32.mxu0 0.0
        %2177 = vmatmul.mubr.f32.gmra.mxu0 %v2105
        %v2178 = vpop.f32.mrf.mxu0
        %v2179 = vadd.f32 %v2099, %v2178
        %v2180 = vpop.f32.mrf.mxu0
        %2181 = vdwg.mxu0
        %v2182 = vmul.f32 %v2174, %v2174
        %v2183 = vmul.f32 %v2179, %v2179
        %v2184 = vmul.f32 %v2174, %v2182
        %v2185 = vmul.f32 %v2179, %v2183
        %v2186 = vmul.f32 %v2184, 0.044715
        %v2187 = vmul.f32 %v2185, 0.044715
        %v2188 = vadd.f32 %v2174, %v2186
        %v2189 = vadd.f32 %v2179, %v2187
        %v2190 = vmul.f32 %v2188, 0.7978846
        %v2191 = vmul.f32 %v2189, 0.7978846
        %v2192 = vtanh.pop %v2190
        %v2193 = vtanh.pop %v2191
        %v2194 = vadd.f32 %v2192, 1.0
        %v2195 = vadd.f32 %v2193, 1.0
        %v2196 = vmul.f32 %v2194, 0.5
        %v2197 = vmul.f32 %v2195, 0.5
        %v2198 = vmul.f32 %v2174, %v2196
        %v2199 = vmul.f32 %v2179, %v2197
        %v2200 = vld [vmem:[%s952] sm:$0xff]
        %v2201 = vld [vmem:[%s952 + $0x8] sm:$0xff]
        %v2202 = vld [vmem:[%s952 + $0x10] sm:$0xff]
        %v2203 = vld [vmem:[%s952 + $0x18] sm:$0xff]
        %v2204 = vld [vmem:[%s952 + $0x20] sm:$0xff]
        %v2205 = vld [vmem:[%s952 + $0x28] sm:$0xff]
        %v2206 = vld [vmem:[%s952 + $0x30] sm:$0xff]
        %v2207 = vld [vmem:[%s952 + $0x38] sm:$0xff]
        %v2208 = vld [vmem:[%s955] sm:$0x1]
        %v2210 = vlaneseq
        %v2211 = vshrl.u32 %v2210, 7
        %v2212 = vsub.s32 0, %v2211
        %v2213 = vrot.slane %v2208, %v2212
        %vm2215 = vcmask 523264
        %v2217 = vsel %vm2215, %v2198, 0
        %v2220 = vsel %vm2215, %v2199, 0
        %2222 = vmatprep.subr.mxu0 0.0
        %2223 = vmatpush1.msra.mxu0 0.0
        %2224 = vmatprep.subr.mxu0 0.0
        %2225 = vmatpush1.msra.mxu0 0.0
        %2226 = vmatprep.subr.mxu0 0.0
        %2227 = vmatpush1.msra.mxu0 0.0
        %2228 = vmatprep.subr.mxu0 0.0
        %2229 = vmatpush1.msra.mxu0 0.0
        %2230 = vmatprep.subr.mxu0 0.0
        %2231 = vmatpush1.msra.mxu0 0.0
        %2232 = vmatprep.subr.mxu0 0.0
        %2233 = vmatpush1.msra.mxu0 0.0
        %2234 = vmatprep.subr.mxu0 0.0
        %2235 = vmatpush1.msra.mxu0 0.0
        %2236 = vmatprep.subr.mxu0 0.0
        %2237 = vmatpush1.msra.mxu0 0.0
        %2238 = vmatprep.subr.mxu0 0.0
        %2239 = vmatpush1.msra.mxu0 %v2207
        %2240 = vmatprep.subr.mxu0 0.0
        %2241 = vmatpush1.msra.mxu0 %v2206
        %2242 = vmatprep.subr.mxu0 0.0
        %2243 = vmatpush1.msra.mxu0 %v2205
        %2244 = vmatprep.subr.mxu0 0.0
        %2245 = vmatpush1.msra.mxu0 %v2204
        %2246 = vmatprep.subr.mxu0 0.0
        %2247 = vmatpush1.msra.mxu0 %v2203
        %2248 = vmatprep.subr.mxu0 0.0
        %2249 = vmatpush1.msra.mxu0 %v2202
        %2250 = vmatprep.subr.mxu0 0.0
        %2251 = vmatpush1.msra.mxu0 %v2201
        %2252 = vmatprep.subr.mxu0 0.0
        %2253 = vmatpush1.msra.mxu0 %v2200
        %2254 = vmatprep.subr.mxu0 0.0
        %2255 = vmatpush2.msra.mxu0 0.0
        %2256 = vmatprep.subr.mxu0 0.0
        %2257 = vmatpush2.msra.mxu0 0.0
        %2258 = vmatprep.subr.mxu0 0.0
        %2259 = vmatpush2.msra.mxu0 0.0
        %2260 = vmatprep.subr.mxu0 0.0
        %2261 = vmatpush2.msra.mxu0 0.0
        %2262 = vmatprep.subr.mxu0 0.0
        %2263 = vmatpush2.msra.mxu0 0.0
        %2264 = vmatprep.subr.mxu0 0.0
        %2265 = vmatpush2.msra.mxu0 0.0
        %2266 = vmatprep.subr.mxu0 0.0
        %2267 = vmatpush2.msra.mxu0 0.0
        %2268 = vmatprep.subr.mxu0 0.0
        %2269 = vmatpush2.msra.mxu0 0.0
        %2270 = vmatprep.subr.mxu0 0.0
        %2271 = vmatpush2.msra.mxu0 0.0
        %2272 = vmatprep.subr.mxu0 0.0
        %2273 = vmatpush2.msra.mxu0 0.0
        %2274 = vmatprep.subr.mxu0 0.0
        %2275 = vmatpush2.msra.mxu0 0.0
        %2276 = vmatprep.subr.mxu0 0.0
        %2277 = vmatpush2.msra.mxu0 0.0
        %2278 = vmatprep.subr.mxu0 0.0
        %2279 = vmatpush2.msra.mxu0 0.0
        %2280 = vmatprep.subr.mxu0 0.0
        %2281 = vmatpush2.msra.mxu0 0.0
        %2282 = vmatprep.subr.mxu0 0.0
        %2283 = vmatpush2.msra.mxu0 0.0
        %2284 = vmatprep.subr.mxu0 0.0
        %2285 = vmatpush2.msra.mxu0 0.0
        %2286 = vmatprep.mubr.f32.mxu0 0.0
        %2287 = vmatmul.mubr.f32.gmra.mxu0 %v2217
        %v2288 = vpop.f32.mrf.mxu0
        %v2289 = vadd.f32 %v2213, %v2288
        %v2290 = vpop.f32.mrf.mxu0
        %2291 = vmatprep.mubr.f32.mxu0 0.0
        %2292 = vmatmul.mubr.f32.gmra.mxu0 %v2220
        %v2293 = vpop.f32.mrf.mxu0
        %v2294 = vadd.f32 %v2213, %v2293
        %v2295 = vpop.f32.mrf.mxu0
        %2296 = vdwg.mxu0
        %v2297 = vadd.f32 %v2088, %v2289
        %v2298 = vadd.f32 %v2089, %v2294
        %v2299 = vld [vmem:[%s958] sm:$0x1]
        %v2300 = vld [vmem:[%s961] sm:$0x1]
        %v2301 = vsel %vm1029, %v2297, 0.0
        %2302 = vadd.xlane.f32.xlu0 %v2301
        %v2303 = vpop.xlane.xlu0 %2302
        %v2304 = vsel %vm1029, %v2298, 0.0
        %2305 = vadd.xlane.f32.xlu0 %v2304
        %v2306 = vpop.xlane.xlu0 %2305
        %v2307 = vmul.f32 %v2303, %v2053
        %v2308 = vmul.f32 %v2306, %v2053
        %v2309 = vsub.f32 %v2297, %v2307
        %v2310 = vsub.f32 %v2298, %v2308
        %v2311 = vmul.f32 %v2309, %v2309
        %v2312 = vmul.f32 %v2310, %v2310
        %v2313 = vsel %vm1029, %v2311, 0.0
        %2314 = vadd.xlane.f32.xlu0 %v2313
        %v2315 = vpop.xlane.xlu0 %2314
        %v2316 = vsel %vm1029, %v2312, 0.0
        %2317 = vadd.xlane.f32.xlu0 %v2316
        %v2318 = vpop.xlane.xlu0 %2317
        %v2319 = vmul.f32 %v2315, %v2053
        %v2320 = vmul.f32 %v2318, %v2053
        %v2321 = vadd.f32 %v2319, 1e-12
        %v2322 = vadd.f32 %v2320, 1e-12
        %v2323 = vrsqrt.pop %v2321
        %v2324 = vrsqrt.pop %v2322
        %v2325 = vmul.f32 %v2309, %v2323
        %v2326 = vmul.f32 %v2310, %v2324
        %v2328 = vlaneseq
        %v2329 = vshrl.u32 %v2328, 7
        %v2330 = vsub.s32 0, %v2329
        %v2331 = vrot.slane %v2299, %v2330
        %v2333 = vmul.f32 %v2325, %v2331
        %v2334 = vmul.f32 %v2326, %v2331
        %v2336 = vlaneseq
        %v2337 = vshrl.u32 %v2336, 7
        %v2338 = vsub.s32 0, %v2337
        %v2339 = vrot.slane %v2300, %v2338
        %v2341 = vadd.f32 %v2333, %v2339
        %v2342 = vadd.f32 %v2334, %v2339
        %2343 = vst.msk [vmem:[#allocation2] sm:$0xff] %vm1029, %v2341
        %2344 = vst.msk [vmem:[#allocation2 + $0x8] sm:$0xff] %vm1029, %v2342
        %p2345 = scmp.eq.s32.totalorder %s37, 1
        // Predicated region
        $region117: #{koelectra_forward.1} parent=111 // pred_check
          %p2346 = pneg %p2345
        $region118: #{koelectra_forward.1} parent=111 // pred_check_branch
          %2348 = sbr.rel (%p2346) target = $region120
        $region119: #{koelectra_forward.1} parent=111 // pred_region
          %v2349 = vld [vmem:[%s19] sm:$0xff]
          %v2350 = vld [vmem:[%s19 + $0x8] sm:$0xff]
          %v2351 = vld [vmem:[%s19 + $0x10] sm:$0xff]
          %v2352 = vld [vmem:[%s19 + $0x18] sm:$0xff]
          %v2353 = vld [vmem:[%s20] sm:$0x1]
          %v2355 = vlaneseq
          %v2356 = vshrl.u32 %v2355, 7
          %v2357 = vsub.s32 0, %v2356
          %v2358 = vrot.slane %v2353, %v2357
          %v2362 = vrot.slane %v2342, 7
          %vm2363 = vcmask 1041409
          %v2364 = vsel %vm2363, %v2362, %v2341
          %v2365 = vsel %vm1029, %v2364, 0
          %2367 = vmatprep.subr.mxu0 0.0
          %2368 = vmatpush1.msra.mxu0 0.0
          %2369 = vmatprep.subr.mxu0 0.0
          %2370 = vmatpush1.msra.mxu0 0.0
          %2371 = vmatprep.subr.mxu0 0.0
          %2372 = vmatpush1.msra.mxu0 0.0
          %2373 = vmatprep.subr.mxu0 0.0
          %2374 = vmatpush1.msra.mxu0 0.0
          %2375 = vmatprep.subr.mxu0 0.0
          %2376 = vmatpush1.msra.mxu0 0.0
          %2377 = vmatprep.subr.mxu0 0.0
          %2378 = vmatpush1.msra.mxu0 0.0
          %2379 = vmatprep.subr.mxu0 0.0
          %2380 = vmatpush1.msra.mxu0 0.0
          %2381 = vmatprep.subr.mxu0 0.0
          %2382 = vmatpush1.msra.mxu0 0.0
          %2383 = vmatprep.subr.mxu0 0.0
          %2384 = vmatpush1.msra.mxu0 0.0
          %2385 = vmatprep.subr.mxu0 0.0
          %2386 = vmatpush1.msra.mxu0 0.0
          %2387 = vmatprep.subr.mxu0 0.0
          %2388 = vmatpush1.msra.mxu0 0.0
          %2389 = vmatprep.subr.mxu0 0.0
          %2390 = vmatpush1.msra.mxu0 0.0
          %2391 = vmatprep.subr.mxu0 0.0
          %2392 = vmatpush1.msra.mxu0 %v2352
          %2393 = vmatprep.subr.mxu0 0.0
          %2394 = vmatpush1.msra.mxu0 %v2351
          %2395 = vmatprep.subr.mxu0 0.0
          %2396 = vmatpush1.msra.mxu0 %v2350
          %2397 = vmatprep.subr.mxu0 0.0
          %2398 = vmatpush1.msra.mxu0 %v2349
          %2399 = vmatprep.subr.mxu0 0.0
          %2400 = vmatpush2.msra.mxu0 0.0
          %2401 = vmatprep.subr.mxu0 0.0
          %2402 = vmatpush2.msra.mxu0 0.0
          %2403 = vmatprep.subr.mxu0 0.0
          %2404 = vmatpush2.msra.mxu0 0.0
          %2405 = vmatprep.subr.mxu0 0.0
          %2406 = vmatpush2.msra.mxu0 0.0
          %2407 = vmatprep.subr.mxu0 0.0
          %2408 = vmatpush2.msra.mxu0 0.0
          %2409 = vmatprep.subr.mxu0 0.0
          %2410 = vmatpush2.msra.mxu0 0.0
          %2411 = vmatprep.subr.mxu0 0.0
          %2412 = vmatpush2.msra.mxu0 0.0
          %2413 = vmatprep.subr.mxu0 0.0
          %2414 = vmatpush2.msra.mxu0 0.0
          %2415 = vmatprep.subr.mxu0 0.0
          %2416 = vmatpush2.msra.mxu0 0.0
          %2417 = vmatprep.subr.mxu0 0.0
          %2418 = vmatpush2.msra.mxu0 0.0
          %2419 = vmatprep.subr.mxu0 0.0
          %2420 = vmatpush2.msra.mxu0 0.0
          %2421 = vmatprep.subr.mxu0 0.0
          %2422 = vmatpush2.msra.mxu0 0.0
          %2423 = vmatprep.subr.mxu0 0.0
          %2424 = vmatpush2.msra.mxu0 0.0
          %2425 = vmatprep.subr.mxu0 0.0
          %2426 = vmatpush2.msra.mxu0 0.0
          %2427 = vmatprep.subr.mxu0 0.0
          %2428 = vmatpush2.msra.mxu0 0.0
          %2429 = vmatprep.subr.mxu0 0.0
          %2430 = vmatpush2.msra.mxu0 0.0
          %2431 = vmatprep.mubr.f32.mxu0 0.0
          %2432 = vmatmul.mubr.f32.gmra.mxu0 %v2365
          %v2433 = vpop.f32.mrf.mxu0
          %v2434 = vadd.f32 %v2358, %v2433
          %v2435 = vpop.f32.mrf.mxu0
          %2436 = vdwg.mxu0
          %2437 = vst [vmem:[#allocation3] sm:$0x3] %v2434
          %v2438 = vld [vmem:[%s21] sm:$0xff]
          %v2439 = vld [vmem:[%s21 + $0x8] sm:$0xff]
          %v2440 = vld [vmem:[%s21 + $0x10] sm:$0xff]
          %v2441 = vld [vmem:[%s21 + $0x18] sm:$0xff]
          %v2442 = vld [vmem:[%s22] sm:$0x1]
          %v2444 = vlaneseq
          %v2445 = vshrl.u32 %v2444, 7
          %v2446 = vsub.s32 0, %v2445
          %v2447 = vrot.slane %v2442, %v2446
          %v2449 = vsel %vm1029, %v2341, 0
          %v2451 = vsel %vm1029, %v2342, 0
          %2453 = vmatprep.subr.mxu0 0.0
          %2454 = vmatpush1.msra.mxu0 0.0
          %2455 = vmatprep.subr.mxu0 0.0
          %2456 = vmatpush1.msra.mxu0 0.0
          %2457 = vmatprep.subr.mxu0 0.0
          %2458 = vmatpush1.msra.mxu0 0.0
          %2459 = vmatprep.subr.mxu0 0.0
          %2460 = vmatpush1.msra.mxu0 0.0
          %2461 = vmatprep.subr.mxu0 0.0
          %2462 = vmatpush1.msra.mxu0 0.0
          %2463 = vmatprep.subr.mxu0 0.0
          %2464 = vmatpush1.msra.mxu0 0.0
          %2465 = vmatprep.subr.mxu0 0.0
          %2466 = vmatpush1.msra.mxu0 0.0
          %2467 = vmatprep.subr.mxu0 0.0
          %2468 = vmatpush1.msra.mxu0 0.0
          %2469 = vmatprep.subr.mxu0 0.0
          %2470 = vmatpush1.msra.mxu0 0.0
          %2471 = vmatprep.subr.mxu0 0.0
          %2472 = vmatpush1.msra.mxu0 0.0
          %2473 = vmatprep.subr.mxu0 0.0
          %2474 = vmatpush1.msra.mxu0 0.0
          %2475 = vmatprep.subr.mxu0 0.0
          %2476 = vmatpush1.msra.mxu0 0.0
          %2477 = vmatprep.subr.mxu0 0.0
          %2478 = vmatpush1.msra.mxu0 %v2441
          %2479 = vmatprep.subr.mxu0 0.0
          %2480 = vmatpush1.msra.mxu0 %v2440
          %2481 = vmatprep.subr.mxu0 0.0
          %2482 = vmatpush1.msra.mxu0 %v2439
          %2483 = vmatprep.subr.mxu0 0.0
          %2484 = vmatpush1.msra.mxu0 %v2438
          %2485 = vmatprep.subr.mxu0 0.0
          %2486 = vmatpush2.msra.mxu0 0.0
          %2487 = vmatprep.subr.mxu0 0.0
          %2488 = vmatpush2.msra.mxu0 0.0
          %2489 = vmatprep.subr.mxu0 0.0
          %2490 = vmatpush2.msra.mxu0 0.0
          %2491 = vmatprep.subr.mxu0 0.0
          %2492 = vmatpush2.msra.mxu0 0.0
          %2493 = vmatprep.subr.mxu0 0.0
          %2494 = vmatpush2.msra.mxu0 0.0
          %2495 = vmatprep.subr.mxu0 0.0
          %2496 = vmatpush2.msra.mxu0 0.0
          %2497 = vmatprep.subr.mxu0 0.0
          %2498 = vmatpush2.msra.mxu0 0.0
          %2499 = vmatprep.subr.mxu0 0.0
          %2500 = vmatpush2.msra.mxu0 0.0
          %2501 = vmatprep.subr.mxu0 0.0
          %2502 = vmatpush2.msra.mxu0 0.0
          %2503 = vmatprep.subr.mxu0 0.0
          %2504 = vmatpush2.msra.mxu0 0.0
          %2505 = vmatprep.subr.mxu0 0.0
          %2506 = vmatpush2.msra.mxu0 0.0
          %2507 = vmatprep.subr.mxu0 0.0
          %2508 = vmatpush2.msra.mxu0 0.0
          %2509 = vmatprep.subr.mxu0 0.0
          %2510 = vmatpush2.msra.mxu0 0.0
          %2511 = vmatprep.subr.mxu0 0.0
          %2512 = vmatpush2.msra.mxu0 0.0
          %2513 = vmatprep.subr.mxu0 0.0
          %2514 = vmatpush2.msra.mxu0 0.0
          %2515 = vmatprep.subr.mxu0 0.0
          %2516 = vmatpush2.msra.mxu0 0.0
          %2517 = vmatprep.mubr.f32.mxu0 0.0
          %2518 = vmatmul.mubr.f32.gmra.mxu0 %v2449
          %v2519 = vpop.f32.mrf.mxu0
          %v2520 = vadd.f32 %v2447, %v2519
          %v2521 = vpop.f32.mrf.mxu0
          %2522 = vmatprep.mubr.f32.mxu0 0.0
          %2523 = vmatmul.mubr.f32.gmra.mxu0 %v2451
          %v2524 = vpop.f32.mrf.mxu0
          %v2525 = vadd.f32 %v2447, %v2524
          %v2526 = vpop.f32.mrf.mxu0
          %2527 = vdwg.mxu0
          %2528 = vst [vmem:[%s24] sm:$0xff] %v2520
          %2529 = vst [vmem:[%s24 + $0x8] sm:$0xff] %v2525
        $region120: #{koelectra_forward.1} parent=111 // pred_fallthru
          _
        // Predicated region
        $region121: #{koelectra_forward.1} parent=111 // pred_check
          %p2530 = pneg %p613
        $region122: #{koelectra_forward.1} parent=111 // pred_check_branch
          %2532 = sbr.rel (%p2530) target = $region124
        $region123: #{koelectra_forward.1} parent=111 // pred_region
          %s2534 = ssub.s32 32, 32
          %2535 = vsyncadd [#allocation4], %s2534
          %s2537 = sshll.u32 [#allocation3], 4
          %s2538 = int_to_ptr.vmem [resolvable:$true] %s2537
          %2540 = dma.vmem_to_hbm [thread:$0]  %s2538, 32, %s23, [#allocation4]
        $region124: #{koelectra_forward.1} parent=111 // pred_fallthru
          _
        // Predicated region
        $region125: #{koelectra_forward.1} parent=111 // pred_check
          %p2541 = pneg %p634
        $region126: #{koelectra_forward.1} parent=111 // pred_check_branch
          %2543 = sbr.rel (%p2541) target = $region128
        $region127: #{koelectra_forward.1} parent=111 // pred_region
          _
        $region128: #{koelectra_forward.1} parent=111 // pred_fallthru
          _
        // Predicated region
        $region129: #{koelectra_forward.1} parent=111 // pred_check
          %p2544 = pneg %p613
        $region130: #{koelectra_forward.1} parent=111 // pred_check_branch
          %2546 = sbr.rel (%p2544) target = $region132
        $region131: #{koelectra_forward.1} parent=111 // pred_region
          %2547 = dma.done [#allocation4], 32
        $region132: #{koelectra_forward.1} parent=111 // pred_fallthru
          _
        // Predicated region
        $region133: #{koelectra_forward.1} parent=111 // pred_check
          %p2548 = pneg %p634
        $region134: #{koelectra_forward.1} parent=111 // pred_check_branch
          %2550 = sbr.rel (%p2548) target = $region136
        $region135: #{koelectra_forward.1} parent=111 // pred_region
          _
        $region136: #{koelectra_forward.1} parent=111 // pred_fallthru
          _
      $region112: #{koelectra_forward.1} parent=5 // pred_fallthru
        _
      %p2551 = scmp.le.s32.totalorder 2, %s32
      // Predicated region
      $region137: #{koelectra_forward.1} parent=5 // pred_check
        %p2552 = pneg %p2551
      $region138: #{koelectra_forward.1} parent=5 // pred_check_branch
        %2554 = sbr.rel (%p2552) target = $region140
      $region139: #{koelectra_forward.1} parent=5 // pred_region
        %s2555 = ssub.s32 %s32, 2
      $region140: #{koelectra_forward.1} parent=5 // pred_fallthru
        _
    $region6: #{koelectra_forward.1} parent=1 // loop_footer
      %s36 = sadd.s32 1, %s32
    $region7: #{koelectra_forward.1} parent=1 // loop_footer_branch
      %31 = sbr.rel target = $region3
    $region8: #{koelectra_forward.1} parent=1 // loop_exit
      _
    %2556 = vsyncpa [#allocation4], 1
    %s2557 = scalar_lea.sflag [#allocation4], 1
    %2558 = vsyncpa %s2557, 1

</llo_original>
